<compile_context>
chip_gen: v7x
topology: tpu7x:2x2x1
jax: 0.10.0
libtpu: 0.0.40
codegen_flags: <defaults>
</compile_context>

<pallas_src>
import math
import functools

import jax
import jax.numpy as jnp
from jax import lax
from jax.experimental import pallas as pl
from jax.experimental.pallas import tpu as pltpu


# ----------------------------------------------------------------------------
# Kernel: ONE encoder layer for ONE batch element per grid step (b, l).
# The residual stream lives in a VMEM scratch across the layer axis.
# ----------------------------------------------------------------------------
def _encoder_layer_kernel(x_ref, pos_ref,
                          wq_ref, wk_ref, wv_ref, wo_ref,
                          w1_ref, w2_ref, vec_ref, b1_ref,
                          o_ref, h_ref, *, num_heads):
    l = pl.program_id(1)
    S, H = h_ref.shape
    hd = H // num_heads
    scale = 1.0 / math.sqrt(hd)
    inv_sqrt2 = 1.0 / math.sqrt(2.0)
    f32 = jnp.float32
    bf16 = jnp.bfloat16

    # Layer 0: seed the VMEM-resident activation carry with x + pos_embedding.
    @pl.when(l == 0)
    def _():
        h_ref[...] = x_ref[0] + pos_ref[0]

    def layer_norm(y, gamma, beta):
        mu = jnp.mean(y, axis=-1, keepdims=True)
        var = jnp.mean((y - mu) * (y - mu), axis=-1, keepdims=True)
        return (y - mu) * lax.rsqrt(var + 1e-5) * gamma + beta

    vec = vec_ref[0]                                    # (9, H) f32 bias slab
    bq, bk, bv = vec[0:1], vec[1:2], vec[2:3]
    bo, b2 = vec[3:4], vec[4:5]
    g1, be1, g2, be2 = vec[5:6], vec[6:7], vec[7:8], vec[8:9]
    b1 = b1_ref[0]                                      # (1, 4H) f32

    h = h_ref[...]                                      # (S, H) f32 residual
    hb = h.astype(bf16)

    # ---- Multi-head self-attention (nn.MultiheadAttention, batch_first) ----
    q = jnp.dot(hb, wq_ref[0], preferred_element_type=f32) + bq
    k = jnp.dot(hb, wk_ref[0], preferred_element_type=f32) + bk
    v = jnp.dot(hb, wv_ref[0], preferred_element_type=f32) + bv

    # TODO(synk): drop the head split/merge transposes (einsum 'qhd,khd->hqk'
    # with a mid-position batch dim) once Mosaic dot_general supports it.
    qh = q.astype(bf16).reshape(S, num_heads, hd).swapaxes(0, 1)   # (nh,S,hd)
    kh = k.astype(bf16).reshape(S, num_heads, hd).swapaxes(0, 1)
    vh = v.astype(bf16).reshape(S, num_heads, hd).swapaxes(0, 1)

    s = jnp.einsum('hqd,hkd->hqk', qh, kh,
                   preferred_element_type=f32) * scale             # (nh,S,S)
    s = s - jnp.max(s, axis=-1, keepdims=True)
    p = jnp.exp(s)
    p = p * pl.reciprocal(jnp.sum(p, axis=-1, keepdims=True), approx=True)
    # TODO(synk): at large S, tile the softmax/PV over q-blocks (flash-style)
    # so the (nh, S, S) score tensor never lives fully in VMEM.
    ctx = jnp.einsum('hqk,hkd->hqd', p.astype(bf16), vh,
                     preferred_element_type=f32)                   # (nh,S,hd)
    ctx = ctx.swapaxes(0, 1).reshape(S, H)                         # (S, H)

    attn_out = jnp.dot(ctx.astype(bf16), wo_ref[0],
                       preferred_element_type=f32) + bo

    # dropout1 is identity at inference
    src = layer_norm(h + attn_out, g1, be1)

    # ---- Feed-forward: linear1 -> exact erf-GELU -> linear2 ----
    h1 = jnp.dot(src.astype(bf16), w1_ref[0], preferred_element_type=f32) + b1
    h1 = 0.5 * h1 * (1.0 + lax.erf(h1 * inv_sqrt2))
    h2 = jnp.dot(h1.astype(bf16), w2_ref[0], preferred_element_type=f32) + b2

    # dropout2 is identity at inference
    out = layer_norm(src + h2, g2, be2)
    h_ref[...] = out

    @pl.when(l == pl.num_programs(1) - 1)
    def _():
        o_ref[0] = out.astype(o_ref.dtype)


# ----------------------------------------------------------------------------
# Host-side parameter prep: PyTorch (out_features, in_features) -> stacked
# x @ W layout, weights in bf16, small vectors packed into f32 slabs.
# ----------------------------------------------------------------------------
def prepare_params(pos, layer_params, compute_dtype=jnp.bfloat16):
    H = pos.shape[-1]
    wq, wk, wv, wo, w1, w2, vecs, b1 = ([] for _ in range(8))
    for p in layer_params:
        wqkv = p["wqkv"]                                   # (3H, H)
        wq.append(wqkv[:H].T.astype(compute_dtype))        # (H, H)
        wk.append(wqkv[H:2 * H].T.astype(compute_dtype))
        wv.append(wqkv[2 * H:].T.astype(compute_dtype))
        wo.append(p["wo"].T.astype(compute_dtype))         # (H, H)
        w1.append(p["w1"].T.astype(compute_dtype))         # (H, 4H)
        w2.append(p["w2"].T.astype(compute_dtype))         # (4H, H)
        bqkv = p["bqkv"][0]
        vecs.append(jnp.stack([bqkv[:H], bqkv[H:2 * H], bqkv[2 * H:],
                               p["bo"][0], p["b2"][0],
                               p["g1"][0], p["be1"][0],
                               p["g2"][0], p["be2"][0]],
                              axis=0).astype(jnp.float32))  # (9, H)
        b1.append(p["b1"].astype(jnp.float32))              # (1, 4H)
    stack = lambda xs: jnp.stack(xs, axis=0)
    return dict(pos=pos.astype(jnp.float32), wq=stack(wq), wk=stack(wk),
                wv=stack(wv), wo=stack(wo), w1=stack(w1), w2=stack(w2),
                vecs=stack(vecs), b1=stack(b1))


# ----------------------------------------------------------------------------
# Wrapper: one pallas_call, grid = (batch, layer), weights streamed per layer.
# ----------------------------------------------------------------------------
def fused_encoder(x, params, num_heads):
    B, S, H = x.shape
    L = params["wq"].shape[0]
    H4 = params["w1"].shape[-1]

    kernel = functools.partial(_encoder_layer_kernel, num_heads=num_heads)

    def wspec(shape):
        # one layer slab per step along the layer axis (pipeline double-buffers)
        return pl.BlockSpec((1,) + tuple(shape[1:]),
                            lambda b, l: (l,) + (0,) * (len(shape) - 1))

    flops = B * L * (24 * S * H * H + 4 * S * S * H)
    transcendentals = B * L * (num_heads * S * S + S * H4)
    weight_bytes = sum(int(params[k].size) * params[k].dtype.itemsize
                       for k in ("wq", "wk", "wv", "wo", "w1", "w2",
                                 "vecs", "b1"))
    bytes_accessed = B * weight_bytes + (2 * B + 1) * S * H * 4

    return pl.pallas_call(
        kernel,
        out_shape=jax.ShapeDtypeStruct((B, S, H), x.dtype),
        grid_spec=pltpu.PrefetchScalarGridSpec(
            num_scalar_prefetch=0,
            grid=(B, L),
            in_specs=[pl.BlockSpec((1, S, H), lambda b, l: (b, 0, 0)),  # x
                      pl.BlockSpec((1, S, H), lambda b, l: (0, 0, 0)),  # pos
                      wspec(params["wq"].shape),
                      wspec(params["wk"].shape),
                      wspec(params["wv"].shape),
                      wspec(params["wo"].shape),
                      wspec(params["w1"].shape),
                      wspec(params["w2"].shape),
                      wspec(params["vecs"].shape),
                      wspec(params["b1"].shape)],
            out_specs=pl.BlockSpec((1, S, H), lambda b, l: (b, 0, 0)),
            scratch_shapes=[pltpu.VMEM((S, H), jnp.float32)]),
        compiler_params=pltpu.CompilerParams(
            dimension_semantics=("parallel", "arbitrary"),
            vmem_limit_bytes=32 * 1024 * 1024),
        cost_estimate=pl.CostEstimate(flops=flops,
                                      transcendentals=transcendentals,
                                      bytes_accessed=bytes_accessed),
    )(x, params["pos"], params["wq"], params["wk"], params["wv"],
      params["wo"], params["w1"], params["w2"], params["vecs"], params["b1"])


def protein_bert_encoder(x, pos_embedding, layer_params, num_heads):
    """ProteinBERTEncoder.forward(x) with return_attn=False."""
    params = prepare_params(pos_embedding, layer_params)
    return fused_encoder(x, params, num_heads)


# ----------------------------------------------------------------------------
# Pure-JAX f32 reference (PyTorch-convention params) for correctness check.
# ----------------------------------------------------------------------------
def _ref_layer(x, p, num_heads):
    B, S, H = x.shape
    hd = H // num_heads
    qkv = x @ p["wqkv"].T + p["bqkv"][0]
    q, k, v = qkv[..., :H], qkv[..., H:2 * H], qkv[..., 2 * H:]
    q = q.reshape(B, S, num_heads, hd).transpose(0, 2, 1, 3)
    k = k.reshape(B, S, num_heads, hd).transpose(0, 2, 1, 3)
    v = v.reshape(B, S, num_heads, hd).transpose(0, 2, 1, 3)
    s = jnp.einsum("bhqd,bhkd->bhqk", q, k) / math.sqrt(hd)
    pjk = jax.nn.softmax(s, axis=-1)
    ctx = jnp.einsum("bhqk,bhkd->bhqd", pjk, v).transpose(0, 2, 1, 3).reshape(B, S, H)
    attn = ctx @ p["wo"].T + p["bo"][0]

    def ln(y, g, b):
        mu = jnp.mean(y, -1, keepdims=True)
        var = jnp.mean((y - mu) ** 2, -1, keepdims=True)
        return (y - mu) / jnp.sqrt(var + 1e-5) * g + b

    src = ln(x + attn, p["g1"][0], p["be1"][0])
    h1 = jax.nn.gelu(src @ p["w1"].T + p["b1"][0], approximate=False)
    h2 = h1 @ p["w2"].T + p["b2"][0]
    return ln(src + h2, p["g2"][0], p["be2"][0])


def _ref_encoder(x, pos, layer_params, num_heads):
    h = x + pos
    for p in layer_params:
        h = _ref_layer(h, p, num_heads)
    return h


# ----------------------------------------------------------------------------
# Deterministic synthetic parameters (PyTorch convention).
# ----------------------------------------------------------------------------
def make_params(key, seq_len, hidden, num_layers):
    keys = jax.random.split(key, num_layers + 1)
    pos = jax.random.normal(keys[0], (1, seq_len, hidden), jnp.float32)
    layers = []
    for l in range(num_layers):
        k = jax.random.split(keys[l + 1], 12)
        layers.append(dict(
            wqkv=0.02 * jax.random.normal(k[0], (3 * hidden, hidden), jnp.float32),
            bqkv=0.02 * jax.random.normal(k[1], (1, 3 * hidden), jnp.float32),
            wo=0.02 * jax.random.normal(k[2], (hidden, hidden), jnp.float32),
            bo=0.02 * jax.random.normal(k[3], (1, hidden), jnp.float32),
            w1=0.02 * jax.random.normal(k[4], (4 * hidden, hidden), jnp.float32),
            b1=0.02 * jax.random.normal(k[5], (1, 4 * hidden), jnp.float32),
            w2=0.02 * jax.random.normal(k[6], (hidden, 4 * hidden), jnp.float32),
            b2=0.02 * jax.random.normal(k[7], (1, hidden), jnp.float32),
            g1=1.0 + 0.02 * jax.random.normal(k[8], (1, hidden), jnp.float32),
            be1=0.02 * jax.random.normal(k[9], (1, hidden), jnp.float32),
            g2=1.0 + 0.02 * jax.random.normal(k[10], (1, hidden), jnp.float32),
            be2=0.02 * jax.random.normal(k[11], (1, hidden), jnp.float32),
        ))
    return pos, layers


# ----------------------------------------------------------------------------
if __name__ == "__main__":
    # Small but TPU-friendly config: H multiple of 128 (lane-dense stores),
    # S multiple of 8 (sublane-aligned rows).
    BATCH, SEQ_LEN, HIDDEN = 2, 32, 128
    NUM_LAYERS, NUM_HEADS = 4, 8

    key = jax.random.PRNGKey(0)
    k_x, k_p = jax.random.split(key)
    x = jax.random.normal(k_x, (BATCH, SEQ_LEN, HIDDEN), jnp.float32)
    pos, layer_params = make_params(k_p, SEQ_LEN, HIDDEN, NUM_LAYERS)

    # one-time host-side layout prep (pre-split QKV, pre-transposed, bf16, stacked)
    params = prepare_params(pos, layer_params)

    out = jax.block_until_ready(fused_encoder(x, params, NUM_HEADS))

    ref = jax.block_until_ready(_ref_encoder(x, pos, layer_params, NUM_HEADS))
    assert out.shape == (BATCH, SEQ_LEN, HIDDEN)
    err = float(jnp.max(jnp.abs(out - ref)))
    # bf16 MXU operands (per perf review) -> mixed-precision tolerance vs the
    # exact-f32 reference; this also covers the approx softmax reciprocal.
    assert jnp.allclose(out, ref, rtol=3e-2, atol=3e-2), f"max abs err {err}"
    print("KERNEL_OK")
</pallas_src>

<mosaic_0001>
module attributes {stable_mosaic.version = 11 : i64} {
  func.func @_encoder_layer_kernel(%arg0: i32, %arg1: i32, %arg2: memref<1x32x128xf32, #tpu.memory_space<vmem>>, %arg3: memref<1x32x128xf32, #tpu.memory_space<vmem>>, %arg4: memref<1x128x128xbf16, #tpu.memory_space<vmem>>, %arg5: memref<1x128x128xbf16, #tpu.memory_space<vmem>>, %arg6: memref<1x128x128xbf16, #tpu.memory_space<vmem>>, %arg7: memref<1x128x128xbf16, #tpu.memory_space<vmem>>, %arg8: memref<1x128x512xbf16, #tpu.memory_space<vmem>>, %arg9: memref<1x512x128xbf16, #tpu.memory_space<vmem>>, %arg10: memref<1x9x128xf32, #tpu.memory_space<vmem>>, %arg11: memref<1x1x512xf32, #tpu.memory_space<vmem>>, %arg12: memref<1x32x128xf32, #tpu.memory_space<vmem>>, %arg13: memref<32x128xf32, #tpu.memory_space<vmem>>) attributes {dimension_semantics = [#tpu.dimension_semantics<parallel>, #tpu.dimension_semantics<arbitrary>], iteration_bounds = array<i64: 2, 4>, scalar_prefetch = 0 : i64, scratch_operands = 1 : i64, tpu.core_type = #tpu.core_type<tc>, window_params = [{transform_indices = @transform_0, window_bounds = array<i64: 1, 32, 128>}, {pipeline_mode = #tpu.pipeline_mode<synchronous>, transform_indices = @transform_1, window_bounds = array<i64: 1, 32, 128>}, {transform_indices = @transform_2, window_bounds = array<i64: 1, 128, 128>}, {transform_indices = @transform_3, window_bounds = array<i64: 1, 128, 128>}, {transform_indices = @transform_4, window_bounds = array<i64: 1, 128, 128>}, {transform_indices = @transform_5, window_bounds = array<i64: 1, 128, 128>}, {transform_indices = @transform_6, window_bounds = array<i64: 1, 128, 512>}, {transform_indices = @transform_7, window_bounds = array<i64: 1, 512, 128>}, {transform_indices = @transform_8, window_bounds = array<i64: 1, 9, 128>}, {transform_indices = @transform_9, window_bounds = array<i64: 1, 1, 512>}, {transform_indices = @transform_10, window_bounds = array<i64: 1, 32, 128>}]} {
    %c0_i32 = arith.constant 0 : i32
    %0 = arith.cmpi eq, %arg1, %c0_i32 : i32
    %1 = arith.extui %0 : i1 to i32
    %c0_i32_0 = arith.constant 0 : i32
    %2 = arith.cmpi ne, %1, %c0_i32_0 : i32
    scf.if %2 {
      %c0_52 = arith.constant 0 : index
      %c0_53 = arith.constant 0 : index
      %c0_54 = arith.constant 0 : index
      %139 = vector.load %arg2[%c0_52, %c0_53, %c0_54] : memref<1x32x128xf32, #tpu.memory_space<vmem>>, vector<1x32x128xf32>
      %140 = vector.shape_cast %139 : vector<1x32x128xf32> to vector<32x128xf32>
      %c0_55 = arith.constant 0 : index
      %c0_56 = arith.constant 0 : index
      %c0_57 = arith.constant 0 : index
      %141 = vector.load %arg3[%c0_55, %c0_56, %c0_57] : memref<1x32x128xf32, #tpu.memory_space<vmem>>, vector<1x32x128xf32>
      %142 = vector.shape_cast %141 : vector<1x32x128xf32> to vector<32x128xf32>
      %143 = arith.addf %140, %142 : vector<32x128xf32>
      %c0_58 = arith.constant 0 : index
      %c0_59 = arith.constant 0 : index
      %144 = vector.load %arg13[%c0_58, %c0_59] : memref<32x128xf32, #tpu.memory_space<vmem>>, vector<32x128xf32>
      tpu.vector_store %arg13[%c0_58, %c0_59], %143 {strides = array<i32>} : memref<32x128xf32, #tpu.memory_space<vmem>>, vector<32x128xf32>,
    } else {
    }
    %c0 = arith.constant 0 : index
    %c0_1 = arith.constant 0 : index
    %c0_2 = arith.constant 0 : index
    %3 = vector.load %arg10[%c0, %c0_1, %c0_2] : memref<1x9x128xf32, #tpu.memory_space<vmem>>, vector<1x9x128xf32>
    %4 = vector.shape_cast %3 : vector<1x9x128xf32> to vector<9x128xf32>
    %5 = vector.extract_strided_slice %4 {offsets = [0, 0], sizes = [1, 128], strides = [1, 1]} : vector<9x128xf32> to vector<1x128xf32>
    %6 = vector.extract_strided_slice %4 {offsets = [1, 0], sizes = [1, 128], strides = [1, 1]} : vector<9x128xf32> to vector<1x128xf32>
    %7 = vector.extract_strided_slice %4 {offsets = [2, 0], sizes = [1, 128], strides = [1, 1]} : vector<9x128xf32> to vector<1x128xf32>
    %8 = vector.extract_strided_slice %4 {offsets = [3, 0], sizes = [1, 128], strides = [1, 1]} : vector<9x128xf32> to vector<1x128xf32>
    %9 = vector.extract_strided_slice %4 {offsets = [4, 0], sizes = [1, 128], strides = [1, 1]} : vector<9x128xf32> to vector<1x128xf32>
    %10 = vector.extract_strided_slice %4 {offsets = [5, 0], sizes = [1, 128], strides = [1, 1]} : vector<9x128xf32> to vector<1x128xf32>
    %11 = vector.extract_strided_slice %4 {offsets = [6, 0], sizes = [1, 128], strides = [1, 1]} : vector<9x128xf32> to vector<1x128xf32>
    %12 = vector.extract_strided_slice %4 {offsets = [7, 0], sizes = [1, 128], strides = [1, 1]} : vector<9x128xf32> to vector<1x128xf32>
    %13 = vector.extract_strided_slice %4 {offsets = [8, 0], sizes = [1, 128], strides = [1, 1]} : vector<9x128xf32> to vector<1x128xf32>
    %c0_3 = arith.constant 0 : index
    %c0_4 = arith.constant 0 : index
    %c0_5 = arith.constant 0 : index
    %14 = vector.load %arg11[%c0_3, %c0_4, %c0_5] : memref<1x1x512xf32, #tpu.memory_space<vmem>>, vector<1x1x512xf32>
    %15 = vector.shape_cast %14 : vector<1x1x512xf32> to vector<1x512xf32>
    %c0_6 = arith.constant 0 : index
    %c0_7 = arith.constant 0 : index
    %16 = vector.load %arg13[%c0_6, %c0_7] : memref<32x128xf32, #tpu.memory_space<vmem>>, vector<32x128xf32>
    %17 = arith.truncf %16 : vector<32x128xf32> to vector<32x128xbf16>
    %c0_8 = arith.constant 0 : index
    %c0_9 = arith.constant 0 : index
    %c0_10 = arith.constant 0 : index
    %18 = vector.load %arg4[%c0_8, %c0_9, %c0_10] : memref<1x128x128xbf16, #tpu.memory_space<vmem>>, vector<1x128x128xbf16>
    %19 = vector.shape_cast %18 : vector<1x128x128xbf16> to vector<128x128xbf16>
    %cst = arith.constant dense<0.000000e+00> : vector<32x128xf32>
    %20 = tpu.matmul %17, %19, %cst {dimension_numbers = #tpu.dot_dimension_numbers<[1], [0], [0], [1], [0, 0, 1, 1], [], []>} : vector<32x128xbf16>, vector<128x128xbf16>, vector<32x128xf32> -> vector<32x128xf32>
    %21 = vector.broadcast %5 : vector<1x128xf32> to vector<32x128xf32>
    %22 = arith.addf %20, %21 : vector<32x128xf32>
    %c0_11 = arith.constant 0 : index
    %c0_12 = arith.constant 0 : index
    %c0_13 = arith.constant 0 : index
    %23 = vector.load %arg5[%c0_11, %c0_12, %c0_13] : memref<1x128x128xbf16, #tpu.memory_space<vmem>>, vector<1x128x128xbf16>
    %24 = vector.shape_cast %23 : vector<1x128x128xbf16> to vector<128x128xbf16>
    %cst_14 = arith.constant dense<0.000000e+00> : vector<32x128xf32>
    %25 = tpu.matmul %17, %24, %cst_14 {dimension_numbers = #tpu.dot_dimension_numbers<[1], [0], [0], [1], [0, 0, 1, 1], [], []>} : vector<32x128xbf16>, vector<128x128xbf16>, vector<32x128xf32> -> vector<32x128xf32>
    %26 = vector.broadcast %6 : vector<1x128xf32> to vector<32x128xf32>
    %27 = arith.addf %25, %26 : vector<32x128xf32>
    %c0_15 = arith.constant 0 : index
    %c0_16 = arith.constant 0 : index
    %c0_17 = arith.constant 0 : index
    %28 = vector.load %arg6[%c0_15, %c0_16, %c0_17] : memref<1x128x128xbf16, #tpu.memory_space<vmem>>, vector<1x128x128xbf16>
    %29 = vector.shape_cast %28 : vector<1x128x128xbf16> to vector<128x128xbf16>
    %cst_18 = arith.constant dense<0.000000e+00> : vector<32x128xf32>
    %30 = tpu.matmul %17, %29, %cst_18 {dimension_numbers = #tpu.dot_dimension_numbers<[1], [0], [0], [1], [0, 0, 1, 1], [], []>} : vector<32x128xbf16>, vector<128x128xbf16>, vector<32x128xf32> -> vector<32x128xf32>
    %31 = vector.broadcast %7 : vector<1x128xf32> to vector<32x128xf32>
    %32 = arith.addf %30, %31 : vector<32x128xf32>
    %33 = arith.truncf %22 : vector<32x128xf32> to vector<32x128xbf16>
    %34 = vector.shape_cast %33 : vector<32x128xbf16> to vector<32x8x16xbf16>
    %35 = tpu.transpose %34, [1, 0, 2] : vector<32x8x16xbf16> -> vector<8x32x16xbf16>
    %36 = arith.truncf %27 : vector<32x128xf32> to vector<32x128xbf16>
    %37 = vector.shape_cast %36 : vector<32x128xbf16> to vector<32x8x16xbf16>
    %38 = tpu.transpose %37, [1, 0, 2] : vector<32x8x16xbf16> -> vector<8x32x16xbf16>
    %39 = arith.truncf %32 : vector<32x128xf32> to vector<32x128xbf16>
    %40 = vector.shape_cast %39 : vector<32x128xbf16> to vector<32x8x16xbf16>
    %41 = tpu.transpose %40, [1, 0, 2] : vector<32x8x16xbf16> -> vector<8x32x16xbf16>
    "tpu.trace_start"() <{level = 10 : i32, message = "hqd,hkd->hqk"}> : () -> ()
    %cst_19 = arith.constant dense<0.000000e+00> : vector<8x32x32xf32>
    %42 = tpu.matmul %35, %38, %cst_19 {dimension_numbers = #tpu.dot_dimension_numbers<[2], [2], [1], [1], [0, 0, 0, 1, 1, 1], [0], [0]>} : vector<8x32x16xbf16>, vector<8x32x16xbf16>, vector<8x32x32xf32> -> vector<8x32x32xf32>
    "tpu.trace_stop"() : () -> ()
    %cst_20 = arith.constant 2.500000e-01 : f32
    %43 = vector.broadcast %cst_20 : f32 to vector<8x32x32xf32>
    %44 = arith.mulf %42, %43 : vector<8x32x32xf32>
    %cst_21 = arith.constant dense<0xFF800000> : vector<8x32xf32>
    %45 = vector.multi_reduction <maximumf>, %44, %cst_21 [2] : vector<8x32x32xf32> to vector<8x32xf32>
    %46 = vector.shape_cast %45 : vector<8x32xf32> to vector<8x32x1xf32>
    %47 = vector.broadcast %46 : vector<8x32x1xf32> to vector<8x32x32xf32>
    %48 = arith.subf %44, %47 : vector<8x32x32xf32>
    %49 = math.exp %48 : vector<8x32x32xf32>
    %cst_22 = arith.constant dense<0.000000e+00> : vector<8x32xf32>
    %50 = vector.multi_reduction <add>, %49, %cst_22 [2] : vector<8x32x32xf32> to vector<8x32xf32>
    %51 = vector.shape_cast %50 : vector<8x32xf32> to vector<8x32x1xf32>
    %52 = tpu.reciprocal %51 {approx = true} : vector<8x32x1xf32> -> vector<8x32x1xf32>
    %53 = vector.broadcast %52 : vector<8x32x1xf32> to vector<8x32x32xf32>
    %54 = arith.mulf %49, %53 : vector<8x32x32xf32>
    %55 = arith.truncf %54 : vector<8x32x32xf32> to vector<8x32x32xbf16>
    "tpu.trace_start"() <{level = 10 : i32, message = "hqk,hkd->hqd"}> : () -> ()
    %cst_23 = arith.constant dense<0.000000e+00> : vector<8x32x16xf32>
    %56 = tpu.matmul %55, %41, %cst_23 {dimension_numbers = #tpu.dot_dimension_numbers<[2], [1], [1], [2], [0, 0, 0, 1, 1, 2], [0], [0]>} : vector<8x32x32xbf16>, vector<8x32x16xbf16>, vector<8x32x16xf32> -> vector<8x32x16xf32>
    "tpu.trace_stop"() : () -> ()
    %57 = tpu.transpose %56, [1, 0, 2] : vector<8x32x16xf32> -> vector<32x8x16xf32>
    %58 = vector.shape_cast %57 : vector<32x8x16xf32> to vector<32x128xf32>
    %59 = arith.truncf %58 : vector<32x128xf32> to vector<32x128xbf16>
    %c0_24 = arith.constant 0 : index
    %c0_25 = arith.constant 0 : index
    %c0_26 = arith.constant 0 : index
    %60 = vector.load %arg7[%c0_24, %c0_25, %c0_26] : memref<1x128x128xbf16, #tpu.memory_space<vmem>>, vector<1x128x128xbf16>
    %61 = vector.shape_cast %60 : vector<1x128x128xbf16> to vector<128x128xbf16>
    %cst_27 = arith.constant dense<0.000000e+00> : vector<32x128xf32>
    %62 = tpu.matmul %59, %61, %cst_27 {dimension_numbers = #tpu.dot_dimension_numbers<[1], [0], [0], [1], [0, 0, 1, 1], [], []>} : vector<32x128xbf16>, vector<128x128xbf16>, vector<32x128xf32> -> vector<32x128xf32>
    %63 = vector.broadcast %8 : vector<1x128xf32> to vector<32x128xf32>
    %64 = arith.addf %62, %63 : vector<32x128xf32>
    %65 = arith.addf %16, %64 : vector<32x128xf32>
    %cst_28 = arith.constant dense<0.000000e+00> : vector<32xf32>
    %66 = vector.multi_reduction <add>, %65, %cst_28 [1] : vector<32x128xf32> to vector<32xf32>
    %67 = vector.shape_cast %66 : vector<32xf32> to vector<32x1xf32>
    %cst_29 = arith.constant 1.280000e+02 : f32
    %68 = vector.broadcast %cst_29 : f32 to vector<32x1xf32>
    %69 = arith.divf %67, %68 : vector<32x1xf32>
    %70 = vector.broadcast %69 : vector<32x1xf32> to vector<32x128xf32>
    %71 = arith.subf %65, %70 : vector<32x128xf32>
    %72 = vector.broadcast %69 : vector<32x1xf32> to vector<32x128xf32>
    %73 = arith.subf %65, %72 : vector<32x128xf32>
    %74 = arith.mulf %71, %73 : vector<32x128xf32>
    %cst_30 = arith.constant dense<0.000000e+00> : vector<32xf32>
    %75 = vector.multi_reduction <add>, %74, %cst_30 [1] : vector<32x128xf32> to vector<32xf32>
    %76 = vector.shape_cast %75 : vector<32xf32> to vector<32x1xf32>
    %cst_31 = arith.constant 1.280000e+02 : f32
    %77 = vector.broadcast %cst_31 : f32 to vector<32x1xf32>
    %78 = arith.divf %76, %77 : vector<32x1xf32>
    %79 = vector.broadcast %69 : vector<32x1xf32> to vector<32x128xf32>
    %80 = arith.subf %65, %79 : vector<32x128xf32>
    %cst_32 = arith.constant 9.99999974E-6 : f32
    %81 = vector.broadcast %cst_32 : f32 to vector<32x1xf32>
    %82 = arith.addf %78, %81 : vector<32x1xf32>
    %83 = math.rsqrt %82 : vector<32x1xf32>
    %84 = vector.broadcast %83 : vector<32x1xf32> to vector<32x128xf32>
    %85 = arith.mulf %80, %84 : vector<32x128xf32>
    %86 = vector.broadcast %10 : vector<1x128xf32> to vector<32x128xf32>
    %87 = arith.mulf %85, %86 : vector<32x128xf32>
    %88 = vector.broadcast %11 : vector<1x128xf32> to vector<32x128xf32>
    %89 = arith.addf %87, %88 : vector<32x128xf32>
    %90 = arith.truncf %89 : vector<32x128xf32> to vector<32x128xbf16>
    %c0_33 = arith.constant 0 : index
    %c0_34 = arith.constant 0 : index
    %c0_35 = arith.constant 0 : index
    %91 = vector.load %arg8[%c0_33, %c0_34, %c0_35] : memref<1x128x512xbf16, #tpu.memory_space<vmem>>, vector<1x128x512xbf16>
    %92 = vector.shape_cast %91 : vector<1x128x512xbf16> to vector<128x512xbf16>
    %cst_36 = arith.constant dense<0.000000e+00> : vector<32x512xf32>
    %93 = tpu.matmul %90, %92, %cst_36 {dimension_numbers = #tpu.dot_dimension_numbers<[1], [0], [0], [1], [0, 0, 1, 1], [], []>} : vector<32x128xbf16>, vector<128x512xbf16>, vector<32x512xf32> -> vector<32x512xf32>
    %94 = vector.broadcast %15 : vector<1x512xf32> to vector<32x512xf32>
    %95 = arith.addf %93, %94 : vector<32x512xf32>
    %cst_37 = arith.constant 5.000000e-01 : f32
    %96 = vector.broadcast %cst_37 : f32 to vector<32x512xf32>
    %97 = arith.mulf %96, %95 : vector<32x512xf32>
    %cst_38 = arith.constant 0.707106769 : f32
    %98 = vector.broadcast %cst_38 : f32 to vector<32x512xf32>
    %99 = arith.mulf %95, %98 : vector<32x512xf32>
    %100 = math.erf %99 : vector<32x512xf32>
    %cst_39 = arith.constant 1.000000e+00 : f32
    %101 = vector.broadcast %cst_39 : f32 to vector<32x512xf32>
    %102 = arith.addf %101, %100 : vector<32x512xf32>
    %103 = arith.mulf %97, %102 : vector<32x512xf32>
    %104 = arith.truncf %103 : vector<32x512xf32> to vector<32x512xbf16>
    %c0_40 = arith.constant 0 : index
    %c0_41 = arith.constant 0 : index
    %c0_42 = arith.constant 0 : index
    %105 = vector.load %arg9[%c0_40, %c0_41, %c0_42] : memref<1x512x128xbf16, #tpu.memory_space<vmem>>, vector<1x512x128xbf16>
    %106 = vector.shape_cast %105 : vector<1x512x128xbf16> to vector<512x128xbf16>
    %cst_43 = arith.constant dense<0.000000e+00> : vector<32x128xf32>
    %107 = tpu.matmul %104, %106, %cst_43 {dimension_numbers = #tpu.dot_dimension_numbers<[1], [0], [0], [1], [0, 0, 1, 1], [], []>} : vector<32x512xbf16>, vector<512x128xbf16>, vector<32x128xf32> -> vector<32x128xf32>
    %108 = vector.broadcast %9 : vector<1x128xf32> to vector<32x128xf32>
    %109 = arith.addf %107, %108 : vector<32x128xf32>
    %110 = arith.addf %89, %109 : vector<32x128xf32>
    %cst_44 = arith.constant dense<0.000000e+00> : vector<32xf32>
    %111 = vector.multi_reduction <add>, %110, %cst_44 [1] : vector<32x128xf32> to vector<32xf32>
    %112 = vector.shape_cast %111 : vector<32xf32> to vector<32x1xf32>
    %cst_45 = arith.constant 1.280000e+02 : f32
    %113 = vector.broadcast %cst_45 : f32 to vector<32x1xf32>
    %114 = arith.divf %112, %113 : vector<32x1xf32>
    %115 = vector.broadcast %114 : vector<32x1xf32> to vector<32x128xf32>
    %116 = arith.subf %110, %115 : vector<32x128xf32>
    %117 = vector.broadcast %114 : vector<32x1xf32> to vector<32x128xf32>
    %118 = arith.subf %110, %117 : vector<32x128xf32>
    %119 = arith.mulf %116, %118 : vector<32x128xf32>
    %cst_46 = arith.constant dense<0.000000e+00> : vector<32xf32>
    %120 = vector.multi_reduction <add>, %119, %cst_46 [1] : vector<32x128xf32> to vector<32xf32>
    %121 = vector.shape_cast %120 : vector<32xf32> to vector<32x1xf32>
    %cst_47 = arith.constant 1.280000e+02 : f32
    %122 = vector.broadcast %cst_47 : f32 to vector<32x1xf32>
    %123 = arith.divf %121, %122 : vector<32x1xf32>
    %124 = vector.broadcast %114 : vector<32x1xf32> to vector<32x128xf32>
    %125 = arith.subf %110, %124 : vector<32x128xf32>
    %cst_48 = arith.constant 9.99999974E-6 : f32
    %126 = vector.broadcast %cst_48 : f32 to vector<32x1xf32>
    %127 = arith.addf %123, %126 : vector<32x1xf32>
    %128 = math.rsqrt %127 : vector<32x1xf32>
    %129 = vector.broadcast %128 : vector<32x1xf32> to vector<32x128xf32>
    %130 = arith.mulf %125, %129 : vector<32x128xf32>
    %131 = vector.broadcast %12 : vector<1x128xf32> to vector<32x128xf32>
    %132 = arith.mulf %130, %131 : vector<32x128xf32>
    %133 = vector.broadcast %13 : vector<1x128xf32> to vector<32x128xf32>
    %134 = arith.addf %132, %133 : vector<32x128xf32>
    %c0_49 = arith.constant 0 : index
    %c0_50 = arith.constant 0 : index
    %135 = vector.load %arg13[%c0_49, %c0_50] : memref<32x128xf32, #tpu.memory_space<vmem>>, vector<32x128xf32>
    tpu.vector_store %arg13[%c0_49, %c0_50], %134 {strides = array<i32>} : memref<32x128xf32, #tpu.memory_space<vmem>>, vector<32x128xf32>,
    %c3_i32 = arith.constant 3 : i32
    %136 = arith.cmpi eq, %arg1, %c3_i32 : i32
    %137 = arith.extui %136 : i1 to i32
    %c0_i32_51 = arith.constant 0 : i32
    %138 = arith.cmpi ne, %137, %c0_i32_51 : i32
    scf.if %138 {
      %c0_52 = arith.constant 0 : index
      %c0_53 = arith.constant 0 : index
      %c0_54 = arith.constant 0 : index
      %139 = vector.load %arg12[%c0_52, %c0_53, %c0_54] : memref<1x32x128xf32, #tpu.memory_space<vmem>>, vector<1x32x128xf32>
      %140 = vector.shape_cast %139 : vector<1x32x128xf32> to vector<32x128xf32>
      %141 = vector.shape_cast %134 : vector<32x128xf32> to vector<1x32x128xf32>
      tpu.vector_store %arg12[%c0_52, %c0_53, %c0_54], %141 {strides = array<i32>} : memref<1x32x128xf32, #tpu.memory_space<vmem>>, vector<1x32x128xf32>,
    } else {
    }
    return
  }
  func.func @transform_0(%arg0: i32, %arg1: i32) -> (i32, i32, i32) {
    %c0_i32 = arith.constant 0 : i32
    %c0_i32_0 = arith.constant 0 : i32
    %c0_i32_1 = arith.constant 0 : i32
    return %arg0, %c0_i32, %c0_i32_0 : i32, i32, i32
  }
  func.func @transform_1(%arg0: i32, %arg1: i32) -> (i32, i32, i32) {
    %c0_i32 = arith.constant 0 : i32
    %c0_i32_0 = arith.constant 0 : i32
    %c0_i32_1 = arith.constant 0 : i32
    %c0_i32_2 = arith.constant 0 : i32
    return %c0_i32, %c0_i32_0, %c0_i32_1 : i32, i32, i32
  }
  func.func @transform_2(%arg0: i32, %arg1: i32) -> (i32, i32, i32) {
    %c0_i32 = arith.constant 0 : i32
    %c0_i32_0 = arith.constant 0 : i32
    %c0_i32_1 = arith.constant 0 : i32
    return %arg1, %c0_i32, %c0_i32_0 : i32, i32, i32
  }
  func.func @transform_3(%arg0: i32, %arg1: i32) -> (i32, i32, i32) {
    %c0_i32 = arith.constant 0 : i32
    %c0_i32_0 = arith.constant 0 : i32
    %c0_i32_1 = arith.constant 0 : i32
    return %arg1, %c0_i32, %c0_i32_0 : i32, i32, i32
  }
  func.func @transform_4(%arg0: i32, %arg1: i32) -> (i32, i32, i32) {
    %c0_i32 = arith.constant 0 : i32
    %c0_i32_0 = arith.constant 0 : i32
    %c0_i32_1 = arith.constant 0 : i32
    return %arg1, %c0_i32, %c0_i32_0 : i32, i32, i32
  }
  func.func @transform_5(%arg0: i32, %arg1: i32) -> (i32, i32, i32) {
    %c0_i32 = arith.constant 0 : i32
    %c0_i32_0 = arith.constant 0 : i32
    %c0_i32_1 = arith.constant 0 : i32
    return %arg1, %c0_i32, %c0_i32_0 : i32, i32, i32
  }
  func.func @transform_6(%arg0: i32, %arg1: i32) -> (i32, i32, i32) {
    %c0_i32 = arith.constant 0 : i32
    %c0_i32_0 = arith.constant 0 : i32
    %c0_i32_1 = arith.constant 0 : i32
    return %arg1, %c0_i32, %c0_i32_0 : i32, i32, i32
  }
  func.func @transform_7(%arg0: i32, %arg1: i32) -> (i32, i32, i32) {
    %c0_i32 = arith.constant 0 : i32
    %c0_i32_0 = arith.constant 0 : i32
    %c0_i32_1 = arith.constant 0 : i32
    return %arg1, %c0_i32, %c0_i32_0 : i32, i32, i32
  }
  func.func @transform_8(%arg0: i32, %arg1: i32) -> (i32, i32, i32) {
    %c0_i32 = arith.constant 0 : i32
    %c0_i32_0 = arith.constant 0 : i32
    %c0_i32_1 = arith.constant 0 : i32
    return %arg1, %c0_i32, %c0_i32_0 : i32, i32, i32
  }
  func.func @transform_9(%arg0: i32, %arg1: i32) -> (i32, i32, i32) {
    %c0_i32 = arith.constant 0 : i32
    %c0_i32_0 = arith.constant 0 : i32
    %c0_i32_1 = arith.constant 0 : i32
    return %arg1, %c0_i32, %c0_i32_0 : i32, i32, i32
  }
  func.func @transform_10(%arg0: i32, %arg1: i32) -> (i32, i32, i32) {
    %c0_i32 = arith.constant 0 : i32
    %c0_i32_0 = arith.constant 0 : i32
    %c0_i32_1 = arith.constant 0 : i32
    return %arg0, %c0_i32, %c0_i32_0 : i32, i32, i32
  }
}

</mosaic_0001>

<llo_original>
// kernel: tpu_custom_call.1
$region0: #{tpu_custom_call.1}
  #allocation0 [shape = 'u32[]', space=smem, size = 0x4, offset = 0x4, fixed_abs, tag = 'smem constant byte address 0x4 - core index']
  #allocation1 [shape = 'u32[144,128]{1,0:T(1,128)}', space=vmem, size = 0x12000, scoped, tag = 'internal scratch']
  #allocation2 [shape = 'f32[32,128]{1,0:T(8,128)}', space=vmem, size = 0x4000, scoped, tag = 'scratch operand']
  %s0 = inlined_call_operand.vmem [shape: f32[2,32,128], index: 0, kind: input, shape index: {}]
  %s1 = inlined_call_operand.vmem [shape: f32[1,32,128], index: 1, kind: input, shape index: {}]
  %s2 = inlined_call_operand.hbm [shape: bf16[4,128,128], index: 2, kind: input, shape index: {}]
  %s3 = inlined_call_operand.hbm [shape: bf16[4,128,128], index: 3, kind: input, shape index: {}]
  %s4 = inlined_call_operand.hbm [shape: bf16[4,128,128], index: 4, kind: input, shape index: {}]
  %s5 = inlined_call_operand.hbm [shape: bf16[4,128,128], index: 5, kind: input, shape index: {}]
  %s6 = inlined_call_operand.hbm [shape: bf16[4,128,512], index: 6, kind: input, shape index: {}]
  %s7 = inlined_call_operand.hbm [shape: bf16[4,512,128], index: 7, kind: input, shape index: {}]
  %s8 = inlined_call_operand.vmem [shape: f32[4,9,128], index: 8, kind: input, shape index: {}]
  %s9 = inlined_call_operand.vmem [shape: f32[4,1,512], index: 9, kind: input, shape index: {}]
  %s10 = inlined_call_operand.hbm [shape: f32[2,32,128], index: 10, kind: output, shape index: {}]
  %s11 = sld [smem:[#allocation0]]
  $region105: #{tpu_custom_call.1} parent=0
    _
  %s13 = ssub.s32 1, %s11
  %s14 = scalar_select 0, %s13, %s11
  $region1: #{tpu_custom_call.1} parent=0
    #allocation3 [shape = 'u8[65536]{0}', space=vmem, size = 0x10000, scoped, tag = 'input window, operand 2']
    #allocation4 [shape = 's32[2]{0}', space=sflag, size = 0x8, scoped, tag = 'scoped memory for tpu_custom_call.1']
    #allocation5 [shape = 's32[2]{0}', space=sflag, size = 0x8, scoped, tag = 'scoped memory for tpu_custom_call.1']
    #allocation6 [shape = 'u8[65536]{0}', space=vmem, size = 0x10000, scoped, tag = 'input window, operand 3']
    #allocation7 [shape = 's32[2]{0}', space=sflag, size = 0x8, scoped, tag = 'scoped memory for tpu_custom_call.1']
    #allocation8 [shape = 'u8[65536]{0}', space=vmem, size = 0x10000, scoped, tag = 'input window, operand 4']
    #allocation9 [shape = 'u8[65536]{0}', space=vmem, size = 0x10000, scoped, tag = 'input window, operand 5']
    #allocation10 [shape = 's32[2]{0}', space=sflag, size = 0x8, scoped, tag = 'scoped memory for tpu_custom_call.1']
    #allocation11 [shape = 'u8[262144]{0}', space=vmem, size = 0x40000, scoped, tag = 'input window, operand 6']
    #allocation12 [shape = 'u8[262144]{0}', space=vmem, size = 0x40000, scoped, tag = 'input window, operand 7']
    #allocation13 [shape = 's32[2]{0}', space=sflag, size = 0x8, scoped, tag = 'scoped memory for tpu_custom_call.1']
    #allocation14 [shape = 'u8[32768]{0}', space=vmem, size = 0x8000, scoped, tag = 'output window, operand 0']
    %15 = vsyncpa [#allocation4], 0
    %s16 = scalar_lea.sflag [#allocation4], 1
    %17 = vsyncpa %s16, 0
    %18 = vsyncpa [#allocation7], 0
    %s19 = scalar_lea.sflag [#allocation7], 1
    %20 = vsyncpa %s19, 0
    %21 = vsyncpa [#allocation10], 0
    %s22 = scalar_lea.sflag [#allocation10], 1
    %23 = vsyncpa %s22, 0
    %24 = vsyncpa [#allocation13], 0
    %s25 = scalar_lea.sflag [#allocation13], 1
    %26 = vsyncpa %s25, 0
    %27 = vsyncpa [#allocation5], 0
    %s28 = scalar_lea.sflag [#allocation5], 1
    %29 = vsyncpa %s28, 0
    loop: start=0, step=1, limit=10
    $region2: #{tpu_custom_call.1} parent=1 // loop_pre_header
      _
    $region3: #{tpu_custom_call.1} parent=1 // loop_header
      %s31 = sphi 0, %s35
      %p32 = scmp.ge.s32.totalorder %s31, 10
      %s38 = sphi 0, %s50
      %s39 = sphi 0, %s46
      %s40 = sphi 0, %s38
      %s41 = sphi 0, %s39
      %s42 = sphi 0, %s40
      %s43 = sphi 0, %s41
      %s53 = sphi 0, %s55
      %s56 = sphi 0, %s53
      %s57 = sphi 0, %s56
      %s73 = sphi 0, %s57
      %s77 = sphi 0, %s77
      %s79 = sphi 0, %s77
      %s80 = sphi 0, %s79
      %s94 = sphi 0, %s80
      %s100 = sphi 0, %s102
      %s103 = sphi 0, %s100
      %s104 = sphi 0, %s103
      %s120 = sphi 0, %s104
      %s126 = sphi 0, %s128
      %s129 = sphi 0, %s126
      %s130 = sphi 0, %s129
      %s146 = sphi 0, %s130
      %s152 = sphi 0, %s154
      %s155 = sphi 0, %s152
      %s156 = sphi 0, %s155
      %s172 = sphi 0, %s156
      %s178 = sphi 0, %s180
      %s181 = sphi 0, %s178
      %s182 = sphi 0, %s181
      %s198 = sphi 0, %s182
      %s204 = sphi 0, %s206
      %s207 = sphi 0, %s204
      %s208 = sphi 0, %s207
      %s224 = sphi 0, %s208
      %s230 = sphi 0, %s232
      %s233 = sphi 0, %s230
      %s234 = sphi 0, %s233
      %s250 = sphi 0, %s234
      %s256 = sphi 0, %s258
      %s259 = sphi 0, %s256
      %s260 = sphi 0, %s259
      %s276 = sphi 0, %s260
      %s282 = sphi 0, %s284
      %s285 = sphi 0, %s282
      %s286 = sphi 0, %s285
      %s302 = sphi 0, %s286
      %s308 = sphi 0, %s310
      %s311 = sphi 0, %s308
      %s312 = sphi 0, %s311
      %s328 = sphi 0, %s312
    $region4: #{tpu_custom_call.1} parent=1 // loop_header_branch
      %34 = sbr.rel (%p32) target = $region8
    $region5: #{tpu_custom_call.1} parent=1 // loop_body
      %s36 = ssub.s32 %s31, 1
      %s37 = ssub.s32 %s31, 2
      %s44 = sadd.s32 1, %s39
      %p45 = scmp.ge.s32.totalorder %s44, 4
      %s46 = scalar_select %p45, 0, %s44
      %s47 = sadd.s32 1, %s38
      %s48 = scalar_select %p45, %s47, %s38
      %p49 = scmp.ge.s32.totalorder %s48, 2
      %s50 = scalar_select %p49, 0, %s48
      %s51 = ssub.s32 %s38, %s50
      %p52 = scmp.eq.s32.totalorder %s51, 0
      %s54 = sadd.s32 %s53, 1
      %s55 = scalar_select %p52, %s53, %s54
      %p58 = pneg %p52
      %p59 = scmp.eq.s32.totalorder %s31, 7
      %p60 = por %p58, %p59
      %p61 = scmp.ne.s32.totalorder %s53, %s56
      %p62 = scmp.eq.s32.totalorder %s31, 0
      %p63 = por %p61, %p62
      %p64 = scmp.ne.s32.totalorder %s53, %s56
      %p65 = scmp.eq.s32.totalorder %s36, 7
      %p66 = por %p64, %p65
      %p67 = scmp.ne.s32.totalorder %s56, %s57
      %p68 = scmp.eq.s32.totalorder %s36, 0
      %p69 = por %p67, %p68
      %p70 = scmp.ne.s32.totalorder %s56, %s57
      %p71 = scmp.eq.s32.totalorder %s37, 7
      %p72 = por %p70, %p71
      %p74 = scmp.ne.s32.totalorder %s57, %s73
      %p75 = scmp.eq.s32.totalorder %s37, 0
      %p76 = por %p74, %p75
      %s78 = sadd.s32 %s77, 1
      %p81 = scmp.eq.s32.totalorder %s31, 7
      %p82 = scmp.ne.s32.totalorder %s77, %s79
      %p83 = scmp.eq.s32.totalorder %s31, 0
      %p84 = por %p82, %p83
      %p85 = scmp.ne.s32.totalorder %s77, %s79
      %p86 = scmp.eq.s32.totalorder %s36, 7
      %p87 = por %p85, %p86
      %p88 = scmp.ne.s32.totalorder %s79, %s80
      %p89 = scmp.eq.s32.totalorder %s36, 0
      %p90 = por %p88, %p89
      %p91 = scmp.ne.s32.totalorder %s79, %s80
      %p92 = scmp.eq.s32.totalorder %s37, 7
      %p93 = por %p91, %p92
      %p95 = scmp.ne.s32.totalorder %s80, %s94
      %p96 = scmp.eq.s32.totalorder %s37, 0
      %p97 = por %p95, %p96
      %s98 = ssub.s32 %s39, %s46
      %p99 = scmp.eq.s32.totalorder %s98, 0
      %s101 = sadd.s32 %s100, 1
      %s102 = scalar_select %p99, %s100, %s101
      %p105 = pneg %p99
      %p106 = scmp.eq.s32.totalorder %s31, 7
      %p107 = por %p105, %p106
      %p108 = scmp.ne.s32.totalorder %s100, %s103
      %p109 = scmp.eq.s32.totalorder %s31, 0
      %p110 = por %p108, %p109
      %p111 = scmp.ne.s32.totalorder %s100, %s103
      %p112 = scmp.eq.s32.totalorder %s36, 7
      %p113 = por %p111, %p112
      %p114 = scmp.ne.s32.totalorder %s103, %s104
      %p115 = scmp.eq.s32.totalorder %s36, 0
      %p116 = por %p114, %p115
      %p117 = scmp.ne.s32.totalorder %s103, %s104
      %p118 = scmp.eq.s32.totalorder %s37, 7
      %p119 = por %p117, %p118
      %p121 = scmp.ne.s32.totalorder %s104, %s120
      %p122 = scmp.eq.s32.totalorder %s37, 0
      %p123 = por %p121, %p122
      %s124 = ssub.s32 %s39, %s46
      %p125 = scmp.eq.s32.totalorder %s124, 0
      %s127 = sadd.s32 %s126, 1
      %s128 = scalar_select %p125, %s126, %s127
      %p131 = pneg %p125
      %p132 = scmp.eq.s32.totalorder %s31, 7
      %p133 = por %p131, %p132
      %p134 = scmp.ne.s32.totalorder %s126, %s129
      %p135 = scmp.eq.s32.totalorder %s31, 0
      %p136 = por %p134, %p135
      %p137 = scmp.ne.s32.totalorder %s126, %s129
      %p138 = scmp.eq.s32.totalorder %s36, 7
      %p139 = por %p137, %p138
      %p140 = scmp.ne.s32.totalorder %s129, %s130
      %p141 = scmp.eq.s32.totalorder %s36, 0
      %p142 = por %p140, %p141
      %p143 = scmp.ne.s32.totalorder %s129, %s130
      %p144 = scmp.eq.s32.totalorder %s37, 7
      %p145 = por %p143, %p144
      %p147 = scmp.ne.s32.totalorder %s130, %s146
      %p148 = scmp.eq.s32.totalorder %s37, 0
      %p149 = por %p147, %p148
      %s150 = ssub.s32 %s39, %s46
      %p151 = scmp.eq.s32.totalorder %s150, 0
      %s153 = sadd.s32 %s152, 1
      %s154 = scalar_select %p151, %s152, %s153
      %p157 = pneg %p151
      %p158 = scmp.eq.s32.totalorder %s31, 7
      %p159 = por %p157, %p158
      %p160 = scmp.ne.s32.totalorder %s152, %s155
      %p161 = scmp.eq.s32.totalorder %s31, 0
      %p162 = por %p160, %p161
      %p163 = scmp.ne.s32.totalorder %s152, %s155
      %p164 = scmp.eq.s32.totalorder %s36, 7
      %p165 = por %p163, %p164
      %p166 = scmp.ne.s32.totalorder %s155, %s156
      %p167 = scmp.eq.s32.totalorder %s36, 0
      %p168 = por %p166, %p167
      %p169 = scmp.ne.s32.totalorder %s155, %s156
      %p170 = scmp.eq.s32.totalorder %s37, 7
      %p171 = por %p169, %p170
      %p173 = scmp.ne.s32.totalorder %s156, %s172
      %p174 = scmp.eq.s32.totalorder %s37, 0
      %p175 = por %p173, %p174
      %s176 = ssub.s32 %s39, %s46
      %p177 = scmp.eq.s32.totalorder %s176, 0
      %s179 = sadd.s32 %s178, 1
      %s180 = scalar_select %p177, %s178, %s179
      %p183 = pneg %p177
      %p184 = scmp.eq.s32.totalorder %s31, 7
      %p185 = por %p183, %p184
      %p186 = scmp.ne.s32.totalorder %s178, %s181
      %p187 = scmp.eq.s32.totalorder %s31, 0
      %p188 = por %p186, %p187
      %p189 = scmp.ne.s32.totalorder %s178, %s181
      %p190 = scmp.eq.s32.totalorder %s36, 7
      %p191 = por %p189, %p190
      %p192 = scmp.ne.s32.totalorder %s181, %s182
      %p193 = scmp.eq.s32.totalorder %s36, 0
      %p194 = por %p192, %p193
      %p195 = scmp.ne.s32.totalorder %s181, %s182
      %p196 = scmp.eq.s32.totalorder %s37, 7
      %p197 = por %p195, %p196
      %p199 = scmp.ne.s32.totalorder %s182, %s198
      %p200 = scmp.eq.s32.totalorder %s37, 0
      %p201 = por %p199, %p200
      %s202 = ssub.s32 %s39, %s46
      %p203 = scmp.eq.s32.totalorder %s202, 0
      %s205 = sadd.s32 %s204, 1
      %s206 = scalar_select %p203, %s204, %s205
      %p209 = pneg %p203
      %p210 = scmp.eq.s32.totalorder %s31, 7
      %p211 = por %p209, %p210
      %p212 = scmp.ne.s32.totalorder %s204, %s207
      %p213 = scmp.eq.s32.totalorder %s31, 0
      %p214 = por %p212, %p213
      %p215 = scmp.ne.s32.totalorder %s204, %s207
      %p216 = scmp.eq.s32.totalorder %s36, 7
      %p217 = por %p215, %p216
      %p218 = scmp.ne.s32.totalorder %s207, %s208
      %p219 = scmp.eq.s32.totalorder %s36, 0
      %p220 = por %p218, %p219
      %p221 = scmp.ne.s32.totalorder %s207, %s208
      %p222 = scmp.eq.s32.totalorder %s37, 7
      %p223 = por %p221, %p222
      %p225 = scmp.ne.s32.totalorder %s208, %s224
      %p226 = scmp.eq.s32.totalorder %s37, 0
      %p227 = por %p225, %p226
      %s228 = ssub.s32 %s39, %s46
      %p229 = scmp.eq.s32.totalorder %s228, 0
      %s231 = sadd.s32 %s230, 1
      %s232 = scalar_select %p229, %s230, %s231
      %p235 = pneg %p229
      %p236 = scmp.eq.s32.totalorder %s31, 7
      %p237 = por %p235, %p236
      %p238 = scmp.ne.s32.totalorder %s230, %s233
      %p239 = scmp.eq.s32.totalorder %s31, 0
      %p240 = por %p238, %p239
      %p241 = scmp.ne.s32.totalorder %s230, %s233
      %p242 = scmp.eq.s32.totalorder %s36, 7
      %p243 = por %p241, %p242
      %p244 = scmp.ne.s32.totalorder %s233, %s234
      %p245 = scmp.eq.s32.totalorder %s36, 0
      %p246 = por %p244, %p245
      %p247 = scmp.ne.s32.totalorder %s233, %s234
      %p248 = scmp.eq.s32.totalorder %s37, 7
      %p249 = por %p247, %p248
      %p251 = scmp.ne.s32.totalorder %s234, %s250
      %p252 = scmp.eq.s32.totalorder %s37, 0
      %p253 = por %p251, %p252
      %s254 = ssub.s32 %s39, %s46
      %p255 = scmp.eq.s32.totalorder %s254, 0
      %s257 = sadd.s32 %s256, 1
      %s258 = scalar_select %p255, %s256, %s257
      %p261 = pneg %p255
      %p262 = scmp.eq.s32.totalorder %s31, 7
      %p263 = por %p261, %p262
      %p264 = scmp.ne.s32.totalorder %s256, %s259
      %p265 = scmp.eq.s32.totalorder %s31, 0
      %p266 = por %p264, %p265
      %p267 = scmp.ne.s32.totalorder %s256, %s259
      %p268 = scmp.eq.s32.totalorder %s36, 7
      %p269 = por %p267, %p268
      %p270 = scmp.ne.s32.totalorder %s259, %s260
      %p271 = scmp.eq.s32.totalorder %s36, 0
      %p272 = por %p270, %p271
      %p273 = scmp.ne.s32.totalorder %s259, %s260
      %p274 = scmp.eq.s32.totalorder %s37, 7
      %p275 = por %p273, %p274
      %p277 = scmp.ne.s32.totalorder %s260, %s276
      %p278 = scmp.eq.s32.totalorder %s37, 0
      %p279 = por %p277, %p278
      %s280 = ssub.s32 %s39, %s46
      %p281 = scmp.eq.s32.totalorder %s280, 0
      %s283 = sadd.s32 %s282, 1
      %s284 = scalar_select %p281, %s282, %s283
      %p287 = pneg %p281
      %p288 = scmp.eq.s32.totalorder %s31, 7
      %p289 = por %p287, %p288
      %p290 = scmp.ne.s32.totalorder %s282, %s285
      %p291 = scmp.eq.s32.totalorder %s31, 0
      %p292 = por %p290, %p291
      %p293 = scmp.ne.s32.totalorder %s282, %s285
      %p294 = scmp.eq.s32.totalorder %s36, 7
      %p295 = por %p293, %p294
      %p296 = scmp.ne.s32.totalorder %s285, %s286
      %p297 = scmp.eq.s32.totalorder %s36, 0
      %p298 = por %p296, %p297
      %p299 = scmp.ne.s32.totalorder %s285, %s286
      %p300 = scmp.eq.s32.totalorder %s37, 7
      %p301 = por %p299, %p300
      %p303 = scmp.ne.s32.totalorder %s286, %s302
      %p304 = scmp.eq.s32.totalorder %s37, 0
      %p305 = por %p303, %p304
      %s306 = ssub.s32 %s38, %s50
      %p307 = scmp.eq.s32.totalorder %s306, 0
      %s309 = sadd.s32 %s308, 1
      %s310 = scalar_select %p307, %s308, %s309
      %p313 = pneg %p307
      %p314 = scmp.eq.s32.totalorder %s31, 7
      %p315 = por %p313, %p314
      %p316 = scmp.ne.s32.totalorder %s308, %s311
      %p317 = scmp.eq.s32.totalorder %s31, 0
      %p318 = por %p316, %p317
      %p319 = scmp.ne.s32.totalorder %s308, %s311
      %p320 = scmp.eq.s32.totalorder %s36, 7
      %p321 = por %p319, %p320
      %p322 = scmp.ne.s32.totalorder %s311, %s312
      %p323 = scmp.eq.s32.totalorder %s36, 0
      %p324 = por %p322, %p323
      %p325 = scmp.ne.s32.totalorder %s311, %s312
      %p326 = scmp.eq.s32.totalorder %s37, 7
      %p327 = por %p325, %p326
      %p329 = scmp.ne.s32.totalorder %s312, %s328
      %p330 = scmp.eq.s32.totalorder %s37, 0
      %p331 = por %p329, %p330
      %p332 = scmp.le.s32.totalorder 1, %s31
      %p333 = scmp.lt.s32.totalorder %s31, 9
      %p334 = pnand %p332, %p333
      %p335 = pneg %p334
      // Predicated region
      $region9: #{tpu_custom_call.1} parent=5 // pred_check
        _
      $region10: #{tpu_custom_call.1} parent=5 // pred_check_branch
        %337 = sbr.rel (%p334) target = $region12
      $region11: #{tpu_custom_call.1} parent=5 // pred_region
        %s338 = ssub.s32 %s31, 1
        // Predicated region
        $region13: #{tpu_custom_call.1} parent=11 // pred_check
          %p339 = pneg %p90
        $region14: #{tpu_custom_call.1} parent=11 // pred_check_branch
          %341 = sbr.rel (%p339) target = $region16
        $region15: #{tpu_custom_call.1} parent=11 // pred_region
          _
        $region16: #{tpu_custom_call.1} parent=11 // pred_fallthru
          _
      $region12: #{tpu_custom_call.1} parent=5 // pred_fallthru
        _
      %p342 = scmp.lt.s32.totalorder %s31, 8
      // Predicated region
      $region17: #{tpu_custom_call.1} parent=5 // pred_check
        %p343 = pneg %p342
      $region18: #{tpu_custom_call.1} parent=5 // pred_check_branch
        %345 = sbr.rel (%p343) target = $region20
      $region19: #{tpu_custom_call.1} parent=5 // pred_region
        // Predicated region
        $region21: #{tpu_custom_call.1} parent=19 // pred_check
          %p346 = pneg %p63
        $region22: #{tpu_custom_call.1} parent=19 // pred_check_branch
          %348 = sbr.rel (%p346) target = $region24
        $region23: #{tpu_custom_call.1} parent=19 // pred_region
          %p349 = scmp.lt.s32.totalorder %s38, 1
          %s350 = scalar_select %p349, %s38, 1
          %s351 = smul.addr %s350, 4
          %s352 = smul.addr %s351, 8
          %s353 = scalar_lea.vmem %s0, %s352
        $region24: #{tpu_custom_call.1} parent=19 // pred_fallthru
          _
        // Predicated region
        $region25: #{tpu_custom_call.1} parent=19 // pred_check
          %p354 = pneg %p110
        $region26: #{tpu_custom_call.1} parent=19 // pred_check_branch
          %356 = sbr.rel (%p354) target = $region28
        $region27: #{tpu_custom_call.1} parent=19 // pred_region
          %s357 = sand.u32 %s100, 1
          %s358 = scalar_lea.sflag [#allocation4], %s357
          %s359 = sand.u32 %s100, 1
          %s360 = smul.addr %s359, 64
          %s361 = scalar_lea.vmem [#allocation3], %s360
          %s363 = ssub.s32 1024, 1024
          %364 = vsyncadd %s358, %s363
          %s365 = smul.addr %s39, 16
          %s366 = smul.addr %s365, 64
          %s367 = scalar_lea.hbm %s2, %s366
          %s368 = sshll.u32 %s361, 4
          %s369 = int_to_ptr.vmem [resolvable:$true] %s368
          %374 = dma.hbm_to_vmem [thread:$0]  %s367, 1024, %s369, %s358, 64, 64, 4
        $region28: #{tpu_custom_call.1} parent=19 // pred_fallthru
          _
        // Predicated region
        $region29: #{tpu_custom_call.1} parent=19 // pred_check
          %p375 = pneg %p136
        $region30: #{tpu_custom_call.1} parent=19 // pred_check_branch
          %377 = sbr.rel (%p375) target = $region32
        $region31: #{tpu_custom_call.1} parent=19 // pred_region
          %s378 = sand.u32 %s31, 1
          %s379 = scalar_lea.sflag [#allocation7], %s378
          %s380 = sand.u32 %s126, 1
          %s381 = smul.addr %s380, 64
          %s382 = scalar_lea.vmem [#allocation6], %s381
          %s384 = ssub.s32 1024, 1024
          %385 = vsyncadd %s379, %s384
          %s386 = smul.addr %s39, 16
          %s387 = smul.addr %s386, 64
          %s388 = scalar_lea.hbm %s3, %s387
          %s389 = sshll.u32 %s382, 4
          %s390 = int_to_ptr.vmem [resolvable:$true] %s389
          %395 = dma.hbm_to_vmem [thread:$0]  %s388, 1024, %s390, %s379, 64, 64, 4
        $region32: #{tpu_custom_call.1} parent=19 // pred_fallthru
          _
        // Predicated region
        $region33: #{tpu_custom_call.1} parent=19 // pred_check
          %p396 = pneg %p162
        $region34: #{tpu_custom_call.1} parent=19 // pred_check_branch
          %398 = sbr.rel (%p396) target = $region36
        $region35: #{tpu_custom_call.1} parent=19 // pred_region
          %s399 = sand.u32 %s31, 1
          %s400 = scalar_lea.sflag [#allocation7], %s399
          %s401 = sand.u32 %s152, 1
          %s402 = smul.addr %s401, 64
          %s403 = scalar_lea.vmem [#allocation8], %s402
          %s405 = ssub.s32 1024, 1024
          %406 = vsyncadd %s400, %s405
          %s407 = smul.addr %s39, 16
          %s408 = smul.addr %s407, 64
          %s409 = scalar_lea.hbm %s4, %s408
          %s410 = sshll.u32 %s403, 4
          %s411 = int_to_ptr.vmem [resolvable:$true] %s410
          %416 = dma.hbm_to_vmem [thread:$0]  %s409, 1024, %s411, %s400, 64, 64, 4
        $region36: #{tpu_custom_call.1} parent=19 // pred_fallthru
          _
        // Predicated region
        $region37: #{tpu_custom_call.1} parent=19 // pred_check
          %p417 = pneg %p188
        $region38: #{tpu_custom_call.1} parent=19 // pred_check_branch
          %419 = sbr.rel (%p417) target = $region40
        $region39: #{tpu_custom_call.1} parent=19 // pred_region
          %s420 = sand.u32 %s31, 1
          %s421 = scalar_lea.sflag [#allocation10], %s420
          %s422 = sand.u32 %s178, 1
          %s423 = smul.addr %s422, 64
          %s424 = scalar_lea.vmem [#allocation9], %s423
          %s426 = ssub.s32 1024, 1024
          %427 = vsyncadd %s421, %s426
          %s428 = smul.addr %s39, 16
          %s429 = smul.addr %s428, 64
          %s430 = scalar_lea.hbm %s5, %s429
          %s431 = sshll.u32 %s424, 4
          %s432 = int_to_ptr.vmem [resolvable:$true] %s431
          %437 = dma.hbm_to_vmem [thread:$0]  %s430, 1024, %s432, %s421, 64, 64, 4
        $region40: #{tpu_custom_call.1} parent=19 // pred_fallthru
          _
        // Predicated region
        $region41: #{tpu_custom_call.1} parent=19 // pred_check
          %p438 = pneg %p214
        $region42: #{tpu_custom_call.1} parent=19 // pred_check_branch
          %440 = sbr.rel (%p438) target = $region44
        $region43: #{tpu_custom_call.1} parent=19 // pred_region
          %s441 = sand.u32 %s31, 1
          %s442 = scalar_lea.sflag [#allocation10], %s441
          %s443 = sand.u32 %s204, 1
          %s444 = smul.addr %s443, 256
          %s445 = scalar_lea.vmem [#allocation11], %s444
          %s447 = ssub.s32 4096, 4096
          %448 = vsyncadd %s442, %s447
          %s449 = smul.addr %s39, 64
          %s450 = smul.addr %s449, 64
          %s451 = scalar_lea.hbm %s6, %s450
          %s452 = sshll.u32 %s445, 4
          %s453 = int_to_ptr.vmem [resolvable:$true] %s452
          %458 = dma.hbm_to_vmem [thread:$0]  %s451, 4096, %s453, %s442, 256, 256, 16
        $region44: #{tpu_custom_call.1} parent=19 // pred_fallthru
          _
        // Predicated region
        $region45: #{tpu_custom_call.1} parent=19 // pred_check
          %p459 = pneg %p240
        $region46: #{tpu_custom_call.1} parent=19 // pred_check_branch
          %461 = sbr.rel (%p459) target = $region48
        $region47: #{tpu_custom_call.1} parent=19 // pred_region
          %s462 = sand.u32 %s230, 1
          %s463 = scalar_lea.sflag [#allocation13], %s462
          %s464 = sand.u32 %s230, 1
          %s465 = smul.addr %s464, 256
          %s466 = scalar_lea.vmem [#allocation12], %s465
          %s468 = ssub.s32 4096, 4096
          %469 = vsyncadd %s463, %s468
          %s470 = smul.addr %s39, 64
          %s471 = smul.addr %s470, 64
          %s472 = scalar_lea.hbm %s7, %s471
          %s473 = sshll.u32 %s466, 4
          %s474 = int_to_ptr.vmem [resolvable:$true] %s473
          %479 = dma.hbm_to_vmem [thread:$0]  %s472, 4096, %s474, %s463, 64, 64, 4
        $region48: #{tpu_custom_call.1} parent=19 // pred_fallthru
          _
        // Predicated region
        $region49: #{tpu_custom_call.1} parent=19 // pred_check
          %p480 = pneg %p266
        $region50: #{tpu_custom_call.1} parent=19 // pred_check_branch
          %482 = sbr.rel (%p480) target = $region52
        $region51: #{tpu_custom_call.1} parent=19 // pred_region
          %p483 = scmp.lt.s32.totalorder %s39, 3
          %s484 = scalar_select %p483, %s39, 3
          %s485 = smul.addr %s484, 2
          %s486 = smul.addr %s485, 8
          %s487 = scalar_lea.vmem %s8, %s486
        $region52: #{tpu_custom_call.1} parent=19 // pred_fallthru
          _
        // Predicated region
        $region53: #{tpu_custom_call.1} parent=19 // pred_check
          %p488 = pneg %p292
        $region54: #{tpu_custom_call.1} parent=19 // pred_check_branch
          %490 = sbr.rel (%p488) target = $region56
        $region55: #{tpu_custom_call.1} parent=19 // pred_region
          %p491 = scmp.lt.s32.totalorder %s39, 3
          %s492 = scalar_select %p491, %s39, 3
          %s493 = smul.addr %s492, 4
          %s494 = scalar_lea.vmem %s9, %s493
        $region56: #{tpu_custom_call.1} parent=19 // pred_fallthru
          _
      $region20: #{tpu_custom_call.1} parent=5 // pred_fallthru
        _
      %p495 = scmp.le.s32.totalorder 1, %s31
      %p496 = scmp.lt.s32.totalorder %s31, 9
      %p497 = pnand %p495, %p496
      %p498 = pneg %p497
      // Predicated region
      $region57: #{tpu_custom_call.1} parent=5 // pred_check
        _
      $region58: #{tpu_custom_call.1} parent=5 // pred_check_branch
        %500 = sbr.rel (%p497) target = $region60
      $region59: #{tpu_custom_call.1} parent=5 // pred_region
        %s501 = ssub.s32 %s31, 1
        %s502 = sand.u32 %s103, 1
        %s503 = scalar_lea.sflag [#allocation4], %s502
        %s504 = sand.u32 %s103, 1
        %s505 = smul.addr %s504, 64
        %s506 = scalar_lea.vmem [#allocation3], %s505
        // Predicated region
        $region61: #{tpu_custom_call.1} parent=59 // pred_check
          %p507 = pneg %p116
        $region62: #{tpu_custom_call.1} parent=59 // pred_check_branch
          %509 = sbr.rel (%p507) target = $region64
        $region63: #{tpu_custom_call.1} parent=59 // pred_region
          %510 = dma.done %s503, 1024
        $region64: #{tpu_custom_call.1} parent=59 // pred_fallthru
          _
        %s511 = sand.u32 %s36, 1
        %s512 = scalar_lea.sflag [#allocation7], %s511
        %s513 = sand.u32 %s129, 1
        %s514 = smul.addr %s513, 64
        %s515 = scalar_lea.vmem [#allocation6], %s514
        // Predicated region
        $region65: #{tpu_custom_call.1} parent=59 // pred_check
          %p516 = pneg %p142
        $region66: #{tpu_custom_call.1} parent=59 // pred_check_branch
          %518 = sbr.rel (%p516) target = $region68
        $region67: #{tpu_custom_call.1} parent=59 // pred_region
          %519 = dma.done %s512, 1024
        $region68: #{tpu_custom_call.1} parent=59 // pred_fallthru
          _
        %s520 = sand.u32 %s36, 1
        %s521 = scalar_lea.sflag [#allocation7], %s520
        %s522 = sand.u32 %s155, 1
        %s523 = smul.addr %s522, 64
        %s524 = scalar_lea.vmem [#allocation8], %s523
        // Predicated region
        $region69: #{tpu_custom_call.1} parent=59 // pred_check
          %p525 = pneg %p168
        $region70: #{tpu_custom_call.1} parent=59 // pred_check_branch
          %527 = sbr.rel (%p525) target = $region72
        $region71: #{tpu_custom_call.1} parent=59 // pred_region
          %528 = dma.done %s521, 1024
        $region72: #{tpu_custom_call.1} parent=59 // pred_fallthru
          _
        %s529 = sand.u32 %s36, 1
        %s530 = scalar_lea.sflag [#allocation10], %s529
        %s531 = sand.u32 %s181, 1
        %s532 = smul.addr %s531, 64
        %s533 = scalar_lea.vmem [#allocation9], %s532
        // Predicated region
        $region73: #{tpu_custom_call.1} parent=59 // pred_check
          %p534 = pneg %p194
        $region74: #{tpu_custom_call.1} parent=59 // pred_check_branch
          %536 = sbr.rel (%p534) target = $region76
        $region75: #{tpu_custom_call.1} parent=59 // pred_region
          %537 = dma.done %s530, 1024
        $region76: #{tpu_custom_call.1} parent=59 // pred_fallthru
          _
        %s538 = sand.u32 %s36, 1
        %s539 = scalar_lea.sflag [#allocation10], %s538
        %s540 = sand.u32 %s207, 1
        %s541 = smul.addr %s540, 256
        %s542 = scalar_lea.vmem [#allocation11], %s541
        // Predicated region
        $region77: #{tpu_custom_call.1} parent=59 // pred_check
          %p543 = pneg %p220
        $region78: #{tpu_custom_call.1} parent=59 // pred_check_branch
          %545 = sbr.rel (%p543) target = $region80
        $region79: #{tpu_custom_call.1} parent=59 // pred_region
          %546 = dma.done %s539, 4096
        $region80: #{tpu_custom_call.1} parent=59 // pred_fallthru
          _
        %s547 = sand.u32 %s233, 1
        %s548 = scalar_lea.sflag [#allocation13], %s547
        %s549 = sand.u32 %s233, 1
        %s550 = smul.addr %s549, 256
        %s551 = scalar_lea.vmem [#allocation12], %s550
        // Predicated region
        $region81: #{tpu_custom_call.1} parent=59 // pred_check
          %p552 = pneg %p246
        $region82: #{tpu_custom_call.1} parent=59 // pred_check_branch
          %554 = sbr.rel (%p552) target = $region84
        $region83: #{tpu_custom_call.1} parent=59 // pred_region
          %555 = dma.done %s548, 4096
        $region84: #{tpu_custom_call.1} parent=59 // pred_fallthru
          _
        %p556 = scmp.lt.s32.totalorder %s40, 1
        %s557 = scalar_select %p556, %s40, 1
        %s558 = smul.addr %s557, 4
        %s559 = smul.addr %s558, 8
        %s560 = scalar_lea.vmem %s0, %s559
        %p561 = pneg %p69
        %p562 = pneg %p66
        %p563 = pneg %p90
        %p564 = pneg %p87
        %s565 = sand.u32 %s103, 1
        %s566 = scalar_lea.sflag [#allocation4], %s565
        %s567 = sand.u32 %s103, 1
        %s568 = smul.addr %s567, 64
        %s569 = scalar_lea.vmem [#allocation3], %s568
        %p570 = pneg %p116
        %p571 = pneg %p113
        %s572 = sand.u32 %s36, 1
        %s573 = scalar_lea.sflag [#allocation7], %s572
        %s574 = sand.u32 %s129, 1
        %s575 = smul.addr %s574, 64
        %s576 = scalar_lea.vmem [#allocation6], %s575
        %p577 = pneg %p142
        %p578 = pneg %p139
        %s579 = sand.u32 %s36, 1
        %s580 = scalar_lea.sflag [#allocation7], %s579
        %s581 = sand.u32 %s155, 1
        %s582 = smul.addr %s581, 64
        %s583 = scalar_lea.vmem [#allocation8], %s582
        %p584 = pneg %p168
        %p585 = pneg %p165
        %s586 = sand.u32 %s36, 1
        %s587 = scalar_lea.sflag [#allocation10], %s586
        %s588 = sand.u32 %s181, 1
        %s589 = smul.addr %s588, 64
        %s590 = scalar_lea.vmem [#allocation9], %s589
        %p591 = pneg %p194
        %p592 = pneg %p191
        %s593 = sand.u32 %s36, 1
        %s594 = scalar_lea.sflag [#allocation10], %s593
        %s595 = sand.u32 %s207, 1
        %s596 = smul.addr %s595, 256
        %s597 = scalar_lea.vmem [#allocation11], %s596
        %p598 = pneg %p220
        %p599 = pneg %p217
        %s600 = sand.u32 %s233, 1
        %s601 = scalar_lea.sflag [#allocation13], %s600
        %s602 = sand.u32 %s233, 1
        %s603 = smul.addr %s602, 256
        %s604 = scalar_lea.vmem [#allocation12], %s603
        %p605 = pneg %p246
        %p606 = pneg %p243
        %p607 = scmp.lt.s32.totalorder %s41, 3
        %s608 = scalar_select %p607, %s41, 3
        %s609 = smul.addr %s608, 2
        %s610 = smul.addr %s609, 8
        %s611 = scalar_lea.vmem %s8, %s610
        %p612 = pneg %p272
        %p613 = pneg %p269
        %p614 = scmp.lt.s32.totalorder %s41, 3
        %s615 = scalar_select %p614, %s41, 3
        %s616 = smul.addr %s615, 4
        %s617 = scalar_lea.vmem %s9, %s616
        %p618 = pneg %p298
        %p619 = pneg %p295
        %p620 = pneg %p324
        %p621 = pneg %p321
        %s622 = sand.u32 %s311, 1
        %s623 = scalar_lea.sflag [#allocation5], %s622
        %s624 = sand.u32 %s311, 1
        %s625 = smul.addr %s624, 32
        %s626 = scalar_lea.vmem [#allocation14], %s625
        %p627 = scmp.lt.s32.totalorder %s40, 1
        %s628 = scalar_select %p627, %s40, 1
        %s629 = smul.addr %s628, 4
        %s630 = smul.addr %s629, 8
        %s631 = scalar_lea.vmem %s0, %s630
        %p632 = scmp.lt.s32.totalorder %s41, 3
        %s633 = scalar_select %p632, %s41, 3
        %s634 = smul.addr %s633, 2
        %s635 = smul.addr %s634, 8
        %s636 = scalar_lea.vmem %s8, %s635
        %p637 = scmp.lt.s32.totalorder %s41, 3
        %s638 = scalar_select %p637, %s41, 3
        %s639 = smul.addr %s638, 4
        %s640 = scalar_lea.vmem %s9, %s639
        %p642 = scmp.eq.s32.totalorder %s41, 0
        // Predicated region
        $region85: #{tpu_custom_call.1} parent=59 // pred_check
          %p643 = pneg %p642
        $region86: #{tpu_custom_call.1} parent=59 // pred_check_branch
          %645 = sbr.rel (%p643) target = $region88
        $region87: #{tpu_custom_call.1} parent=59 // pred_region
          %v646 = vld [vmem:[%s631] sm:$0xff]
          %v647 = vld [vmem:[%s631 + $0x8] sm:$0xff]
          %v648 = vld [vmem:[%s631 + $0x10] sm:$0xff]
          %v649 = vld [vmem:[%s631 + $0x18] sm:$0xff]
          %v650 = vld [vmem:[%s1] sm:$0xff]
          %v651 = vld [vmem:[%s1 + $0x8] sm:$0xff]
          %v652 = vld [vmem:[%s1 + $0x10] sm:$0xff]
          %v653 = vld [vmem:[%s1 + $0x18] sm:$0xff]
          %v654 = vadd.f32 %v646, %v650
          %v655 = vadd.f32 %v647, %v651
          %v656 = vadd.f32 %v648, %v652
          %v657 = vadd.f32 %v649, %v653
          %658 = vst [vmem:[#allocation2] sm:$0xff] %v654
          %659 = vst [vmem:[#allocation2 + $0x8] sm:$0xff] %v655
          %660 = vst [vmem:[#allocation2 + $0x10] sm:$0xff] %v656
          %661 = vst [vmem:[#allocation2 + $0x18] sm:$0xff] %v657
        $region88: #{tpu_custom_call.1} parent=59 // pred_fallthru
          _
        %v662 = vld [vmem:[%s636] sm:$0xff]
        %v663 = vld [vmem:[%s636 + $0x8] sm:$0x1]
        %v664 = vld [vmem:[%s640] sm:$0xf]
        %v665 = vld [vmem:[#allocation2] sm:$0xff]
        %v666 = vld [vmem:[#allocation2 + $0x8] sm:$0xff]
        %v667 = vld [vmem:[#allocation2 + $0x10] sm:$0xff]
        %v668 = vld [vmem:[#allocation2 + $0x18] sm:$0xff]
        %v669 = vpack.c.bf16 %v666, %v665
        %v670 = vpack.c.bf16 %v668, %v667
        %v671 = vld [vmem:[%s506] sm:$0xf]
        %v672 = vld [vmem:[%s506 + $0x4] sm:$0xf]
        %v673 = vld [vmem:[%s506 + $0x8] sm:$0xf]
        %v674 = vld [vmem:[%s506 + $0xc] sm:$0xf]
        %v675 = vld [vmem:[%s506 + $0x10] sm:$0xf]
        %v676 = vld [vmem:[%s506 + $0x14] sm:$0xf]
        %v677 = vld [vmem:[%s506 + $0x18] sm:$0xf]
        %v678 = vld [vmem:[%s506 + $0x1c] sm:$0xf]
        %v679 = vld [vmem:[%s506 + $0x20] sm:$0xf]
        %v680 = vld [vmem:[%s506 + $0x24] sm:$0xf]
        %v681 = vld [vmem:[%s506 + $0x28] sm:$0xf]
        %v682 = vld [vmem:[%s506 + $0x2c] sm:$0xf]
        %v683 = vld [vmem:[%s506 + $0x30] sm:$0xf]
        %v684 = vld [vmem:[%s506 + $0x34] sm:$0xf]
        %v685 = vld [vmem:[%s506 + $0x38] sm:$0xf]
        %v686 = vld [vmem:[%s506 + $0x3c] sm:$0xf]
        %v687 = vlaneseq
        %v688 = vshrl.u32 %v687, 7
        %v689 = vsub.s32 0, %v688
        %v690 = vrot.slane %v662, %v689
        %v707 = vunpack.c.l.b16 %v671
        %v708 = vunpack.c.l.b16 %v672
        %v709 = vunpack.c.l.b16 %v673
        %v710 = vunpack.c.l.b16 %v674
        %v711 = vunpack.c.l.b16 %v675
        %v712 = vunpack.c.l.b16 %v676
        %v713 = vunpack.c.l.b16 %v677
        %v714 = vunpack.c.l.b16 %v678
        %v715 = vunpack.c.l.b16 %v679
        %v716 = vunpack.c.l.b16 %v680
        %v717 = vunpack.c.l.b16 %v681
        %v718 = vunpack.c.l.b16 %v682
        %v719 = vunpack.c.l.b16 %v683
        %v720 = vunpack.c.l.b16 %v684
        %v721 = vunpack.c.l.b16 %v685
        %v722 = vunpack.c.l.b16 %v686
        %v723 = vpack.c.b16 %v708, %v707
        %v724 = vpack.c.b16 %v710, %v709
        %v725 = vpack.c.b16 %v712, %v711
        %v726 = vpack.c.b16 %v714, %v713
        %v727 = vpack.c.b16 %v716, %v715
        %v728 = vpack.c.b16 %v718, %v717
        %v729 = vpack.c.b16 %v720, %v719
        %v730 = vpack.c.b16 %v722, %v721
        %739 = vmatprep.subr.bf16.mxu0 0
        %740 = vmatpush1.bf16.msra.mxu0 %v723
        %741 = vmatprep.subr.bf16.mxu0 0
        %742 = vmatpush1.bf16.msra.mxu0 %v724
        %743 = vmatprep.subr.bf16.mxu0 0
        %744 = vmatpush1.bf16.msra.mxu0 %v725
        %745 = vmatprep.subr.bf16.mxu0 0
        %746 = vmatpush1.bf16.msra.mxu0 %v726
        %747 = vmatprep.subr.bf16.mxu0 0
        %748 = vmatpush1.bf16.msra.mxu0 %v727
        %749 = vmatprep.subr.bf16.mxu0 0
        %750 = vmatpush1.bf16.msra.mxu0 %v728
        %751 = vmatprep.subr.bf16.mxu0 0
        %752 = vmatpush1.bf16.msra.mxu0 %v729
        %753 = vmatprep.subr.bf16.mxu0 0
        %754 = vmatpush1.bf16.msra.mxu0 %v730
        %755 = vmatprep.subr.bf16.mxu0 0
        %756 = vmatpush1.bf16.msra.mxu0 0
        %757 = vmatprep.subr.bf16.mxu0 0
        %758 = vmatpush1.bf16.msra.mxu0 0
        %759 = vmatprep.subr.bf16.mxu0 0
        %760 = vmatpush1.bf16.msra.mxu0 0
        %761 = vmatprep.subr.bf16.mxu0 0
        %762 = vmatpush1.bf16.msra.mxu0 0
        %763 = vmatprep.subr.bf16.mxu0 0
        %764 = vmatpush1.bf16.msra.mxu0 0
        %765 = vmatprep.subr.bf16.mxu0 0
        %766 = vmatpush1.bf16.msra.mxu0 0
        %767 = vmatprep.subr.bf16.mxu0 0
        %768 = vmatpush1.bf16.msra.mxu0 0
        %769 = vmatprep.subr.bf16.mxu0 0
        %770 = vmatpush1.bf16.msra.mxu0 0
        %771 = vmatprep.mubr.bf16.mxu0 0
        %772 = vmatmul.mubr.bf16.gmra.mrb[0].mxu0 %v669
        %v773 = vpop.f32.mrb[0].mxu0
        %v774 = vadd.f32 %v690, %v773
        %v775 = vpop.f32.mrb[0].mxu0
        %v776 = vpop.f32.mrb[0].mxu0
        %v777 = vadd.f32 %v690, %v776
        %v778 = vpop.f32.mrb[0].mxu0
        %779 = vmatprep.mubr.bf16.mxu0 0
        %780 = vmatmul.mubr.bf16.gmra.mrb[0].mxu0 %v670
        %v781 = vpop.f32.mrb[0].mxu0
        %v782 = vadd.f32 %v690, %v781
        %v783 = vpop.f32.mrb[0].mxu0
        %v784 = vpop.f32.mrb[0].mxu0
        %v785 = vadd.f32 %v690, %v784
        %v786 = vpop.f32.mrb[0].mxu0
        %787 = vdwg.mxu0
        %v788 = vld [vmem:[%s515] sm:$0xf]
        %v789 = vld [vmem:[%s515 + $0x4] sm:$0xf]
        %v790 = vld [vmem:[%s515 + $0x8] sm:$0xf]
        %v791 = vld [vmem:[%s515 + $0xc] sm:$0xf]
        %v792 = vld [vmem:[%s515 + $0x10] sm:$0xf]
        %v793 = vld [vmem:[%s515 + $0x14] sm:$0xf]
        %v794 = vld [vmem:[%s515 + $0x18] sm:$0xf]
        %v795 = vld [vmem:[%s515 + $0x1c] sm:$0xf]
        %v796 = vld [vmem:[%s515 + $0x20] sm:$0xf]
        %v797 = vld [vmem:[%s515 + $0x24] sm:$0xf]
        %v798 = vld [vmem:[%s515 + $0x28] sm:$0xf]
        %v799 = vld [vmem:[%s515 + $0x2c] sm:$0xf]
        %v800 = vld [vmem:[%s515 + $0x30] sm:$0xf]
        %v801 = vld [vmem:[%s515 + $0x34] sm:$0xf]
        %v802 = vld [vmem:[%s515 + $0x38] sm:$0xf]
        %v803 = vld [vmem:[%s515 + $0x3c] sm:$0xf]
        %v804 = vlaneseq
        %v805 = vshrl.u32 %v804, 7
        %v806 = vsub.s32 1, %v805
        %v807 = vrot.slane %v662, %v806
        %v824 = vunpack.c.l.b16 %v788
        %v825 = vunpack.c.l.b16 %v789
        %v826 = vunpack.c.l.b16 %v790
        %v827 = vunpack.c.l.b16 %v791
        %v828 = vunpack.c.l.b16 %v792
        %v829 = vunpack.c.l.b16 %v793
        %v830 = vunpack.c.l.b16 %v794
        %v831 = vunpack.c.l.b16 %v795
        %v832 = vunpack.c.l.b16 %v796
        %v833 = vunpack.c.l.b16 %v797
        %v834 = vunpack.c.l.b16 %v798
        %v835 = vunpack.c.l.b16 %v799
        %v836 = vunpack.c.l.b16 %v800
        %v837 = vunpack.c.l.b16 %v801
        %v838 = vunpack.c.l.b16 %v802
        %v839 = vunpack.c.l.b16 %v803
        %v840 = vpack.c.b16 %v825, %v824
        %v841 = vpack.c.b16 %v827, %v826
        %v842 = vpack.c.b16 %v829, %v828
        %v843 = vpack.c.b16 %v831, %v830
        %v844 = vpack.c.b16 %v833, %v832
        %v845 = vpack.c.b16 %v835, %v834
        %v846 = vpack.c.b16 %v837, %v836
        %v847 = vpack.c.b16 %v839, %v838
        %856 = vmatprep.subr.bf16.mxu0 0
        %857 = vmatpush1.bf16.msra.mxu0 %v840
        %858 = vmatprep.subr.bf16.mxu0 0
        %859 = vmatpush1.bf16.msra.mxu0 %v841
        %860 = vmatprep.subr.bf16.mxu0 0
        %861 = vmatpush1.bf16.msra.mxu0 %v842
        %862 = vmatprep.subr.bf16.mxu0 0
        %863 = vmatpush1.bf16.msra.mxu0 %v843
        %864 = vmatprep.subr.bf16.mxu0 0
        %865 = vmatpush1.bf16.msra.mxu0 %v844
        %866 = vmatprep.subr.bf16.mxu0 0
        %867 = vmatpush1.bf16.msra.mxu0 %v845
        %868 = vmatprep.subr.bf16.mxu0 0
        %869 = vmatpush1.bf16.msra.mxu0 %v846
        %870 = vmatprep.subr.bf16.mxu0 0
        %871 = vmatpush1.bf16.msra.mxu0 %v847
        %872 = vmatprep.subr.bf16.mxu0 0
        %873 = vmatpush1.bf16.msra.mxu0 0
        %874 = vmatprep.subr.bf16.mxu0 0
        %875 = vmatpush1.bf16.msra.mxu0 0
        %876 = vmatprep.subr.bf16.mxu0 0
        %877 = vmatpush1.bf16.msra.mxu0 0
        %878 = vmatprep.subr.bf16.mxu0 0
        %879 = vmatpush1.bf16.msra.mxu0 0
        %880 = vmatprep.subr.bf16.mxu0 0
        %881 = vmatpush1.bf16.msra.mxu0 0
        %882 = vmatprep.subr.bf16.mxu0 0
        %883 = vmatpush1.bf16.msra.mxu0 0
        %884 = vmatprep.subr.bf16.mxu0 0
        %885 = vmatpush1.bf16.msra.mxu0 0
        %886 = vmatprep.subr.bf16.mxu0 0
        %887 = vmatpush1.bf16.msra.mxu0 0
        %888 = vmatprep.mubr.bf16.mxu0 0
        %889 = vmatmul.mubr.bf16.gmra.mrb[0].mxu0 %v669
        %v890 = vpop.f32.mrb[0].mxu0
        %v891 = vadd.f32 %v807, %v890
        %v892 = vpop.f32.mrb[0].mxu0
        %v893 = vpop.f32.mrb[0].mxu0
        %v894 = vadd.f32 %v807, %v893
        %v895 = vpop.f32.mrb[0].mxu0
        %896 = vmatprep.mubr.bf16.mxu0 0
        %897 = vmatmul.mubr.bf16.gmra.mrb[0].mxu0 %v670
        %v898 = vpop.f32.mrb[0].mxu0
        %v899 = vadd.f32 %v807, %v898
        %v900 = vpop.f32.mrb[0].mxu0
        %v901 = vpop.f32.mrb[0].mxu0
        %v902 = vadd.f32 %v807, %v901
        %v903 = vpop.f32.mrb[0].mxu0
        %904 = vdwg.mxu0
        %v905 = vld [vmem:[%s524] sm:$0xf]
        %v906 = vld [vmem:[%s524 + $0x4] sm:$0xf]
        %v907 = vld [vmem:[%s524 + $0x8] sm:$0xf]
        %v908 = vld [vmem:[%s524 + $0xc] sm:$0xf]
        %v909 = vld [vmem:[%s524 + $0x10] sm:$0xf]
        %v910 = vld [vmem:[%s524 + $0x14] sm:$0xf]
        %v911 = vld [vmem:[%s524 + $0x18] sm:$0xf]
        %v912 = vld [vmem:[%s524 + $0x1c] sm:$0xf]
        %v913 = vld [vmem:[%s524 + $0x20] sm:$0xf]
        %v914 = vld [vmem:[%s524 + $0x24] sm:$0xf]
        %v915 = vld [vmem:[%s524 + $0x28] sm:$0xf]
        %v916 = vld [vmem:[%s524 + $0x2c] sm:$0xf]
        %v917 = vld [vmem:[%s524 + $0x30] sm:$0xf]
        %v918 = vld [vmem:[%s524 + $0x34] sm:$0xf]
        %v919 = vld [vmem:[%s524 + $0x38] sm:$0xf]
        %v920 = vld [vmem:[%s524 + $0x3c] sm:$0xf]
        %v921 = vlaneseq
        %v922 = vshrl.u32 %v921, 7
        %v923 = vsub.s32 2, %v922
        %v924 = vrot.slane %v662, %v923
        %v941 = vunpack.c.l.b16 %v905
        %v942 = vunpack.c.l.b16 %v906
        %v943 = vunpack.c.l.b16 %v907
        %v944 = vunpack.c.l.b16 %v908
        %v945 = vunpack.c.l.b16 %v909
        %v946 = vunpack.c.l.b16 %v910
        %v947 = vunpack.c.l.b16 %v911
        %v948 = vunpack.c.l.b16 %v912
        %v949 = vunpack.c.l.b16 %v913
        %v950 = vunpack.c.l.b16 %v914
        %v951 = vunpack.c.l.b16 %v915
        %v952 = vunpack.c.l.b16 %v916
        %v953 = vunpack.c.l.b16 %v917
        %v954 = vunpack.c.l.b16 %v918
        %v955 = vunpack.c.l.b16 %v919
        %v956 = vunpack.c.l.b16 %v920
        %v957 = vpack.c.b16 %v942, %v941
        %v958 = vpack.c.b16 %v944, %v943
        %v959 = vpack.c.b16 %v946, %v945
        %v960 = vpack.c.b16 %v948, %v947
        %v961 = vpack.c.b16 %v950, %v949
        %v962 = vpack.c.b16 %v952, %v951
        %v963 = vpack.c.b16 %v954, %v953
        %v964 = vpack.c.b16 %v956, %v955
        %973 = vmatprep.subr.bf16.mxu0 0
        %974 = vmatpush1.bf16.msra.mxu0 %v957
        %975 = vmatprep.subr.bf16.mxu0 0
        %976 = vmatpush1.bf16.msra.mxu0 %v958
        %977 = vmatprep.subr.bf16.mxu0 0
        %978 = vmatpush1.bf16.msra.mxu0 %v959
        %979 = vmatprep.subr.bf16.mxu0 0
        %980 = vmatpush1.bf16.msra.mxu0 %v960
        %981 = vmatprep.subr.bf16.mxu0 0
        %982 = vmatpush1.bf16.msra.mxu0 %v961
        %983 = vmatprep.subr.bf16.mxu0 0
        %984 = vmatpush1.bf16.msra.mxu0 %v962
        %985 = vmatprep.subr.bf16.mxu0 0
        %986 = vmatpush1.bf16.msra.mxu0 %v963
        %987 = vmatprep.subr.bf16.mxu0 0
        %988 = vmatpush1.bf16.msra.mxu0 %v964
        %989 = vmatprep.subr.bf16.mxu0 0
        %990 = vmatpush1.bf16.msra.mxu0 0
        %991 = vmatprep.subr.bf16.mxu0 0
        %992 = vmatpush1.bf16.msra.mxu0 0
        %993 = vmatprep.subr.bf16.mxu0 0
        %994 = vmatpush1.bf16.msra.mxu0 0
        %995 = vmatprep.subr.bf16.mxu0 0
        %996 = vmatpush1.bf16.msra.mxu0 0
        %997 = vmatprep.subr.bf16.mxu0 0
        %998 = vmatpush1.bf16.msra.mxu0 0
        %999 = vmatprep.subr.bf16.mxu0 0
        %1000 = vmatpush1.bf16.msra.mxu0 0
        %1001 = vmatprep.subr.bf16.mxu0 0
        %1002 = vmatpush1.bf16.msra.mxu0 0
        %1003 = vmatprep.subr.bf16.mxu0 0
        %1004 = vmatpush1.bf16.msra.mxu0 0
        %1005 = vmatprep.mubr.bf16.mxu0 0
        %1006 = vmatmul.mubr.bf16.gmra.mrb[0].mxu0 %v669
        %v1007 = vpop.f32.mrb[0].mxu0
        %v1008 = vadd.f32 %v924, %v1007
        %v1009 = vpop.f32.mrb[0].mxu0
        %v1010 = vpop.f32.mrb[0].mxu0
        %v1011 = vadd.f32 %v924, %v1010
        %v1012 = vpop.f32.mrb[0].mxu0
        %1013 = vmatprep.mubr.bf16.mxu0 0
        %1014 = vmatmul.mubr.bf16.gmra.mrb[0].mxu0 %v670
        %v1015 = vpop.f32.mrb[0].mxu0
        %v1016 = vadd.f32 %v924, %v1015
        %v1017 = vpop.f32.mrb[0].mxu0
        %v1018 = vpop.f32.mrb[0].mxu0
        %v1019 = vadd.f32 %v924, %v1018
        %v1020 = vpop.f32.mrb[0].mxu0
        %1021 = vdwg.mxu0
        %v1022 = vpack.c.bf16 %v777, %v774
        %v1023 = vpack.c.bf16 %v785, %v782
        %1026 = vrot.lane.b32.xlu0 %v1022, 112
        %v1027 = vpop.permute.xlu0 %1026
        %1028 = vrot.lane.b32.xlu0 %v1023, 112
        %v1029 = vpop.permute.xlu0 %1028
        %1030 = vrot.lane.b32.xlu0 %v1022, 96
        %v1031 = vpop.permute.xlu0 %1030
        %1032 = vrot.lane.b32.xlu0 %v1023, 96
        %v1033 = vpop.permute.xlu0 %1032
        %1034 = vrot.lane.b32.xlu0 %v1022, 80
        %v1035 = vpop.permute.xlu0 %1034
        %1036 = vrot.lane.b32.xlu0 %v1023, 80
        %v1037 = vpop.permute.xlu0 %1036
        %1038 = vrot.lane.b32.xlu0 %v1022, 64
        %v1039 = vpop.permute.xlu0 %1038
        %1040 = vrot.lane.b32.xlu0 %v1023, 64
        %v1041 = vpop.permute.xlu0 %1040
        %1042 = vrot.lane.b32.xlu0 %v1022, 48
        %v1043 = vpop.permute.xlu0 %1042
        %1044 = vrot.lane.b32.xlu0 %v1023, 48
        %v1045 = vpop.permute.xlu0 %1044
        %1046 = vrot.lane.b32.xlu0 %v1022, 32
        %v1047 = vpop.permute.xlu0 %1046
        %1048 = vrot.lane.b32.xlu0 %v1023, 32
        %v1049 = vpop.permute.xlu0 %1048
        %1050 = vrot.lane.b32.xlu0 %v1022, 16
        %v1051 = vpop.permute.xlu0 %1050
        %1052 = vrot.lane.b32.xlu0 %v1023, 16
        %v1053 = vpop.permute.xlu0 %1052
        %v1056 = vpack.i.b16 %v1027, %v1022
        %v1058 = vshrl.u32 %v1022, 16
        %v1059 = vshrl.u32 %v1027, 16
        %v1060 = vpack.i.b16 %v1059, %v1058
        %v1064 = vpack.i.b16 %v1035, %v1031
        %v1066 = vshrl.u32 %v1031, 16
        %v1067 = vshrl.u32 %v1035, 16
        %v1068 = vpack.i.b16 %v1067, %v1066
        %v1072 = vpack.i.b16 %v1043, %v1039
        %v1074 = vshrl.u32 %v1039, 16
        %v1075 = vshrl.u32 %v1043, 16
        %v1076 = vpack.i.b16 %v1075, %v1074
        %v1080 = vpack.i.b16 %v1051, %v1047
        %v1082 = vshrl.u32 %v1047, 16
        %v1083 = vshrl.u32 %v1051, 16
        %v1084 = vpack.i.b16 %v1083, %v1082
        %v1088 = vpack.i.b16 %v1029, %v1023
        %v1090 = vshrl.u32 %v1023, 16
        %v1091 = vshrl.u32 %v1029, 16
        %v1092 = vpack.i.b16 %v1091, %v1090
        %v1096 = vpack.i.b16 %v1037, %v1033
        %v1098 = vshrl.u32 %v1033, 16
        %v1099 = vshrl.u32 %v1037, 16
        %v1100 = vpack.i.b16 %v1099, %v1098
        %v1104 = vpack.i.b16 %v1045, %v1041
        %v1106 = vshrl.u32 %v1041, 16
        %v1107 = vshrl.u32 %v1045, 16
        %v1108 = vpack.i.b16 %v1107, %v1106
        %v1112 = vpack.i.b16 %v1053, %v1049
        %v1114 = vshrl.u32 %v1049, 16
        %v1115 = vshrl.u32 %v1053, 16
        %v1116 = vpack.i.b16 %v1115, %v1114
        %v1118 = vcombine.low %v1056, %v1072
        %v1119 = vcombine.high %v1056, %v1072
        %v1121 = vunpack.c.l.s4 1983009808
        %v1122 = vunpack.c.0.s8 %v1121
        %v1123 = vlaneseq
        %v1124 = vshrl.u32 %v1123, 7
        %v1125 = vsub.s32 %v1122, %v1124
        %v1126 = vrot.slane %v1118, %v1125
        %v1128 = vunpack.c.l.s4 1983009808
        %v1129 = vunpack.c.0.s8 %v1128
        %v1130 = vlaneseq
        %v1131 = vshrl.u32 %v1130, 7
        %v1132 = vsub.s32 %v1129, %v1131
        %v1133 = vrot.slane %v1119, %v1132
        %v1134 = vcombine.low %v1064, %v1080
        %v1135 = vcombine.high %v1064, %v1080
        %v1137 = vunpack.c.l.s4 1983009808
        %v1138 = vunpack.c.0.s8 %v1137
        %v1139 = vlaneseq
        %v1140 = vshrl.u32 %v1139, 7
        %v1141 = vsub.s32 %v1138, %v1140
        %v1142 = vrot.slane %v1134, %v1141
        %v1144 = vunpack.c.l.s4 1983009808
        %v1145 = vunpack.c.0.s8 %v1144
        %v1146 = vlaneseq
        %v1147 = vshrl.u32 %v1146, 7
        %v1148 = vsub.s32 %v1145, %v1147
        %v1149 = vrot.slane %v1135, %v1148
        %v1150 = vcombine.low %v1126, %v1142
        %v1151 = vcombine.high %v1126, %v1142
        %v1153 = vunpack.c.l.s4 1934713408
        %v1154 = vunpack.c.0.s8 %v1153
        %v1155 = vlaneseq
        %v1156 = vshrl.u32 %v1155, 7
        %v1157 = vsub.s32 %v1154, %v1156
        %v1158 = vrot.slane %v1150, %v1157
        %v1160 = vunpack.c.l.s4 1934713408
        %v1161 = vunpack.c.0.s8 %v1160
        %v1162 = vlaneseq
        %v1163 = vshrl.u32 %v1162, 7
        %v1164 = vsub.s32 %v1161, %v1163
        %v1165 = vrot.slane %v1151, %v1164
        %v1166 = vcombine.low %v1133, %v1149
        %v1167 = vcombine.high %v1133, %v1149
        %v1169 = vunpack.c.l.s4 1934713408
        %v1170 = vunpack.c.0.s8 %v1169
        %v1171 = vlaneseq
        %v1172 = vshrl.u32 %v1171, 7
        %v1173 = vsub.s32 %v1170, %v1172
        %v1174 = vrot.slane %v1166, %v1173
        %v1176 = vunpack.c.l.s4 1934713408
        %v1177 = vunpack.c.0.s8 %v1176
        %v1178 = vlaneseq
        %v1179 = vshrl.u32 %v1178, 7
        %v1180 = vsub.s32 %v1177, %v1179
        %v1181 = vrot.slane %v1167, %v1180
        %v1182 = vcombine.high %v1158, 0
        %v1183 = vcombine.high %v1165, 0
        %v1184 = vcombine.high %v1174, 0
        %v1185 = vcombine.high %v1181, 0
        %v1186 = vcombine.low %v1060, %v1076
        %v1187 = vcombine.high %v1060, %v1076
        %v1189 = vunpack.c.l.s4 1983009808
        %v1190 = vunpack.c.0.s8 %v1189
        %v1191 = vlaneseq
        %v1192 = vshrl.u32 %v1191, 7
        %v1193 = vsub.s32 %v1190, %v1192
        %v1194 = vrot.slane %v1186, %v1193
        %v1196 = vunpack.c.l.s4 1983009808
        %v1197 = vunpack.c.0.s8 %v1196
        %v1198 = vlaneseq
        %v1199 = vshrl.u32 %v1198, 7
        %v1200 = vsub.s32 %v1197, %v1199
        %v1201 = vrot.slane %v1187, %v1200
        %v1202 = vcombine.low %v1068, %v1084
        %v1203 = vcombine.high %v1068, %v1084
        %v1205 = vunpack.c.l.s4 1983009808
        %v1206 = vunpack.c.0.s8 %v1205
        %v1207 = vlaneseq
        %v1208 = vshrl.u32 %v1207, 7
        %v1209 = vsub.s32 %v1206, %v1208
        %v1210 = vrot.slane %v1202, %v1209
        %v1212 = vunpack.c.l.s4 1983009808
        %v1213 = vunpack.c.0.s8 %v1212
        %v1214 = vlaneseq
        %v1215 = vshrl.u32 %v1214, 7
        %v1216 = vsub.s32 %v1213, %v1215
        %v1217 = vrot.slane %v1203, %v1216
        %v1218 = vcombine.low %v1194, %v1210
        %v1219 = vcombine.high %v1194, %v1210
        %v1221 = vunpack.c.l.s4 1934713408
        %v1222 = vunpack.c.0.s8 %v1221
        %v1223 = vlaneseq
        %v1224 = vshrl.u32 %v1223, 7
        %v1225 = vsub.s32 %v1222, %v1224
        %v1226 = vrot.slane %v1218, %v1225
        %v1228 = vunpack.c.l.s4 1934713408
        %v1229 = vunpack.c.0.s8 %v1228
        %v1230 = vlaneseq
        %v1231 = vshrl.u32 %v1230, 7
        %v1232 = vsub.s32 %v1229, %v1231
        %v1233 = vrot.slane %v1219, %v1232
        %v1234 = vcombine.low %v1201, %v1217
        %v1235 = vcombine.high %v1201, %v1217
        %v1237 = vunpack.c.l.s4 1934713408
        %v1238 = vunpack.c.0.s8 %v1237
        %v1239 = vlaneseq
        %v1240 = vshrl.u32 %v1239, 7
        %v1241 = vsub.s32 %v1238, %v1240
        %v1242 = vrot.slane %v1234, %v1241
        %v1244 = vunpack.c.l.s4 1934713408
        %v1245 = vunpack.c.0.s8 %v1244
        %v1246 = vlaneseq
        %v1247 = vshrl.u32 %v1246, 7
        %v1248 = vsub.s32 %v1245, %v1247
        %v1249 = vrot.slane %v1235, %v1248
        %v1250 = vcombine.high %v1226, 0
        %v1251 = vcombine.high %v1233, 0
        %v1252 = vcombine.high %v1242, 0
        %v1253 = vcombine.high %v1249, 0
        %v1254 = vcombine.low %v1088, %v1104
        %v1255 = vcombine.high %v1088, %v1104
        %v1257 = vunpack.c.l.s4 1983009808
        %v1258 = vunpack.c.0.s8 %v1257
        %v1259 = vlaneseq
        %v1260 = vshrl.u32 %v1259, 7
        %v1261 = vsub.s32 %v1258, %v1260
        %v1262 = vrot.slane %v1254, %v1261
        %v1264 = vunpack.c.l.s4 1983009808
        %v1265 = vunpack.c.0.s8 %v1264
        %v1266 = vlaneseq
        %v1267 = vshrl.u32 %v1266, 7
        %v1268 = vsub.s32 %v1265, %v1267
        %v1269 = vrot.slane %v1255, %v1268
        %v1270 = vcombine.low %v1096, %v1112
        %v1271 = vcombine.high %v1096, %v1112
        %v1273 = vunpack.c.l.s4 1983009808
        %v1274 = vunpack.c.0.s8 %v1273
        %v1275 = vlaneseq
        %v1276 = vshrl.u32 %v1275, 7
        %v1277 = vsub.s32 %v1274, %v1276
        %v1278 = vrot.slane %v1270, %v1277
        %v1280 = vunpack.c.l.s4 1983009808
        %v1281 = vunpack.c.0.s8 %v1280
        %v1282 = vlaneseq
        %v1283 = vshrl.u32 %v1282, 7
        %v1284 = vsub.s32 %v1281, %v1283
        %v1285 = vrot.slane %v1271, %v1284
        %v1286 = vcombine.low %v1262, %v1278
        %v1287 = vcombine.high %v1262, %v1278
        %v1289 = vunpack.c.l.s4 1934713408
        %v1290 = vunpack.c.0.s8 %v1289
        %v1291 = vlaneseq
        %v1292 = vshrl.u32 %v1291, 7
        %v1293 = vsub.s32 %v1290, %v1292
        %v1294 = vrot.slane %v1286, %v1293
        %v1296 = vunpack.c.l.s4 1934713408
        %v1297 = vunpack.c.0.s8 %v1296
        %v1298 = vlaneseq
        %v1299 = vshrl.u32 %v1298, 7
        %v1300 = vsub.s32 %v1297, %v1299
        %v1301 = vrot.slane %v1287, %v1300
        %v1302 = vcombine.low %v1269, %v1285
        %v1303 = vcombine.high %v1269, %v1285
        %v1305 = vunpack.c.l.s4 1934713408
        %v1306 = vunpack.c.0.s8 %v1305
        %v1307 = vlaneseq
        %v1308 = vshrl.u32 %v1307, 7
        %v1309 = vsub.s32 %v1306, %v1308
        %v1310 = vrot.slane %v1302, %v1309
        %v1312 = vunpack.c.l.s4 1934713408
        %v1313 = vunpack.c.0.s8 %v1312
        %v1314 = vlaneseq
        %v1315 = vshrl.u32 %v1314, 7
        %v1316 = vsub.s32 %v1313, %v1315
        %v1317 = vrot.slane %v1303, %v1316
        %v1318 = vcombine.high %v1294, 0
        %v1319 = vcombine.high %v1301, 0
        %v1320 = vcombine.high %v1310, 0
        %v1321 = vcombine.high %v1317, 0
        %v1322 = vcombine.low %v1092, %v1108
        %v1323 = vcombine.high %v1092, %v1108
        %v1325 = vunpack.c.l.s4 1983009808
        %v1326 = vunpack.c.0.s8 %v1325
        %v1327 = vlaneseq
        %v1328 = vshrl.u32 %v1327, 7
        %v1329 = vsub.s32 %v1326, %v1328
        %v1330 = vrot.slane %v1322, %v1329
        %v1332 = vunpack.c.l.s4 1983009808
        %v1333 = vunpack.c.0.s8 %v1332
        %v1334 = vlaneseq
        %v1335 = vshrl.u32 %v1334, 7
        %v1336 = vsub.s32 %v1333, %v1335
        %v1337 = vrot.slane %v1323, %v1336
        %v1338 = vcombine.low %v1100, %v1116
        %v1339 = vcombine.high %v1100, %v1116
        %v1341 = vunpack.c.l.s4 1983009808
        %v1342 = vunpack.c.0.s8 %v1341
        %v1343 = vlaneseq
        %v1344 = vshrl.u32 %v1343, 7
        %v1345 = vsub.s32 %v1342, %v1344
        %v1346 = vrot.slane %v1338, %v1345
        %v1348 = vunpack.c.l.s4 1983009808
        %v1349 = vunpack.c.0.s8 %v1348
        %v1350 = vlaneseq
        %v1351 = vshrl.u32 %v1350, 7
        %v1352 = vsub.s32 %v1349, %v1351
        %v1353 = vrot.slane %v1339, %v1352
        %v1354 = vcombine.low %v1330, %v1346
        %v1355 = vcombine.high %v1330, %v1346
        %v1357 = vunpack.c.l.s4 1934713408
        %v1358 = vunpack.c.0.s8 %v1357
        %v1359 = vlaneseq
        %v1360 = vshrl.u32 %v1359, 7
        %v1361 = vsub.s32 %v1358, %v1360
        %v1362 = vrot.slane %v1354, %v1361
        %v1364 = vunpack.c.l.s4 1934713408
        %v1365 = vunpack.c.0.s8 %v1364
        %v1366 = vlaneseq
        %v1367 = vshrl.u32 %v1366, 7
        %v1368 = vsub.s32 %v1365, %v1367
        %v1369 = vrot.slane %v1355, %v1368
        %v1370 = vcombine.low %v1337, %v1353
        %v1371 = vcombine.high %v1337, %v1353
        %v1373 = vunpack.c.l.s4 1934713408
        %v1374 = vunpack.c.0.s8 %v1373
        %v1375 = vlaneseq
        %v1376 = vshrl.u32 %v1375, 7
        %v1377 = vsub.s32 %v1374, %v1376
        %v1378 = vrot.slane %v1370, %v1377
        %v1380 = vunpack.c.l.s4 1934713408
        %v1381 = vunpack.c.0.s8 %v1380
        %v1382 = vlaneseq
        %v1383 = vshrl.u32 %v1382, 7
        %v1384 = vsub.s32 %v1381, %v1383
        %v1385 = vrot.slane %v1371, %v1384
        %v1386 = vcombine.high %v1362, 0
        %v1387 = vcombine.high %v1369, 0
        %v1388 = vcombine.high %v1378, 0
        %v1389 = vcombine.high %v1385, 0
        %v1390 = vcombine.low %v1158, %v1165
        %v1392 = vunpack.c.l.s4 1983009808
        %v1393 = vunpack.c.0.s8 %v1392
        %v1394 = vlaneseq
        %v1395 = vshrl.u32 %v1394, 7
        %v1396 = vsub.s32 %v1393, %v1395
        %v1397 = vrot.slane %v1390, %v1396
        %v1398 = vcombine.low %v1182, %v1183
        %v1400 = vunpack.c.l.s4 1983009808
        %v1401 = vunpack.c.0.s8 %v1400
        %v1402 = vlaneseq
        %v1403 = vshrl.u32 %v1402, 7
        %v1404 = vsub.s32 %v1401, %v1403
        %v1405 = vrot.slane %v1398, %v1404
        %v1406 = vcombine.low %v1174, %v1181
        %v1408 = vunpack.c.l.s4 1983009808
        %v1409 = vunpack.c.0.s8 %v1408
        %v1410 = vlaneseq
        %v1411 = vshrl.u32 %v1410, 7
        %v1412 = vsub.s32 %v1409, %v1411
        %v1413 = vrot.slane %v1406, %v1412
        %v1414 = vcombine.low %v1184, %v1185
        %v1416 = vunpack.c.l.s4 1983009808
        %v1417 = vunpack.c.0.s8 %v1416
        %v1418 = vlaneseq
        %v1419 = vshrl.u32 %v1418, 7
        %v1420 = vsub.s32 %v1417, %v1419
        %v1421 = vrot.slane %v1414, %v1420
        %v1422 = vcombine.low %v1397, %v1405
        %v1423 = vcombine.high %v1397, %v1405
        %v1425 = vunpack.c.l.s4 1934713408
        %v1426 = vunpack.c.0.s8 %v1425
        %v1427 = vlaneseq
        %v1428 = vshrl.u32 %v1427, 7
        %v1429 = vsub.s32 %v1426, %v1428
        %v1430 = vrot.slane %v1422, %v1429
        %v1432 = vunpack.c.l.s4 1934713408
        %v1433 = vunpack.c.0.s8 %v1432
        %v1434 = vlaneseq
        %v1435 = vshrl.u32 %v1434, 7
        %v1436 = vsub.s32 %v1433, %v1435
        %v1437 = vrot.slane %v1423, %v1436
        %v1438 = vcombine.low %v1413, %v1421
        %v1439 = vcombine.high %v1413, %v1421
        %v1441 = vunpack.c.l.s4 1934713408
        %v1442 = vunpack.c.0.s8 %v1441
        %v1443 = vlaneseq
        %v1444 = vshrl.u32 %v1443, 7
        %v1445 = vsub.s32 %v1442, %v1444
        %v1446 = vrot.slane %v1438, %v1445
        %v1448 = vunpack.c.l.s4 1934713408
        %v1449 = vunpack.c.0.s8 %v1448
        %v1450 = vlaneseq
        %v1451 = vshrl.u32 %v1450, 7
        %v1452 = vsub.s32 %v1449, %v1451
        %v1453 = vrot.slane %v1439, %v1452
        %v1454 = vcombine.low %v1430, %v1446
        %v1455 = vcombine.high %v1430, %v1446
        %v1456 = vcombine.low %v1437, %v1453
        %v1457 = vcombine.high %v1437, %v1453
        %v1458 = vcombine.low %v1226, %v1233
        %v1460 = vunpack.c.l.s4 1983009808
        %v1461 = vunpack.c.0.s8 %v1460
        %v1462 = vlaneseq
        %v1463 = vshrl.u32 %v1462, 7
        %v1464 = vsub.s32 %v1461, %v1463
        %v1465 = vrot.slane %v1458, %v1464
        %v1466 = vcombine.low %v1250, %v1251
        %v1468 = vunpack.c.l.s4 1983009808
        %v1469 = vunpack.c.0.s8 %v1468
        %v1470 = vlaneseq
        %v1471 = vshrl.u32 %v1470, 7
        %v1472 = vsub.s32 %v1469, %v1471
        %v1473 = vrot.slane %v1466, %v1472
        %v1474 = vcombine.low %v1242, %v1249
        %v1476 = vunpack.c.l.s4 1983009808
        %v1477 = vunpack.c.0.s8 %v1476
        %v1478 = vlaneseq
        %v1479 = vshrl.u32 %v1478, 7
        %v1480 = vsub.s32 %v1477, %v1479
        %v1481 = vrot.slane %v1474, %v1480
        %v1482 = vcombine.low %v1252, %v1253
        %v1484 = vunpack.c.l.s4 1983009808
        %v1485 = vunpack.c.0.s8 %v1484
        %v1486 = vlaneseq
        %v1487 = vshrl.u32 %v1486, 7
        %v1488 = vsub.s32 %v1485, %v1487
        %v1489 = vrot.slane %v1482, %v1488
        %v1490 = vcombine.low %v1465, %v1473
        %v1491 = vcombine.high %v1465, %v1473
        %v1493 = vunpack.c.l.s4 1934713408
        %v1494 = vunpack.c.0.s8 %v1493
        %v1495 = vlaneseq
        %v1496 = vshrl.u32 %v1495, 7
        %v1497 = vsub.s32 %v1494, %v1496
        %v1498 = vrot.slane %v1490, %v1497
        %v1500 = vunpack.c.l.s4 1934713408
        %v1501 = vunpack.c.0.s8 %v1500
        %v1502 = vlaneseq
        %v1503 = vshrl.u32 %v1502, 7
        %v1504 = vsub.s32 %v1501, %v1503
        %v1505 = vrot.slane %v1491, %v1504
        %v1506 = vcombine.low %v1481, %v1489
        %v1507 = vcombine.high %v1481, %v1489
        %v1509 = vunpack.c.l.s4 1934713408
        %v1510 = vunpack.c.0.s8 %v1509
        %v1511 = vlaneseq
        %v1512 = vshrl.u32 %v1511, 7
        %v1513 = vsub.s32 %v1510, %v1512
        %v1514 = vrot.slane %v1506, %v1513
        %v1516 = vunpack.c.l.s4 1934713408
        %v1517 = vunpack.c.0.s8 %v1516
        %v1518 = vlaneseq
        %v1519 = vshrl.u32 %v1518, 7
        %v1520 = vsub.s32 %v1517, %v1519
        %v1521 = vrot.slane %v1507, %v1520
        %v1522 = vcombine.low %v1498, %v1514
        %v1523 = vcombine.high %v1498, %v1514
        %v1524 = vcombine.low %v1505, %v1521
        %v1525 = vcombine.high %v1505, %v1521
        %v1526 = vcombine.low %v1294, %v1301
        %v1528 = vunpack.c.l.s4 1983009808
        %v1529 = vunpack.c.0.s8 %v1528
        %v1530 = vlaneseq
        %v1531 = vshrl.u32 %v1530, 7
        %v1532 = vsub.s32 %v1529, %v1531
        %v1533 = vrot.slane %v1526, %v1532
        %v1534 = vcombine.low %v1318, %v1319
        %v1536 = vunpack.c.l.s4 1983009808
        %v1537 = vunpack.c.0.s8 %v1536
        %v1538 = vlaneseq
        %v1539 = vshrl.u32 %v1538, 7
        %v1540 = vsub.s32 %v1537, %v1539
        %v1541 = vrot.slane %v1534, %v1540
        %v1542 = vcombine.low %v1310, %v1317
        %v1544 = vunpack.c.l.s4 1983009808
        %v1545 = vunpack.c.0.s8 %v1544
        %v1546 = vlaneseq
        %v1547 = vshrl.u32 %v1546, 7
        %v1548 = vsub.s32 %v1545, %v1547
        %v1549 = vrot.slane %v1542, %v1548
        %v1550 = vcombine.low %v1320, %v1321
        %v1552 = vunpack.c.l.s4 1983009808
        %v1553 = vunpack.c.0.s8 %v1552
        %v1554 = vlaneseq
        %v1555 = vshrl.u32 %v1554, 7
        %v1556 = vsub.s32 %v1553, %v1555
        %v1557 = vrot.slane %v1550, %v1556
        %v1558 = vcombine.low %v1533, %v1541
        %v1559 = vcombine.high %v1533, %v1541
        %v1561 = vunpack.c.l.s4 1934713408
        %v1562 = vunpack.c.0.s8 %v1561
        %v1563 = vlaneseq
        %v1564 = vshrl.u32 %v1563, 7
        %v1565 = vsub.s32 %v1562, %v1564
        %v1566 = vrot.slane %v1558, %v1565
        %v1568 = vunpack.c.l.s4 1934713408
        %v1569 = vunpack.c.0.s8 %v1568
        %v1570 = vlaneseq
        %v1571 = vshrl.u32 %v1570, 7
        %v1572 = vsub.s32 %v1569, %v1571
        %v1573 = vrot.slane %v1559, %v1572
        %v1574 = vcombine.low %v1549, %v1557
        %v1575 = vcombine.high %v1549, %v1557
        %v1577 = vunpack.c.l.s4 1934713408
        %v1578 = vunpack.c.0.s8 %v1577
        %v1579 = vlaneseq
        %v1580 = vshrl.u32 %v1579, 7
        %v1581 = vsub.s32 %v1578, %v1580
        %v1582 = vrot.slane %v1574, %v1581
        %v1584 = vunpack.c.l.s4 1934713408
        %v1585 = vunpack.c.0.s8 %v1584
        %v1586 = vlaneseq
        %v1587 = vshrl.u32 %v1586, 7
        %v1588 = vsub.s32 %v1585, %v1587
        %v1589 = vrot.slane %v1575, %v1588
        %v1590 = vcombine.low %v1566, %v1582
        %v1591 = vcombine.high %v1566, %v1582
        %v1592 = vcombine.low %v1573, %v1589
        %v1593 = vcombine.high %v1573, %v1589
        %v1594 = vcombine.low %v1362, %v1369
        %v1596 = vunpack.c.l.s4 1983009808
        %v1597 = vunpack.c.0.s8 %v1596
        %v1598 = vlaneseq
        %v1599 = vshrl.u32 %v1598, 7
        %v1600 = vsub.s32 %v1597, %v1599
        %v1601 = vrot.slane %v1594, %v1600
        %v1602 = vcombine.low %v1386, %v1387
        %v1604 = vunpack.c.l.s4 1983009808
        %v1605 = vunpack.c.0.s8 %v1604
        %v1606 = vlaneseq
        %v1607 = vshrl.u32 %v1606, 7
        %v1608 = vsub.s32 %v1605, %v1607
        %v1609 = vrot.slane %v1602, %v1608
        %v1610 = vcombine.low %v1378, %v1385
        %v1612 = vunpack.c.l.s4 1983009808
        %v1613 = vunpack.c.0.s8 %v1612
        %v1614 = vlaneseq
        %v1615 = vshrl.u32 %v1614, 7
        %v1616 = vsub.s32 %v1613, %v1615
        %v1617 = vrot.slane %v1610, %v1616
        %v1618 = vcombine.low %v1388, %v1389
        %v1620 = vunpack.c.l.s4 1983009808
        %v1621 = vunpack.c.0.s8 %v1620
        %v1622 = vlaneseq
        %v1623 = vshrl.u32 %v1622, 7
        %v1624 = vsub.s32 %v1621, %v1623
        %v1625 = vrot.slane %v1618, %v1624
        %v1626 = vcombine.low %v1601, %v1609
        %v1627 = vcombine.high %v1601, %v1609
        %v1629 = vunpack.c.l.s4 1934713408
        %v1630 = vunpack.c.0.s8 %v1629
        %v1631 = vlaneseq
        %v1632 = vshrl.u32 %v1631, 7
        %v1633 = vsub.s32 %v1630, %v1632
        %v1634 = vrot.slane %v1626, %v1633
        %v1636 = vunpack.c.l.s4 1934713408
        %v1637 = vunpack.c.0.s8 %v1636
        %v1638 = vlaneseq
        %v1639 = vshrl.u32 %v1638, 7
        %v1640 = vsub.s32 %v1637, %v1639
        %v1641 = vrot.slane %v1627, %v1640
        %v1642 = vcombine.low %v1617, %v1625
        %v1643 = vcombine.high %v1617, %v1625
        %v1645 = vunpack.c.l.s4 1934713408
        %v1646 = vunpack.c.0.s8 %v1645
        %v1647 = vlaneseq
        %v1648 = vshrl.u32 %v1647, 7
        %v1649 = vsub.s32 %v1646, %v1648
        %v1650 = vrot.slane %v1642, %v1649
        %v1652 = vunpack.c.l.s4 1934713408
        %v1653 = vunpack.c.0.s8 %v1652
        %v1654 = vlaneseq
        %v1655 = vshrl.u32 %v1654, 7
        %v1656 = vsub.s32 %v1653, %v1655
        %v1657 = vrot.slane %v1643, %v1656
        %v1658 = vcombine.low %v1634, %v1650
        %v1659 = vcombine.high %v1634, %v1650
        %v1660 = vcombine.low %v1641, %v1657
        %v1661 = vcombine.high %v1641, %v1657
        %v1664 = vpack.i.b16 %v1522, %v1454
        %v1665 = vshrl.u32 %v1454, 16
        %v1666 = vshrl.u32 %v1522, 16
        %v1667 = vpack.i.b16 %v1666, %v1665
        %v1670 = vpack.i.b16 %v1523, %v1455
        %v1671 = vshrl.u32 %v1455, 16
        %v1672 = vshrl.u32 %v1523, 16
        %v1673 = vpack.i.b16 %v1672, %v1671
        %v1676 = vpack.i.b16 %v1524, %v1456
        %v1677 = vshrl.u32 %v1456, 16
        %v1678 = vshrl.u32 %v1524, 16
        %v1679 = vpack.i.b16 %v1678, %v1677
        %v1682 = vpack.i.b16 %v1525, %v1457
        %v1683 = vshrl.u32 %v1457, 16
        %v1684 = vshrl.u32 %v1525, 16
        %v1685 = vpack.i.b16 %v1684, %v1683
        %v1688 = vpack.i.b16 %v1658, %v1590
        %v1689 = vshrl.u32 %v1590, 16
        %v1690 = vshrl.u32 %v1658, 16
        %v1691 = vpack.i.b16 %v1690, %v1689
        %v1694 = vpack.i.b16 %v1659, %v1591
        %v1695 = vshrl.u32 %v1591, 16
        %v1696 = vshrl.u32 %v1659, 16
        %v1697 = vpack.i.b16 %v1696, %v1695
        %v1700 = vpack.i.b16 %v1660, %v1592
        %v1701 = vshrl.u32 %v1592, 16
        %v1702 = vshrl.u32 %v1660, 16
        %v1703 = vpack.i.b16 %v1702, %v1701
        %v1706 = vpack.i.b16 %v1661, %v1593
        %v1707 = vshrl.u32 %v1593, 16
        %v1708 = vshrl.u32 %v1661, 16
        %v1709 = vpack.i.b16 %v1708, %v1707
        %v1710 = vpack.c.bf16 %v894, %v891
        %v1711 = vpack.c.bf16 %v902, %v899
        %1714 = vrot.lane.b32.xlu0 %v1710, 112
        %v1715 = vpop.permute.xlu0 %1714
        %1716 = vrot.lane.b32.xlu0 %v1711, 112
        %v1717 = vpop.permute.xlu0 %1716
        %1718 = vrot.lane.b32.xlu0 %v1710, 96
        %v1719 = vpop.permute.xlu0 %1718
        %1720 = vrot.lane.b32.xlu0 %v1711, 96
        %v1721 = vpop.permute.xlu0 %1720
        %1722 = vrot.lane.b32.xlu0 %v1710, 80
        %v1723 = vpop.permute.xlu0 %1722
        %1724 = vrot.lane.b32.xlu0 %v1711, 80
        %v1725 = vpop.permute.xlu0 %1724
        %1726 = vrot.lane.b32.xlu0 %v1710, 64
        %v1727 = vpop.permute.xlu0 %1726
        %1728 = vrot.lane.b32.xlu0 %v1711, 64
        %v1729 = vpop.permute.xlu0 %1728
        %1730 = vrot.lane.b32.xlu0 %v1710, 48
        %v1731 = vpop.permute.xlu0 %1730
        %1732 = vrot.lane.b32.xlu0 %v1711, 48
        %v1733 = vpop.permute.xlu0 %1732
        %1734 = vrot.lane.b32.xlu0 %v1710, 32
        %v1735 = vpop.permute.xlu0 %1734
        %1736 = vrot.lane.b32.xlu0 %v1711, 32
        %v1737 = vpop.permute.xlu0 %1736
        %1738 = vrot.lane.b32.xlu0 %v1710, 16
        %v1739 = vpop.permute.xlu0 %1738
        %1740 = vrot.lane.b32.xlu0 %v1711, 16
        %v1741 = vpop.permute.xlu0 %1740
        %v1744 = vpack.i.b16 %v1715, %v1710
        %v1746 = vshrl.u32 %v1710, 16
        %v1747 = vshrl.u32 %v1715, 16
        %v1748 = vpack.i.b16 %v1747, %v1746
        %v1752 = vpack.i.b16 %v1723, %v1719
        %v1754 = vshrl.u32 %v1719, 16
        %v1755 = vshrl.u32 %v1723, 16
        %v1756 = vpack.i.b16 %v1755, %v1754
        %v1760 = vpack.i.b16 %v1731, %v1727
        %v1762 = vshrl.u32 %v1727, 16
        %v1763 = vshrl.u32 %v1731, 16
        %v1764 = vpack.i.b16 %v1763, %v1762
        %v1768 = vpack.i.b16 %v1739, %v1735
        %v1770 = vshrl.u32 %v1735, 16
        %v1771 = vshrl.u32 %v1739, 16
        %v1772 = vpack.i.b16 %v1771, %v1770
        %v1776 = vpack.i.b16 %v1717, %v1711
        %v1778 = vshrl.u32 %v1711, 16
        %v1779 = vshrl.u32 %v1717, 16
        %v1780 = vpack.i.b16 %v1779, %v1778
        %v1784 = vpack.i.b16 %v1725, %v1721
        %v1786 = vshrl.u32 %v1721, 16
        %v1787 = vshrl.u32 %v1725, 16
        %v1788 = vpack.i.b16 %v1787, %v1786
        %v1792 = vpack.i.b16 %v1733, %v1729
        %v1794 = vshrl.u32 %v1729, 16
        %v1795 = vshrl.u32 %v1733, 16
        %v1796 = vpack.i.b16 %v1795, %v1794
        %v1800 = vpack.i.b16 %v1741, %v1737
        %v1802 = vshrl.u32 %v1737, 16
        %v1803 = vshrl.u32 %v1741, 16
        %v1804 = vpack.i.b16 %v1803, %v1802
        %v1806 = vcombine.low %v1744, %v1760
        %v1807 = vcombine.high %v1744, %v1760
        %v1809 = vunpack.c.l.s4 1983009808
        %v1810 = vunpack.c.0.s8 %v1809
        %v1811 = vlaneseq
        %v1812 = vshrl.u32 %v1811, 7
        %v1813 = vsub.s32 %v1810, %v1812
        %v1814 = vrot.slane %v1806, %v1813
        %v1816 = vunpack.c.l.s4 1983009808
        %v1817 = vunpack.c.0.s8 %v1816
        %v1818 = vlaneseq
        %v1819 = vshrl.u32 %v1818, 7
        %v1820 = vsub.s32 %v1817, %v1819
        %v1821 = vrot.slane %v1807, %v1820
        %v1822 = vcombine.low %v1752, %v1768
        %v1823 = vcombine.high %v1752, %v1768
        %v1825 = vunpack.c.l.s4 1983009808
        %v1826 = vunpack.c.0.s8 %v1825
        %v1827 = vlaneseq
        %v1828 = vshrl.u32 %v1827, 7
        %v1829 = vsub.s32 %v1826, %v1828
        %v1830 = vrot.slane %v1822, %v1829
        %v1832 = vunpack.c.l.s4 1983009808
        %v1833 = vunpack.c.0.s8 %v1832
        %v1834 = vlaneseq
        %v1835 = vshrl.u32 %v1834, 7
        %v1836 = vsub.s32 %v1833, %v1835
        %v1837 = vrot.slane %v1823, %v1836
        %v1838 = vcombine.low %v1814, %v1830
        %v1839 = vcombine.high %v1814, %v1830
        %v1841 = vunpack.c.l.s4 1934713408
        %v1842 = vunpack.c.0.s8 %v1841
        %v1843 = vlaneseq
        %v1844 = vshrl.u32 %v1843, 7
        %v1845 = vsub.s32 %v1842, %v1844
        %v1846 = vrot.slane %v1838, %v1845
        %v1848 = vunpack.c.l.s4 1934713408
        %v1849 = vunpack.c.0.s8 %v1848
        %v1850 = vlaneseq
        %v1851 = vshrl.u32 %v1850, 7
        %v1852 = vsub.s32 %v1849, %v1851
        %v1853 = vrot.slane %v1839, %v1852
        %v1854 = vcombine.low %v1821, %v1837
        %v1855 = vcombine.high %v1821, %v1837
        %v1857 = vunpack.c.l.s4 1934713408
        %v1858 = vunpack.c.0.s8 %v1857
        %v1859 = vlaneseq
        %v1860 = vshrl.u32 %v1859, 7
        %v1861 = vsub.s32 %v1858, %v1860
        %v1862 = vrot.slane %v1854, %v1861
        %v1864 = vunpack.c.l.s4 1934713408
        %v1865 = vunpack.c.0.s8 %v1864
        %v1866 = vlaneseq
        %v1867 = vshrl.u32 %v1866, 7
        %v1868 = vsub.s32 %v1865, %v1867
        %v1869 = vrot.slane %v1855, %v1868
        %v1870 = vcombine.high %v1846, 0
        %v1871 = vcombine.high %v1853, 0
        %v1872 = vcombine.high %v1862, 0
        %v1873 = vcombine.high %v1869, 0
        %v1874 = vcombine.low %v1748, %v1764
        %v1875 = vcombine.high %v1748, %v1764
        %v1877 = vunpack.c.l.s4 1983009808
        %v1878 = vunpack.c.0.s8 %v1877
        %v1879 = vlaneseq
        %v1880 = vshrl.u32 %v1879, 7
        %v1881 = vsub.s32 %v1878, %v1880
        %v1882 = vrot.slane %v1874, %v1881
        %v1884 = vunpack.c.l.s4 1983009808
        %v1885 = vunpack.c.0.s8 %v1884
        %v1886 = vlaneseq
        %v1887 = vshrl.u32 %v1886, 7
        %v1888 = vsub.s32 %v1885, %v1887
        %v1889 = vrot.slane %v1875, %v1888
        %v1890 = vcombine.low %v1756, %v1772
        %v1891 = vcombine.high %v1756, %v1772
        %v1893 = vunpack.c.l.s4 1983009808
        %v1894 = vunpack.c.0.s8 %v1893
        %v1895 = vlaneseq
        %v1896 = vshrl.u32 %v1895, 7
        %v1897 = vsub.s32 %v1894, %v1896
        %v1898 = vrot.slane %v1890, %v1897
        %v1900 = vunpack.c.l.s4 1983009808
        %v1901 = vunpack.c.0.s8 %v1900
        %v1902 = vlaneseq
        %v1903 = vshrl.u32 %v1902, 7
        %v1904 = vsub.s32 %v1901, %v1903
        %v1905 = vrot.slane %v1891, %v1904
        %v1906 = vcombine.low %v1882, %v1898
        %v1907 = vcombine.high %v1882, %v1898
        %v1909 = vunpack.c.l.s4 1934713408
        %v1910 = vunpack.c.0.s8 %v1909
        %v1911 = vlaneseq
        %v1912 = vshrl.u32 %v1911, 7
        %v1913 = vsub.s32 %v1910, %v1912
        %v1914 = vrot.slane %v1906, %v1913
        %v1916 = vunpack.c.l.s4 1934713408
        %v1917 = vunpack.c.0.s8 %v1916
        %v1918 = vlaneseq
        %v1919 = vshrl.u32 %v1918, 7
        %v1920 = vsub.s32 %v1917, %v1919
        %v1921 = vrot.slane %v1907, %v1920
        %v1922 = vcombine.low %v1889, %v1905
        %v1923 = vcombine.high %v1889, %v1905
        %v1925 = vunpack.c.l.s4 1934713408
        %v1926 = vunpack.c.0.s8 %v1925
        %v1927 = vlaneseq
        %v1928 = vshrl.u32 %v1927, 7
        %v1929 = vsub.s32 %v1926, %v1928
        %v1930 = vrot.slane %v1922, %v1929
        %v1932 = vunpack.c.l.s4 1934713408
        %v1933 = vunpack.c.0.s8 %v1932
        %v1934 = vlaneseq
        %v1935 = vshrl.u32 %v1934, 7
        %v1936 = vsub.s32 %v1933, %v1935
        %v1937 = vrot.slane %v1923, %v1936
        %v1938 = vcombine.high %v1914, 0
        %v1939 = vcombine.high %v1921, 0
        %v1940 = vcombine.high %v1930, 0
        %v1941 = vcombine.high %v1937, 0
        %v1942 = vcombine.low %v1776, %v1792
        %v1943 = vcombine.high %v1776, %v1792
        %v1945 = vunpack.c.l.s4 1983009808
        %v1946 = vunpack.c.0.s8 %v1945
        %v1947 = vlaneseq
        %v1948 = vshrl.u32 %v1947, 7
        %v1949 = vsub.s32 %v1946, %v1948
        %v1950 = vrot.slane %v1942, %v1949
        %v1952 = vunpack.c.l.s4 1983009808
        %v1953 = vunpack.c.0.s8 %v1952
        %v1954 = vlaneseq
        %v1955 = vshrl.u32 %v1954, 7
        %v1956 = vsub.s32 %v1953, %v1955
        %v1957 = vrot.slane %v1943, %v1956
        %v1958 = vcombine.low %v1784, %v1800
        %v1959 = vcombine.high %v1784, %v1800
        %v1961 = vunpack.c.l.s4 1983009808
        %v1962 = vunpack.c.0.s8 %v1961
        %v1963 = vlaneseq
        %v1964 = vshrl.u32 %v1963, 7
        %v1965 = vsub.s32 %v1962, %v1964
        %v1966 = vrot.slane %v1958, %v1965
        %v1968 = vunpack.c.l.s4 1983009808
        %v1969 = vunpack.c.0.s8 %v1968
        %v1970 = vlaneseq
        %v1971 = vshrl.u32 %v1970, 7
        %v1972 = vsub.s32 %v1969, %v1971
        %v1973 = vrot.slane %v1959, %v1972
        %v1974 = vcombine.low %v1950, %v1966
        %v1975 = vcombine.high %v1950, %v1966
        %v1977 = vunpack.c.l.s4 1934713408
        %v1978 = vunpack.c.0.s8 %v1977
        %v1979 = vlaneseq
        %v1980 = vshrl.u32 %v1979, 7
        %v1981 = vsub.s32 %v1978, %v1980
        %v1982 = vrot.slane %v1974, %v1981
        %v1984 = vunpack.c.l.s4 1934713408
        %v1985 = vunpack.c.0.s8 %v1984
        %v1986 = vlaneseq
        %v1987 = vshrl.u32 %v1986, 7
        %v1988 = vsub.s32 %v1985, %v1987
        %v1989 = vrot.slane %v1975, %v1988
        %v1990 = vcombine.low %v1957, %v1973
        %v1991 = vcombine.high %v1957, %v1973
        %v1993 = vunpack.c.l.s4 1934713408
        %v1994 = vunpack.c.0.s8 %v1993
        %v1995 = vlaneseq
        %v1996 = vshrl.u32 %v1995, 7
        %v1997 = vsub.s32 %v1994, %v1996
        %v1998 = vrot.slane %v1990, %v1997
        %v2000 = vunpack.c.l.s4 1934713408
        %v2001 = vunpack.c.0.s8 %v2000
        %v2002 = vlaneseq
        %v2003 = vshrl.u32 %v2002, 7
        %v2004 = vsub.s32 %v2001, %v2003
        %v2005 = vrot.slane %v1991, %v2004
        %v2006 = vcombine.high %v1982, 0
        %v2007 = vcombine.high %v1989, 0
        %v2008 = vcombine.high %v1998, 0
        %v2009 = vcombine.high %v2005, 0
        %v2010 = vcombine.low %v1780, %v1796
        %v2011 = vcombine.high %v1780, %v1796
        %v2013 = vunpack.c.l.s4 1983009808
        %v2014 = vunpack.c.0.s8 %v2013
        %v2015 = vlaneseq
        %v2016 = vshrl.u32 %v2015, 7
        %v2017 = vsub.s32 %v2014, %v2016
        %v2018 = vrot.slane %v2010, %v2017
        %v2020 = vunpack.c.l.s4 1983009808
        %v2021 = vunpack.c.0.s8 %v2020
        %v2022 = vlaneseq
        %v2023 = vshrl.u32 %v2022, 7
        %v2024 = vsub.s32 %v2021, %v2023
        %v2025 = vrot.slane %v2011, %v2024
        %v2026 = vcombine.low %v1788, %v1804
        %v2027 = vcombine.high %v1788, %v1804
        %v2029 = vunpack.c.l.s4 1983009808
        %v2030 = vunpack.c.0.s8 %v2029
        %v2031 = vlaneseq
        %v2032 = vshrl.u32 %v2031, 7
        %v2033 = vsub.s32 %v2030, %v2032
        %v2034 = vrot.slane %v2026, %v2033
        %v2036 = vunpack.c.l.s4 1983009808
        %v2037 = vunpack.c.0.s8 %v2036
        %v2038 = vlaneseq
        %v2039 = vshrl.u32 %v2038, 7
        %v2040 = vsub.s32 %v2037, %v2039
        %v2041 = vrot.slane %v2027, %v2040
        %v2042 = vcombine.low %v2018, %v2034
        %v2043 = vcombine.high %v2018, %v2034
        %v2045 = vunpack.c.l.s4 1934713408
        %v2046 = vunpack.c.0.s8 %v2045
        %v2047 = vlaneseq
        %v2048 = vshrl.u32 %v2047, 7
        %v2049 = vsub.s32 %v2046, %v2048
        %v2050 = vrot.slane %v2042, %v2049
        %v2052 = vunpack.c.l.s4 1934713408
        %v2053 = vunpack.c.0.s8 %v2052
        %v2054 = vlaneseq
        %v2055 = vshrl.u32 %v2054, 7
        %v2056 = vsub.s32 %v2053, %v2055
        %v2057 = vrot.slane %v2043, %v2056
        %v2058 = vcombine.low %v2025, %v2041
        %v2059 = vcombine.high %v2025, %v2041
        %v2061 = vunpack.c.l.s4 1934713408
        %v2062 = vunpack.c.0.s8 %v2061
        %v2063 = vlaneseq
        %v2064 = vshrl.u32 %v2063, 7
        %v2065 = vsub.s32 %v2062, %v2064
        %v2066 = vrot.slane %v2058, %v2065
        %v2068 = vunpack.c.l.s4 1934713408
        %v2069 = vunpack.c.0.s8 %v2068
        %v2070 = vlaneseq
        %v2071 = vshrl.u32 %v2070, 7
        %v2072 = vsub.s32 %v2069, %v2071
        %v2073 = vrot.slane %v2059, %v2072
        %v2074 = vcombine.high %v2050, 0
        %v2075 = vcombine.high %v2057, 0
        %v2076 = vcombine.high %v2066, 0
        %v2077 = vcombine.high %v2073, 0
        %v2078 = vcombine.low %v1846, %v1853
        %v2080 = vunpack.c.l.s4 1983009808
        %v2081 = vunpack.c.0.s8 %v2080
        %v2082 = vlaneseq
        %v2083 = vshrl.u32 %v2082, 7
        %v2084 = vsub.s32 %v2081, %v2083
        %v2085 = vrot.slane %v2078, %v2084
        %v2086 = vcombine.low %v1870, %v1871
        %v2088 = vunpack.c.l.s4 1983009808
        %v2089 = vunpack.c.0.s8 %v2088
        %v2090 = vlaneseq
        %v2091 = vshrl.u32 %v2090, 7
        %v2092 = vsub.s32 %v2089, %v2091
        %v2093 = vrot.slane %v2086, %v2092
        %v2094 = vcombine.low %v1862, %v1869
        %v2096 = vunpack.c.l.s4 1983009808
        %v2097 = vunpack.c.0.s8 %v2096
        %v2098 = vlaneseq
        %v2099 = vshrl.u32 %v2098, 7
        %v2100 = vsub.s32 %v2097, %v2099
        %v2101 = vrot.slane %v2094, %v2100
        %v2102 = vcombine.low %v1872, %v1873
        %v2104 = vunpack.c.l.s4 1983009808
        %v2105 = vunpack.c.0.s8 %v2104
        %v2106 = vlaneseq
        %v2107 = vshrl.u32 %v2106, 7
        %v2108 = vsub.s32 %v2105, %v2107
        %v2109 = vrot.slane %v2102, %v2108
        %v2110 = vcombine.low %v2085, %v2093
        %v2111 = vcombine.high %v2085, %v2093
        %v2113 = vunpack.c.l.s4 1934713408
        %v2114 = vunpack.c.0.s8 %v2113
        %v2115 = vlaneseq
        %v2116 = vshrl.u32 %v2115, 7
        %v2117 = vsub.s32 %v2114, %v2116
        %v2118 = vrot.slane %v2110, %v2117
        %v2120 = vunpack.c.l.s4 1934713408
        %v2121 = vunpack.c.0.s8 %v2120
        %v2122 = vlaneseq
        %v2123 = vshrl.u32 %v2122, 7
        %v2124 = vsub.s32 %v2121, %v2123
        %v2125 = vrot.slane %v2111, %v2124
        %v2126 = vcombine.low %v2101, %v2109
        %v2127 = vcombine.high %v2101, %v2109
        %v2129 = vunpack.c.l.s4 1934713408
        %v2130 = vunpack.c.0.s8 %v2129
        %v2131 = vlaneseq
        %v2132 = vshrl.u32 %v2131, 7
        %v2133 = vsub.s32 %v2130, %v2132
        %v2134 = vrot.slane %v2126, %v2133
        %v2136 = vunpack.c.l.s4 1934713408
        %v2137 = vunpack.c.0.s8 %v2136
        %v2138 = vlaneseq
        %v2139 = vshrl.u32 %v2138, 7
        %v2140 = vsub.s32 %v2137, %v2139
        %v2141 = vrot.slane %v2127, %v2140
        %v2142 = vcombine.low %v2118, %v2134
        %v2143 = vcombine.high %v2118, %v2134
        %v2144 = vcombine.low %v2125, %v2141
        %v2145 = vcombine.high %v2125, %v2141
        %v2146 = vcombine.low %v1914, %v1921
        %v2148 = vunpack.c.l.s4 1983009808
        %v2149 = vunpack.c.0.s8 %v2148
        %v2150 = vlaneseq
        %v2151 = vshrl.u32 %v2150, 7
        %v2152 = vsub.s32 %v2149, %v2151
        %v2153 = vrot.slane %v2146, %v2152
        %v2154 = vcombine.low %v1938, %v1939
        %v2156 = vunpack.c.l.s4 1983009808
        %v2157 = vunpack.c.0.s8 %v2156
        %v2158 = vlaneseq
        %v2159 = vshrl.u32 %v2158, 7
        %v2160 = vsub.s32 %v2157, %v2159
        %v2161 = vrot.slane %v2154, %v2160
        %v2162 = vcombine.low %v1930, %v1937
        %v2164 = vunpack.c.l.s4 1983009808
        %v2165 = vunpack.c.0.s8 %v2164
        %v2166 = vlaneseq
        %v2167 = vshrl.u32 %v2166, 7
        %v2168 = vsub.s32 %v2165, %v2167
        %v2169 = vrot.slane %v2162, %v2168
        %v2170 = vcombine.low %v1940, %v1941
        %v2172 = vunpack.c.l.s4 1983009808
        %v2173 = vunpack.c.0.s8 %v2172
        %v2174 = vlaneseq
        %v2175 = vshrl.u32 %v2174, 7
        %v2176 = vsub.s32 %v2173, %v2175
        %v2177 = vrot.slane %v2170, %v2176
        %v2178 = vcombine.low %v2153, %v2161
        %v2179 = vcombine.high %v2153, %v2161
        %v2181 = vunpack.c.l.s4 1934713408
        %v2182 = vunpack.c.0.s8 %v2181
        %v2183 = vlaneseq
        %v2184 = vshrl.u32 %v2183, 7
        %v2185 = vsub.s32 %v2182, %v2184
        %v2186 = vrot.slane %v2178, %v2185
        %v2188 = vunpack.c.l.s4 1934713408
        %v2189 = vunpack.c.0.s8 %v2188
        %v2190 = vlaneseq
        %v2191 = vshrl.u32 %v2190, 7
        %v2192 = vsub.s32 %v2189, %v2191
        %v2193 = vrot.slane %v2179, %v2192
        %v2194 = vcombine.low %v2169, %v2177
        %v2195 = vcombine.high %v2169, %v2177
        %v2197 = vunpack.c.l.s4 1934713408
        %v2198 = vunpack.c.0.s8 %v2197
        %v2199 = vlaneseq
        %v2200 = vshrl.u32 %v2199, 7
        %v2201 = vsub.s32 %v2198, %v2200
        %v2202 = vrot.slane %v2194, %v2201
        %v2204 = vunpack.c.l.s4 1934713408
        %v2205 = vunpack.c.0.s8 %v2204
        %v2206 = vlaneseq
        %v2207 = vshrl.u32 %v2206, 7
        %v2208 = vsub.s32 %v2205, %v2207
        %v2209 = vrot.slane %v2195, %v2208
        %v2210 = vcombine.low %v2186, %v2202
        %v2211 = vcombine.high %v2186, %v2202
        %v2212 = vcombine.low %v2193, %v2209
        %v2213 = vcombine.high %v2193, %v2209
        %v2214 = vcombine.low %v1982, %v1989
        %v2216 = vunpack.c.l.s4 1983009808
        %v2217 = vunpack.c.0.s8 %v2216
        %v2218 = vlaneseq
        %v2219 = vshrl.u32 %v2218, 7
        %v2220 = vsub.s32 %v2217, %v2219
        %v2221 = vrot.slane %v2214, %v2220
        %v2222 = vcombine.low %v2006, %v2007
        %v2224 = vunpack.c.l.s4 1983009808
        %v2225 = vunpack.c.0.s8 %v2224
        %v2226 = vlaneseq
        %v2227 = vshrl.u32 %v2226, 7
        %v2228 = vsub.s32 %v2225, %v2227
        %v2229 = vrot.slane %v2222, %v2228
        %v2230 = vcombine.low %v1998, %v2005
        %v2232 = vunpack.c.l.s4 1983009808
        %v2233 = vunpack.c.0.s8 %v2232
        %v2234 = vlaneseq
        %v2235 = vshrl.u32 %v2234, 7
        %v2236 = vsub.s32 %v2233, %v2235
        %v2237 = vrot.slane %v2230, %v2236
        %v2238 = vcombine.low %v2008, %v2009
        %v2240 = vunpack.c.l.s4 1983009808
        %v2241 = vunpack.c.0.s8 %v2240
        %v2242 = vlaneseq
        %v2243 = vshrl.u32 %v2242, 7
        %v2244 = vsub.s32 %v2241, %v2243
        %v2245 = vrot.slane %v2238, %v2244
        %v2246 = vcombine.low %v2221, %v2229
        %v2247 = vcombine.high %v2221, %v2229
        %v2249 = vunpack.c.l.s4 1934713408
        %v2250 = vunpack.c.0.s8 %v2249
        %v2251 = vlaneseq
        %v2252 = vshrl.u32 %v2251, 7
        %v2253 = vsub.s32 %v2250, %v2252
        %v2254 = vrot.slane %v2246, %v2253
        %v2256 = vunpack.c.l.s4 1934713408
        %v2257 = vunpack.c.0.s8 %v2256
        %v2258 = vlaneseq
        %v2259 = vshrl.u32 %v2258, 7
        %v2260 = vsub.s32 %v2257, %v2259
        %v2261 = vrot.slane %v2247, %v2260
        %v2262 = vcombine.low %v2237, %v2245
        %v2263 = vcombine.high %v2237, %v2245
        %v2265 = vunpack.c.l.s4 1934713408
        %v2266 = vunpack.c.0.s8 %v2265
        %v2267 = vlaneseq
        %v2268 = vshrl.u32 %v2267, 7
        %v2269 = vsub.s32 %v2266, %v2268
        %v2270 = vrot.slane %v2262, %v2269
        %v2272 = vunpack.c.l.s4 1934713408
        %v2273 = vunpack.c.0.s8 %v2272
        %v2274 = vlaneseq
        %v2275 = vshrl.u32 %v2274, 7
        %v2276 = vsub.s32 %v2273, %v2275
        %v2277 = vrot.slane %v2263, %v2276
        %v2278 = vcombine.low %v2254, %v2270
        %v2279 = vcombine.high %v2254, %v2270
        %v2280 = vcombine.low %v2261, %v2277
        %v2281 = vcombine.high %v2261, %v2277
        %v2282 = vcombine.low %v2050, %v2057
        %v2284 = vunpack.c.l.s4 1983009808
        %v2285 = vunpack.c.0.s8 %v2284
        %v2286 = vlaneseq
        %v2287 = vshrl.u32 %v2286, 7
        %v2288 = vsub.s32 %v2285, %v2287
        %v2289 = vrot.slane %v2282, %v2288
        %v2290 = vcombine.low %v2074, %v2075
        %v2292 = vunpack.c.l.s4 1983009808
        %v2293 = vunpack.c.0.s8 %v2292
        %v2294 = vlaneseq
        %v2295 = vshrl.u32 %v2294, 7
        %v2296 = vsub.s32 %v2293, %v2295
        %v2297 = vrot.slane %v2290, %v2296
        %v2298 = vcombine.low %v2066, %v2073
        %v2300 = vunpack.c.l.s4 1983009808
        %v2301 = vunpack.c.0.s8 %v2300
        %v2302 = vlaneseq
        %v2303 = vshrl.u32 %v2302, 7
        %v2304 = vsub.s32 %v2301, %v2303
        %v2305 = vrot.slane %v2298, %v2304
        %v2306 = vcombine.low %v2076, %v2077
        %v2308 = vunpack.c.l.s4 1983009808
        %v2309 = vunpack.c.0.s8 %v2308
        %v2310 = vlaneseq
        %v2311 = vshrl.u32 %v2310, 7
        %v2312 = vsub.s32 %v2309, %v2311
        %v2313 = vrot.slane %v2306, %v2312
        %v2314 = vcombine.low %v2289, %v2297
        %v2315 = vcombine.high %v2289, %v2297
        %v2317 = vunpack.c.l.s4 1934713408
        %v2318 = vunpack.c.0.s8 %v2317
        %v2319 = vlaneseq
        %v2320 = vshrl.u32 %v2319, 7
        %v2321 = vsub.s32 %v2318, %v2320
        %v2322 = vrot.slane %v2314, %v2321
        %v2324 = vunpack.c.l.s4 1934713408
        %v2325 = vunpack.c.0.s8 %v2324
        %v2326 = vlaneseq
        %v2327 = vshrl.u32 %v2326, 7
        %v2328 = vsub.s32 %v2325, %v2327
        %v2329 = vrot.slane %v2315, %v2328
        %v2330 = vcombine.low %v2305, %v2313
        %v2331 = vcombine.high %v2305, %v2313
        %v2333 = vunpack.c.l.s4 1934713408
        %v2334 = vunpack.c.0.s8 %v2333
        %v2335 = vlaneseq
        %v2336 = vshrl.u32 %v2335, 7
        %v2337 = vsub.s32 %v2334, %v2336
        %v2338 = vrot.slane %v2330, %v2337
        %v2340 = vunpack.c.l.s4 1934713408
        %v2341 = vunpack.c.0.s8 %v2340
        %v2342 = vlaneseq
        %v2343 = vshrl.u32 %v2342, 7
        %v2344 = vsub.s32 %v2341, %v2343
        %v2345 = vrot.slane %v2331, %v2344
        %v2346 = vcombine.low %v2322, %v2338
        %v2347 = vcombine.high %v2322, %v2338
        %v2348 = vcombine.low %v2329, %v2345
        %v2349 = vcombine.high %v2329, %v2345
        %v2352 = vpack.i.b16 %v2210, %v2142
        %v2353 = vshrl.u32 %v2142, 16
        %v2354 = vshrl.u32 %v2210, 16
        %v2355 = vpack.i.b16 %v2354, %v2353
        %v2358 = vpack.i.b16 %v2211, %v2143
        %v2359 = vshrl.u32 %v2143, 16
        %v2360 = vshrl.u32 %v2211, 16
        %v2361 = vpack.i.b16 %v2360, %v2359
        %v2364 = vpack.i.b16 %v2212, %v2144
        %v2365 = vshrl.u32 %v2144, 16
        %v2366 = vshrl.u32 %v2212, 16
        %v2367 = vpack.i.b16 %v2366, %v2365
        %v2370 = vpack.i.b16 %v2213, %v2145
        %v2371 = vshrl.u32 %v2145, 16
        %v2372 = vshrl.u32 %v2213, 16
        %v2373 = vpack.i.b16 %v2372, %v2371
        %v2376 = vpack.i.b16 %v2346, %v2278
        %v2377 = vshrl.u32 %v2278, 16
        %v2378 = vshrl.u32 %v2346, 16
        %v2379 = vpack.i.b16 %v2378, %v2377
        %v2382 = vpack.i.b16 %v2347, %v2279
        %v2383 = vshrl.u32 %v2279, 16
        %v2384 = vshrl.u32 %v2347, 16
        %v2385 = vpack.i.b16 %v2384, %v2383
        %v2388 = vpack.i.b16 %v2348, %v2280
        %v2389 = vshrl.u32 %v2280, 16
        %v2390 = vshrl.u32 %v2348, 16
        %v2391 = vpack.i.b16 %v2390, %v2389
        %v2394 = vpack.i.b16 %v2349, %v2281
        %v2395 = vshrl.u32 %v2281, 16
        %v2396 = vshrl.u32 %v2349, 16
        %v2397 = vpack.i.b16 %v2396, %v2395
        %v2398 = vpack.c.bf16 %v1011, %v1008
        %v2399 = vpack.c.bf16 %v1019, %v1016
        %2402 = vrot.lane.b32.xlu0 %v2398, 112
        %v2403 = vpop.permute.xlu0 %2402
        %2404 = vrot.lane.b32.xlu0 %v2399, 112
        %v2405 = vpop.permute.xlu0 %2404
        %2406 = vrot.lane.b32.xlu0 %v2398, 96
        %v2407 = vpop.permute.xlu0 %2406
        %2408 = vrot.lane.b32.xlu0 %v2399, 96
        %v2409 = vpop.permute.xlu0 %2408
        %2410 = vrot.lane.b32.xlu0 %v2398, 80
        %v2411 = vpop.permute.xlu0 %2410
        %2412 = vrot.lane.b32.xlu0 %v2399, 80
        %v2413 = vpop.permute.xlu0 %2412
        %2414 = vrot.lane.b32.xlu0 %v2398, 64
        %v2415 = vpop.permute.xlu0 %2414
        %2416 = vrot.lane.b32.xlu0 %v2399, 64
        %v2417 = vpop.permute.xlu0 %2416
        %2418 = vrot.lane.b32.xlu0 %v2398, 48
        %v2419 = vpop.permute.xlu0 %2418
        %2420 = vrot.lane.b32.xlu0 %v2399, 48
        %v2421 = vpop.permute.xlu0 %2420
        %2422 = vrot.lane.b32.xlu0 %v2398, 32
        %v2423 = vpop.permute.xlu0 %2422
        %2424 = vrot.lane.b32.xlu0 %v2399, 32
        %v2425 = vpop.permute.xlu0 %2424
        %2426 = vrot.lane.b32.xlu0 %v2398, 16
        %v2427 = vpop.permute.xlu0 %2426
        %2428 = vrot.lane.b32.xlu0 %v2399, 16
        %v2429 = vpop.permute.xlu0 %2428
        %v2432 = vpack.i.b16 %v2403, %v2398
        %v2434 = vshrl.u32 %v2398, 16
        %v2435 = vshrl.u32 %v2403, 16
        %v2436 = vpack.i.b16 %v2435, %v2434
        %v2440 = vpack.i.b16 %v2411, %v2407
        %v2442 = vshrl.u32 %v2407, 16
        %v2443 = vshrl.u32 %v2411, 16
        %v2444 = vpack.i.b16 %v2443, %v2442
        %v2448 = vpack.i.b16 %v2419, %v2415
        %v2450 = vshrl.u32 %v2415, 16
        %v2451 = vshrl.u32 %v2419, 16
        %v2452 = vpack.i.b16 %v2451, %v2450
        %v2456 = vpack.i.b16 %v2427, %v2423
        %v2458 = vshrl.u32 %v2423, 16
        %v2459 = vshrl.u32 %v2427, 16
        %v2460 = vpack.i.b16 %v2459, %v2458
        %v2464 = vpack.i.b16 %v2405, %v2399
        %v2466 = vshrl.u32 %v2399, 16
        %v2467 = vshrl.u32 %v2405, 16
        %v2468 = vpack.i.b16 %v2467, %v2466
        %v2472 = vpack.i.b16 %v2413, %v2409
        %v2474 = vshrl.u32 %v2409, 16
        %v2475 = vshrl.u32 %v2413, 16
        %v2476 = vpack.i.b16 %v2475, %v2474
        %v2480 = vpack.i.b16 %v2421, %v2417
        %v2482 = vshrl.u32 %v2417, 16
        %v2483 = vshrl.u32 %v2421, 16
        %v2484 = vpack.i.b16 %v2483, %v2482
        %v2488 = vpack.i.b16 %v2429, %v2425
        %v2490 = vshrl.u32 %v2425, 16
        %v2491 = vshrl.u32 %v2429, 16
        %v2492 = vpack.i.b16 %v2491, %v2490
        %v2494 = vcombine.low %v2432, %v2448
        %v2495 = vcombine.high %v2432, %v2448
        %v2497 = vunpack.c.l.s4 1983009808
        %v2498 = vunpack.c.0.s8 %v2497
        %v2499 = vlaneseq
        %v2500 = vshrl.u32 %v2499, 7
        %v2501 = vsub.s32 %v2498, %v2500
        %v2502 = vrot.slane %v2494, %v2501
        %v2504 = vunpack.c.l.s4 1983009808
        %v2505 = vunpack.c.0.s8 %v2504
        %v2506 = vlaneseq
        %v2507 = vshrl.u32 %v2506, 7
        %v2508 = vsub.s32 %v2505, %v2507
        %v2509 = vrot.slane %v2495, %v2508
        %v2510 = vcombine.low %v2440, %v2456
        %v2511 = vcombine.high %v2440, %v2456
        %v2513 = vunpack.c.l.s4 1983009808
        %v2514 = vunpack.c.0.s8 %v2513
        %v2515 = vlaneseq
        %v2516 = vshrl.u32 %v2515, 7
        %v2517 = vsub.s32 %v2514, %v2516
        %v2518 = vrot.slane %v2510, %v2517
        %v2520 = vunpack.c.l.s4 1983009808
        %v2521 = vunpack.c.0.s8 %v2520
        %v2522 = vlaneseq
        %v2523 = vshrl.u32 %v2522, 7
        %v2524 = vsub.s32 %v2521, %v2523
        %v2525 = vrot.slane %v2511, %v2524
        %v2526 = vcombine.low %v2502, %v2518
        %v2527 = vcombine.high %v2502, %v2518
        %v2529 = vunpack.c.l.s4 1934713408
        %v2530 = vunpack.c.0.s8 %v2529
        %v2531 = vlaneseq
        %v2532 = vshrl.u32 %v2531, 7
        %v2533 = vsub.s32 %v2530, %v2532
        %v2534 = vrot.slane %v2526, %v2533
        %v2536 = vunpack.c.l.s4 1934713408
        %v2537 = vunpack.c.0.s8 %v2536
        %v2538 = vlaneseq
        %v2539 = vshrl.u32 %v2538, 7
        %v2540 = vsub.s32 %v2537, %v2539
        %v2541 = vrot.slane %v2527, %v2540
        %v2542 = vcombine.low %v2509, %v2525
        %v2543 = vcombine.high %v2509, %v2525
        %v2545 = vunpack.c.l.s4 1934713408
        %v2546 = vunpack.c.0.s8 %v2545
        %v2547 = vlaneseq
        %v2548 = vshrl.u32 %v2547, 7
        %v2549 = vsub.s32 %v2546, %v2548
        %v2550 = vrot.slane %v2542, %v2549
        %v2552 = vunpack.c.l.s4 1934713408
        %v2553 = vunpack.c.0.s8 %v2552
        %v2554 = vlaneseq
        %v2555 = vshrl.u32 %v2554, 7
        %v2556 = vsub.s32 %v2553, %v2555
        %v2557 = vrot.slane %v2543, %v2556
        %v2558 = vcombine.high %v2534, 0
        %v2559 = vcombine.high %v2541, 0
        %v2560 = vcombine.high %v2550, 0
        %v2561 = vcombine.high %v2557, 0
        %v2562 = vcombine.low %v2436, %v2452
        %v2563 = vcombine.high %v2436, %v2452
        %v2565 = vunpack.c.l.s4 1983009808
        %v2566 = vunpack.c.0.s8 %v2565
        %v2567 = vlaneseq
        %v2568 = vshrl.u32 %v2567, 7
        %v2569 = vsub.s32 %v2566, %v2568
        %v2570 = vrot.slane %v2562, %v2569
        %v2572 = vunpack.c.l.s4 1983009808
        %v2573 = vunpack.c.0.s8 %v2572
        %v2574 = vlaneseq
        %v2575 = vshrl.u32 %v2574, 7
        %v2576 = vsub.s32 %v2573, %v2575
        %v2577 = vrot.slane %v2563, %v2576
        %v2578 = vcombine.low %v2444, %v2460
        %v2579 = vcombine.high %v2444, %v2460
        %v2581 = vunpack.c.l.s4 1983009808
        %v2582 = vunpack.c.0.s8 %v2581
        %v2583 = vlaneseq
        %v2584 = vshrl.u32 %v2583, 7
        %v2585 = vsub.s32 %v2582, %v2584
        %v2586 = vrot.slane %v2578, %v2585
        %v2588 = vunpack.c.l.s4 1983009808
        %v2589 = vunpack.c.0.s8 %v2588
        %v2590 = vlaneseq
        %v2591 = vshrl.u32 %v2590, 7
        %v2592 = vsub.s32 %v2589, %v2591
        %v2593 = vrot.slane %v2579, %v2592
        %v2594 = vcombine.low %v2570, %v2586
        %v2595 = vcombine.high %v2570, %v2586
        %v2597 = vunpack.c.l.s4 1934713408
        %v2598 = vunpack.c.0.s8 %v2597
        %v2599 = vlaneseq
        %v2600 = vshrl.u32 %v2599, 7
        %v2601 = vsub.s32 %v2598, %v2600
        %v2602 = vrot.slane %v2594, %v2601
        %v2604 = vunpack.c.l.s4 1934713408
        %v2605 = vunpack.c.0.s8 %v2604
        %v2606 = vlaneseq
        %v2607 = vshrl.u32 %v2606, 7
        %v2608 = vsub.s32 %v2605, %v2607
        %v2609 = vrot.slane %v2595, %v2608
        %v2610 = vcombine.low %v2577, %v2593
        %v2611 = vcombine.high %v2577, %v2593
        %v2613 = vunpack.c.l.s4 1934713408
        %v2614 = vunpack.c.0.s8 %v2613
        %v2615 = vlaneseq
        %v2616 = vshrl.u32 %v2615, 7
        %v2617 = vsub.s32 %v2614, %v2616
        %v2618 = vrot.slane %v2610, %v2617
        %v2620 = vunpack.c.l.s4 1934713408
        %v2621 = vunpack.c.0.s8 %v2620
        %v2622 = vlaneseq
        %v2623 = vshrl.u32 %v2622, 7
        %v2624 = vsub.s32 %v2621, %v2623
        %v2625 = vrot.slane %v2611, %v2624
        %v2626 = vcombine.high %v2602, 0
        %v2627 = vcombine.high %v2609, 0
        %v2628 = vcombine.high %v2618, 0
        %v2629 = vcombine.high %v2625, 0
        %v2630 = vcombine.low %v2464, %v2480
        %v2631 = vcombine.high %v2464, %v2480
        %v2633 = vunpack.c.l.s4 1983009808
        %v2634 = vunpack.c.0.s8 %v2633
        %v2635 = vlaneseq
        %v2636 = vshrl.u32 %v2635, 7
        %v2637 = vsub.s32 %v2634, %v2636
        %v2638 = vrot.slane %v2630, %v2637
        %v2640 = vunpack.c.l.s4 1983009808
        %v2641 = vunpack.c.0.s8 %v2640
        %v2642 = vlaneseq
        %v2643 = vshrl.u32 %v2642, 7
        %v2644 = vsub.s32 %v2641, %v2643
        %v2645 = vrot.slane %v2631, %v2644
        %v2646 = vcombine.low %v2472, %v2488
        %v2647 = vcombine.high %v2472, %v2488
        %v2649 = vunpack.c.l.s4 1983009808
        %v2650 = vunpack.c.0.s8 %v2649
        %v2651 = vlaneseq
        %v2652 = vshrl.u32 %v2651, 7
        %v2653 = vsub.s32 %v2650, %v2652
        %v2654 = vrot.slane %v2646, %v2653
        %v2656 = vunpack.c.l.s4 1983009808
        %v2657 = vunpack.c.0.s8 %v2656
        %v2658 = vlaneseq
        %v2659 = vshrl.u32 %v2658, 7
        %v2660 = vsub.s32 %v2657, %v2659
        %v2661 = vrot.slane %v2647, %v2660
        %v2662 = vcombine.low %v2638, %v2654
        %v2663 = vcombine.high %v2638, %v2654
        %v2665 = vunpack.c.l.s4 1934713408
        %v2666 = vunpack.c.0.s8 %v2665
        %v2667 = vlaneseq
        %v2668 = vshrl.u32 %v2667, 7
        %v2669 = vsub.s32 %v2666, %v2668
        %v2670 = vrot.slane %v2662, %v2669
        %v2672 = vunpack.c.l.s4 1934713408
        %v2673 = vunpack.c.0.s8 %v2672
        %v2674 = vlaneseq
        %v2675 = vshrl.u32 %v2674, 7
        %v2676 = vsub.s32 %v2673, %v2675
        %v2677 = vrot.slane %v2663, %v2676
        %v2678 = vcombine.low %v2645, %v2661
        %v2679 = vcombine.high %v2645, %v2661
        %v2681 = vunpack.c.l.s4 1934713408
        %v2682 = vunpack.c.0.s8 %v2681
        %v2683 = vlaneseq
        %v2684 = vshrl.u32 %v2683, 7
        %v2685 = vsub.s32 %v2682, %v2684
        %v2686 = vrot.slane %v2678, %v2685
        %v2688 = vunpack.c.l.s4 1934713408
        %v2689 = vunpack.c.0.s8 %v2688
        %v2690 = vlaneseq
        %v2691 = vshrl.u32 %v2690, 7
        %v2692 = vsub.s32 %v2689, %v2691
        %v2693 = vrot.slane %v2679, %v2692
        %v2694 = vcombine.high %v2670, 0
        %v2695 = vcombine.high %v2677, 0
        %v2696 = vcombine.high %v2686, 0
        %v2697 = vcombine.high %v2693, 0
        %v2698 = vcombine.low %v2468, %v2484
        %v2699 = vcombine.high %v2468, %v2484
        %v2701 = vunpack.c.l.s4 1983009808
        %v2702 = vunpack.c.0.s8 %v2701
        %v2703 = vlaneseq
        %v2704 = vshrl.u32 %v2703, 7
        %v2705 = vsub.s32 %v2702, %v2704
        %v2706 = vrot.slane %v2698, %v2705
        %v2708 = vunpack.c.l.s4 1983009808
        %v2709 = vunpack.c.0.s8 %v2708
        %v2710 = vlaneseq
        %v2711 = vshrl.u32 %v2710, 7
        %v2712 = vsub.s32 %v2709, %v2711
        %v2713 = vrot.slane %v2699, %v2712
        %v2714 = vcombine.low %v2476, %v2492
        %v2715 = vcombine.high %v2476, %v2492
        %v2717 = vunpack.c.l.s4 1983009808
        %v2718 = vunpack.c.0.s8 %v2717
        %v2719 = vlaneseq
        %v2720 = vshrl.u32 %v2719, 7
        %v2721 = vsub.s32 %v2718, %v2720
        %v2722 = vrot.slane %v2714, %v2721
        %v2724 = vunpack.c.l.s4 1983009808
        %v2725 = vunpack.c.0.s8 %v2724
        %v2726 = vlaneseq
        %v2727 = vshrl.u32 %v2726, 7
        %v2728 = vsub.s32 %v2725, %v2727
        %v2729 = vrot.slane %v2715, %v2728
        %v2730 = vcombine.low %v2706, %v2722
        %v2731 = vcombine.high %v2706, %v2722
        %v2733 = vunpack.c.l.s4 1934713408
        %v2734 = vunpack.c.0.s8 %v2733
        %v2735 = vlaneseq
        %v2736 = vshrl.u32 %v2735, 7
        %v2737 = vsub.s32 %v2734, %v2736
        %v2738 = vrot.slane %v2730, %v2737
        %v2740 = vunpack.c.l.s4 1934713408
        %v2741 = vunpack.c.0.s8 %v2740
        %v2742 = vlaneseq
        %v2743 = vshrl.u32 %v2742, 7
        %v2744 = vsub.s32 %v2741, %v2743
        %v2745 = vrot.slane %v2731, %v2744
        %v2746 = vcombine.low %v2713, %v2729
        %v2747 = vcombine.high %v2713, %v2729
        %v2749 = vunpack.c.l.s4 1934713408
        %v2750 = vunpack.c.0.s8 %v2749
        %v2751 = vlaneseq
        %v2752 = vshrl.u32 %v2751, 7
        %v2753 = vsub.s32 %v2750, %v2752
        %v2754 = vrot.slane %v2746, %v2753
        %v2756 = vunpack.c.l.s4 1934713408
        %v2757 = vunpack.c.0.s8 %v2756
        %v2758 = vlaneseq
        %v2759 = vshrl.u32 %v2758, 7
        %v2760 = vsub.s32 %v2757, %v2759
        %v2761 = vrot.slane %v2747, %v2760
        %v2762 = vcombine.high %v2738, 0
        %v2763 = vcombine.high %v2745, 0
        %v2764 = vcombine.high %v2754, 0
        %v2765 = vcombine.high %v2761, 0
        %v2766 = vcombine.low %v2534, %v2541
        %v2768 = vunpack.c.l.s4 1983009808
        %v2769 = vunpack.c.0.s8 %v2768
        %v2770 = vlaneseq
        %v2771 = vshrl.u32 %v2770, 7
        %v2772 = vsub.s32 %v2769, %v2771
        %v2773 = vrot.slane %v2766, %v2772
        %v2774 = vcombine.low %v2558, %v2559
        %v2776 = vunpack.c.l.s4 1983009808
        %v2777 = vunpack.c.0.s8 %v2776
        %v2778 = vlaneseq
        %v2779 = vshrl.u32 %v2778, 7
        %v2780 = vsub.s32 %v2777, %v2779
        %v2781 = vrot.slane %v2774, %v2780
        %v2782 = vcombine.low %v2550, %v2557
        %v2784 = vunpack.c.l.s4 1983009808
        %v2785 = vunpack.c.0.s8 %v2784
        %v2786 = vlaneseq
        %v2787 = vshrl.u32 %v2786, 7
        %v2788 = vsub.s32 %v2785, %v2787
        %v2789 = vrot.slane %v2782, %v2788
        %v2790 = vcombine.low %v2560, %v2561
        %v2792 = vunpack.c.l.s4 1983009808
        %v2793 = vunpack.c.0.s8 %v2792
        %v2794 = vlaneseq
        %v2795 = vshrl.u32 %v2794, 7
        %v2796 = vsub.s32 %v2793, %v2795
        %v2797 = vrot.slane %v2790, %v2796
        %v2798 = vcombine.low %v2773, %v2781
        %v2799 = vcombine.high %v2773, %v2781
        %v2801 = vunpack.c.l.s4 1934713408
        %v2802 = vunpack.c.0.s8 %v2801
        %v2803 = vlaneseq
        %v2804 = vshrl.u32 %v2803, 7
        %v2805 = vsub.s32 %v2802, %v2804
        %v2806 = vrot.slane %v2798, %v2805
        %v2808 = vunpack.c.l.s4 1934713408
        %v2809 = vunpack.c.0.s8 %v2808
        %v2810 = vlaneseq
        %v2811 = vshrl.u32 %v2810, 7
        %v2812 = vsub.s32 %v2809, %v2811
        %v2813 = vrot.slane %v2799, %v2812
        %v2814 = vcombine.low %v2789, %v2797
        %v2815 = vcombine.high %v2789, %v2797
        %v2817 = vunpack.c.l.s4 1934713408
        %v2818 = vunpack.c.0.s8 %v2817
        %v2819 = vlaneseq
        %v2820 = vshrl.u32 %v2819, 7
        %v2821 = vsub.s32 %v2818, %v2820
        %v2822 = vrot.slane %v2814, %v2821
        %v2824 = vunpack.c.l.s4 1934713408
        %v2825 = vunpack.c.0.s8 %v2824
        %v2826 = vlaneseq
        %v2827 = vshrl.u32 %v2826, 7
        %v2828 = vsub.s32 %v2825, %v2827
        %v2829 = vrot.slane %v2815, %v2828
        %v2830 = vcombine.low %v2806, %v2822
        %v2831 = vcombine.high %v2806, %v2822
        %v2832 = vcombine.low %v2813, %v2829
        %v2833 = vcombine.high %v2813, %v2829
        %v2834 = vcombine.low %v2602, %v2609
        %v2836 = vunpack.c.l.s4 1983009808
        %v2837 = vunpack.c.0.s8 %v2836
        %v2838 = vlaneseq
        %v2839 = vshrl.u32 %v2838, 7
        %v2840 = vsub.s32 %v2837, %v2839
        %v2841 = vrot.slane %v2834, %v2840
        %v2842 = vcombine.low %v2626, %v2627
        %v2844 = vunpack.c.l.s4 1983009808
        %v2845 = vunpack.c.0.s8 %v2844
        %v2846 = vlaneseq
        %v2847 = vshrl.u32 %v2846, 7
        %v2848 = vsub.s32 %v2845, %v2847
        %v2849 = vrot.slane %v2842, %v2848
        %v2850 = vcombine.low %v2618, %v2625
        %v2852 = vunpack.c.l.s4 1983009808
        %v2853 = vunpack.c.0.s8 %v2852
        %v2854 = vlaneseq
        %v2855 = vshrl.u32 %v2854, 7
        %v2856 = vsub.s32 %v2853, %v2855
        %v2857 = vrot.slane %v2850, %v2856
        %v2858 = vcombine.low %v2628, %v2629
        %v2860 = vunpack.c.l.s4 1983009808
        %v2861 = vunpack.c.0.s8 %v2860
        %v2862 = vlaneseq
        %v2863 = vshrl.u32 %v2862, 7
        %v2864 = vsub.s32 %v2861, %v2863
        %v2865 = vrot.slane %v2858, %v2864
        %v2866 = vcombine.low %v2841, %v2849
        %v2867 = vcombine.high %v2841, %v2849
        %v2869 = vunpack.c.l.s4 1934713408
        %v2870 = vunpack.c.0.s8 %v2869
        %v2871 = vlaneseq
        %v2872 = vshrl.u32 %v2871, 7
        %v2873 = vsub.s32 %v2870, %v2872
        %v2874 = vrot.slane %v2866, %v2873
        %v2876 = vunpack.c.l.s4 1934713408
        %v2877 = vunpack.c.0.s8 %v2876
        %v2878 = vlaneseq
        %v2879 = vshrl.u32 %v2878, 7
        %v2880 = vsub.s32 %v2877, %v2879
        %v2881 = vrot.slane %v2867, %v2880
        %v2882 = vcombine.low %v2857, %v2865
        %v2883 = vcombine.high %v2857, %v2865
        %v2885 = vunpack.c.l.s4 1934713408
        %v2886 = vunpack.c.0.s8 %v2885
        %v2887 = vlaneseq
        %v2888 = vshrl.u32 %v2887, 7
        %v2889 = vsub.s32 %v2886, %v2888
        %v2890 = vrot.slane %v2882, %v2889
        %v2892 = vunpack.c.l.s4 1934713408
        %v2893 = vunpack.c.0.s8 %v2892
        %v2894 = vlaneseq
        %v2895 = vshrl.u32 %v2894, 7
        %v2896 = vsub.s32 %v2893, %v2895
        %v2897 = vrot.slane %v2883, %v2896
        %v2898 = vcombine.low %v2874, %v2890
        %v2899 = vcombine.high %v2874, %v2890
        %v2900 = vcombine.low %v2881, %v2897
        %v2901 = vcombine.high %v2881, %v2897
        %v2902 = vcombine.low %v2670, %v2677
        %v2904 = vunpack.c.l.s4 1983009808
        %v2905 = vunpack.c.0.s8 %v2904
        %v2906 = vlaneseq
        %v2907 = vshrl.u32 %v2906, 7
        %v2908 = vsub.s32 %v2905, %v2907
        %v2909 = vrot.slane %v2902, %v2908
        %v2910 = vcombine.low %v2694, %v2695
        %v2912 = vunpack.c.l.s4 1983009808
        %v2913 = vunpack.c.0.s8 %v2912
        %v2914 = vlaneseq
        %v2915 = vshrl.u32 %v2914, 7
        %v2916 = vsub.s32 %v2913, %v2915
        %v2917 = vrot.slane %v2910, %v2916
        %v2918 = vcombine.low %v2686, %v2693
        %v2920 = vunpack.c.l.s4 1983009808
        %v2921 = vunpack.c.0.s8 %v2920
        %v2922 = vlaneseq
        %v2923 = vshrl.u32 %v2922, 7
        %v2924 = vsub.s32 %v2921, %v2923
        %v2925 = vrot.slane %v2918, %v2924
        %v2926 = vcombine.low %v2696, %v2697
        %v2928 = vunpack.c.l.s4 1983009808
        %v2929 = vunpack.c.0.s8 %v2928
        %v2930 = vlaneseq
        %v2931 = vshrl.u32 %v2930, 7
        %v2932 = vsub.s32 %v2929, %v2931
        %v2933 = vrot.slane %v2926, %v2932
        %v2934 = vcombine.low %v2909, %v2917
        %v2935 = vcombine.high %v2909, %v2917
        %v2937 = vunpack.c.l.s4 1934713408
        %v2938 = vunpack.c.0.s8 %v2937
        %v2939 = vlaneseq
        %v2940 = vshrl.u32 %v2939, 7
        %v2941 = vsub.s32 %v2938, %v2940
        %v2942 = vrot.slane %v2934, %v2941
        %v2944 = vunpack.c.l.s4 1934713408
        %v2945 = vunpack.c.0.s8 %v2944
        %v2946 = vlaneseq
        %v2947 = vshrl.u32 %v2946, 7
        %v2948 = vsub.s32 %v2945, %v2947
        %v2949 = vrot.slane %v2935, %v2948
        %v2950 = vcombine.low %v2925, %v2933
        %v2951 = vcombine.high %v2925, %v2933
        %v2953 = vunpack.c.l.s4 1934713408
        %v2954 = vunpack.c.0.s8 %v2953
        %v2955 = vlaneseq
        %v2956 = vshrl.u32 %v2955, 7
        %v2957 = vsub.s32 %v2954, %v2956
        %v2958 = vrot.slane %v2950, %v2957
        %v2960 = vunpack.c.l.s4 1934713408
        %v2961 = vunpack.c.0.s8 %v2960
        %v2962 = vlaneseq
        %v2963 = vshrl.u32 %v2962, 7
        %v2964 = vsub.s32 %v2961, %v2963
        %v2965 = vrot.slane %v2951, %v2964
        %v2966 = vcombine.low %v2942, %v2958
        %v2967 = vcombine.high %v2942, %v2958
        %v2968 = vcombine.low %v2949, %v2965
        %v2969 = vcombine.high %v2949, %v2965
        %v2970 = vcombine.low %v2738, %v2745
        %v2972 = vunpack.c.l.s4 1983009808
        %v2973 = vunpack.c.0.s8 %v2972
        %v2974 = vlaneseq
        %v2975 = vshrl.u32 %v2974, 7
        %v2976 = vsub.s32 %v2973, %v2975
        %v2977 = vrot.slane %v2970, %v2976
        %v2978 = vcombine.low %v2762, %v2763
        %v2980 = vunpack.c.l.s4 1983009808
        %v2981 = vunpack.c.0.s8 %v2980
        %v2982 = vlaneseq
        %v2983 = vshrl.u32 %v2982, 7
        %v2984 = vsub.s32 %v2981, %v2983
        %v2985 = vrot.slane %v2978, %v2984
        %v2986 = vcombine.low %v2754, %v2761
        %v2988 = vunpack.c.l.s4 1983009808
        %v2989 = vunpack.c.0.s8 %v2988
        %v2990 = vlaneseq
        %v2991 = vshrl.u32 %v2990, 7
        %v2992 = vsub.s32 %v2989, %v2991
        %v2993 = vrot.slane %v2986, %v2992
        %v2994 = vcombine.low %v2764, %v2765
        %v2996 = vunpack.c.l.s4 1983009808
        %v2997 = vunpack.c.0.s8 %v2996
        %v2998 = vlaneseq
        %v2999 = vshrl.u32 %v2998, 7
        %v3000 = vsub.s32 %v2997, %v2999
        %v3001 = vrot.slane %v2994, %v3000
        %v3002 = vcombine.low %v2977, %v2985
        %v3003 = vcombine.high %v2977, %v2985
        %v3005 = vunpack.c.l.s4 1934713408
        %v3006 = vunpack.c.0.s8 %v3005
        %v3007 = vlaneseq
        %v3008 = vshrl.u32 %v3007, 7
        %v3009 = vsub.s32 %v3006, %v3008
        %v3010 = vrot.slane %v3002, %v3009
        %v3012 = vunpack.c.l.s4 1934713408
        %v3013 = vunpack.c.0.s8 %v3012
        %v3014 = vlaneseq
        %v3015 = vshrl.u32 %v3014, 7
        %v3016 = vsub.s32 %v3013, %v3015
        %v3017 = vrot.slane %v3003, %v3016
        %v3018 = vcombine.low %v2993, %v3001
        %v3019 = vcombine.high %v2993, %v3001
        %v3021 = vunpack.c.l.s4 1934713408
        %v3022 = vunpack.c.0.s8 %v3021
        %v3023 = vlaneseq
        %v3024 = vshrl.u32 %v3023, 7
        %v3025 = vsub.s32 %v3022, %v3024
        %v3026 = vrot.slane %v3018, %v3025
        %v3028 = vunpack.c.l.s4 1934713408
        %v3029 = vunpack.c.0.s8 %v3028
        %v3030 = vlaneseq
        %v3031 = vshrl.u32 %v3030, 7
        %v3032 = vsub.s32 %v3029, %v3031
        %v3033 = vrot.slane %v3019, %v3032
        %v3034 = vcombine.low %v3010, %v3026
        %v3035 = vcombine.high %v3010, %v3026
        %v3036 = vcombine.low %v3017, %v3033
        %v3037 = vcombine.high %v3017, %v3033
        %v3040 = vpack.i.b16 %v2898, %v2830
        %v3042 = vshrl.u32 %v2830, 16
        %v3043 = vshrl.u32 %v2898, 16
        %v3044 = vpack.i.b16 %v3043, %v3042
        %v3048 = vpack.i.b16 %v2899, %v2831
        %v3050 = vshrl.u32 %v2831, 16
        %v3051 = vshrl.u32 %v2899, 16
        %v3052 = vpack.i.b16 %v3051, %v3050
        %v3056 = vpack.i.b16 %v2900, %v2832
        %v3058 = vshrl.u32 %v2832, 16
        %v3059 = vshrl.u32 %v2900, 16
        %v3060 = vpack.i.b16 %v3059, %v3058
        %v3064 = vpack.i.b16 %v2901, %v2833
        %v3066 = vshrl.u32 %v2833, 16
        %v3067 = vshrl.u32 %v2901, 16
        %v3068 = vpack.i.b16 %v3067, %v3066
        %v3072 = vpack.i.b16 %v3034, %v2966
        %v3074 = vshrl.u32 %v2966, 16
        %v3075 = vshrl.u32 %v3034, 16
        %v3076 = vpack.i.b16 %v3075, %v3074
        %v3080 = vpack.i.b16 %v3035, %v2967
        %v3082 = vshrl.u32 %v2967, 16
        %v3083 = vshrl.u32 %v3035, 16
        %v3084 = vpack.i.b16 %v3083, %v3082
        %v3088 = vpack.i.b16 %v3036, %v2968
        %v3090 = vshrl.u32 %v2968, 16
        %v3091 = vshrl.u32 %v3036, 16
        %v3092 = vpack.i.b16 %v3091, %v3090
        %v3096 = vpack.i.b16 %v3037, %v2969
        %v3098 = vshrl.u32 %v2969, 16
        %v3099 = vshrl.u32 %v3037, 16
        %v3100 = vpack.i.b16 %v3099, %v3098
        %vm3102 = vcmask 130048
        %v3104 = vsel %vm3102, %v1664, 0
        %v3107 = vsel %vm3102, %v1688, 0
        %v3110 = vsel %vm3102, %v2352, 0
        %v3113 = vsel %vm3102, %v2376, 0
        %3115 = vmatprep.subr.bf16.mxu0 0
        %3116 = vmatpush1.bf16.xpose.msra.mxu0 %v3110
        %3117 = vmatprep.subr.bf16.mxu0 0
        %3118 = vmatpush1.bf16.xpose.msra.mxu0 %v3113
        %3119 = vmatprep.subr.bf16.mxu0 0
        %3120 = vmatpush1.bf16.xpose.msra.mxu0 0
        %3121 = vmatprep.subr.bf16.mxu0 0
        %3122 = vmatpush1.bf16.xpose.msra.mxu0 0
        %3123 = vmatprep.subr.bf16.mxu0 0
        %3124 = vmatpush1.bf16.xpose.msra.mxu0 0
        %3125 = vmatprep.subr.bf16.mxu0 0
        %3126 = vmatpush1.bf16.xpose.msra.mxu0 0
        %3127 = vmatprep.subr.bf16.mxu0 0
        %3128 = vmatpush1.bf16.xpose.msra.mxu0 0
        %3129 = vmatprep.subr.bf16.mxu0 0
        %3130 = vmatpush1.bf16.xpose.msra.mxu0 0
        %3131 = vmatprep.subr.bf16.mxu0 0
        %3132 = vmatpush1.bf16.xpose.msra.mxu0 0
        %3133 = vmatprep.subr.bf16.mxu0 0
        %3134 = vmatpush1.bf16.xpose.msra.mxu0 0
        %3135 = vmatprep.subr.bf16.mxu0 0
        %3136 = vmatpush1.bf16.xpose.msra.mxu0 0
        %3137 = vmatprep.subr.bf16.mxu0 0
        %3138 = vmatpush1.bf16.xpose.msra.mxu0 0
        %3139 = vmatprep.subr.bf16.mxu0 0
        %3140 = vmatpush1.bf16.xpose.msra.mxu0 0
        %3141 = vmatprep.subr.bf16.mxu0 0
        %3142 = vmatpush1.bf16.xpose.msra.mxu0 0
        %3143 = vmatprep.subr.bf16.mxu0 0
        %3144 = vmatpush1.bf16.xpose.msra.mxu0 0
        %3145 = vmatprep.subr.bf16.mxu0 0
        %3146 = vmatpush1.bf16.xpose.msra.mxu0 0
        %3147 = vmatprep.mubr.bf16.mxu0 0
        %3148 = vmatmul.mubr.bf16.gmra.mrb[0].mxu0 %v3104
        %v3149 = vpop.f32.mrb[0].mxu0
        %v3150 = vadd.f32 0.0, %v3149
        %v3151 = vpop.f32.mrb[0].mxu0
        %v3152 = vpop.f32.mrb[0].mxu0
        %v3153 = vadd.f32 0.0, %v3152
        %v3154 = vpop.f32.mrb[0].mxu0
        %3155 = vmatprep.mubr.bf16.mxu0 0
        %3156 = vmatmul.mubr.bf16.gmra.mrb[0].mxu0 %v3107
        %v3157 = vpop.f32.mrb[0].mxu0
        %v3158 = vadd.f32 0.0, %v3157
        %v3159 = vpop.f32.mrb[0].mxu0
        %v3160 = vpop.f32.mrb[0].mxu0
        %v3161 = vadd.f32 0.0, %v3160
        %v3162 = vpop.f32.mrb[0].mxu0
        %3163 = vdwg.mxu0
        %v3165 = vsel %vm3102, %v1667, 0
        %v3168 = vsel %vm3102, %v1691, 0
        %v3171 = vsel %vm3102, %v2355, 0
        %v3174 = vsel %vm3102, %v2379, 0
        %3176 = vmatprep.subr.bf16.mxu0 0
        %3177 = vmatpush1.bf16.xpose.msra.mxu0 %v3171
        %3178 = vmatprep.subr.bf16.mxu0 0
        %3179 = vmatpush1.bf16.xpose.msra.mxu0 %v3174
        %3180 = vmatprep.subr.bf16.mxu0 0
        %3181 = vmatpush1.bf16.xpose.msra.mxu0 0
        %3182 = vmatprep.subr.bf16.mxu0 0
        %3183 = vmatpush1.bf16.xpose.msra.mxu0 0
        %3184 = vmatprep.subr.bf16.mxu0 0
        %3185 = vmatpush1.bf16.xpose.msra.mxu0 0
        %3186 = vmatprep.subr.bf16.mxu0 0
        %3187 = vmatpush1.bf16.xpose.msra.mxu0 0
        %3188 = vmatprep.subr.bf16.mxu0 0
        %3189 = vmatpush1.bf16.xpose.msra.mxu0 0
        %3190 = vmatprep.subr.bf16.mxu0 0
        %3191 = vmatpush1.bf16.xpose.msra.mxu0 0
        %3192 = vmatprep.subr.bf16.mxu0 0
        %3193 = vmatpush1.bf16.xpose.msra.mxu0 0
        %3194 = vmatprep.subr.bf16.mxu0 0
        %3195 = vmatpush1.bf16.xpose.msra.mxu0 0
        %3196 = vmatprep.subr.bf16.mxu0 0
        %3197 = vmatpush1.bf16.xpose.msra.mxu0 0
        %3198 = vmatprep.subr.bf16.mxu0 0
        %3199 = vmatpush1.bf16.xpose.msra.mxu0 0
        %3200 = vmatprep.subr.bf16.mxu0 0
        %3201 = vmatpush1.bf16.xpose.msra.mxu0 0
        %3202 = vmatprep.subr.bf16.mxu0 0
        %3203 = vmatpush1.bf16.xpose.msra.mxu0 0
        %3204 = vmatprep.subr.bf16.mxu0 0
        %3205 = vmatpush1.bf16.xpose.msra.mxu0 0
        %3206 = vmatprep.subr.bf16.mxu0 0
        %3207 = vmatpush1.bf16.xpose.msra.mxu0 0
        %3208 = vmatprep.mubr.bf16.mxu0 0
        %3209 = vmatmul.mubr.bf16.gmra.mrb[0].mxu0 %v3165
        %v3210 = vpop.f32.mrb[0].mxu0
        %v3211 = vadd.f32 0.0, %v3210
        %v3212 = vpop.f32.mrb[0].mxu0
        %v3213 = vpop.f32.mrb[0].mxu0
        %v3214 = vadd.f32 0.0, %v3213
        %v3215 = vpop.f32.mrb[0].mxu0
        %3216 = vmatprep.mubr.bf16.mxu0 0
        %3217 = vmatmul.mubr.bf16.gmra.mrb[0].mxu0 %v3168
        %v3218 = vpop.f32.mrb[0].mxu0
        %v3219 = vadd.f32 0.0, %v3218
        %v3220 = vpop.f32.mrb[0].mxu0
        %v3221 = vpop.f32.mrb[0].mxu0
        %v3222 = vadd.f32 0.0, %v3221
        %v3223 = vpop.f32.mrb[0].mxu0
        %3224 = vdwg.mxu0
        %v3226 = vsel %vm3102, %v1670, 0
        %v3229 = vsel %vm3102, %v1694, 0
        %v3232 = vsel %vm3102, %v2358, 0
        %v3235 = vsel %vm3102, %v2382, 0
        %3237 = vmatprep.subr.bf16.mxu0 0
        %3238 = vmatpush1.bf16.xpose.msra.mxu0 %v3232
        %3239 = vmatprep.subr.bf16.mxu0 0
        %3240 = vmatpush1.bf16.xpose.msra.mxu0 %v3235
        %3241 = vmatprep.subr.bf16.mxu0 0
        %3242 = vmatpush1.bf16.xpose.msra.mxu0 0
        %3243 = vmatprep.subr.bf16.mxu0 0
        %3244 = vmatpush1.bf16.xpose.msra.mxu0 0
        %3245 = vmatprep.subr.bf16.mxu0 0
        %3246 = vmatpush1.bf16.xpose.msra.mxu0 0
        %3247 = vmatprep.subr.bf16.mxu0 0
        %3248 = vmatpush1.bf16.xpose.msra.mxu0 0
        %3249 = vmatprep.subr.bf16.mxu0 0
        %3250 = vmatpush1.bf16.xpose.msra.mxu0 0
        %3251 = vmatprep.subr.bf16.mxu0 0
        %3252 = vmatpush1.bf16.xpose.msra.mxu0 0
        %3253 = vmatprep.subr.bf16.mxu0 0
        %3254 = vmatpush1.bf16.xpose.msra.mxu0 0
        %3255 = vmatprep.subr.bf16.mxu0 0
        %3256 = vmatpush1.bf16.xpose.msra.mxu0 0
        %3257 = vmatprep.subr.bf16.mxu0 0
        %3258 = vmatpush1.bf16.xpose.msra.mxu0 0
        %3259 = vmatprep.subr.bf16.mxu0 0
        %3260 = vmatpush1.bf16.xpose.msra.mxu0 0
        %3261 = vmatprep.subr.bf16.mxu0 0
        %3262 = vmatpush1.bf16.xpose.msra.mxu0 0
        %3263 = vmatprep.subr.bf16.mxu0 0
        %3264 = vmatpush1.bf16.xpose.msra.mxu0 0
        %3265 = vmatprep.subr.bf16.mxu0 0
        %3266 = vmatpush1.bf16.xpose.msra.mxu0 0
        %3267 = vmatprep.subr.bf16.mxu0 0
        %3268 = vmatpush1.bf16.xpose.msra.mxu0 0
        %3269 = vmatprep.mubr.bf16.mxu0 0
        %3270 = vmatmul.mubr.bf16.gmra.mrb[0].mxu0 %v3226
        %v3271 = vpop.f32.mrb[0].mxu0
        %v3272 = vadd.f32 0.0, %v3271
        %v3273 = vpop.f32.mrb[0].mxu0
        %v3274 = vpop.f32.mrb[0].mxu0
        %v3275 = vadd.f32 0.0, %v3274
        %v3276 = vpop.f32.mrb[0].mxu0
        %3277 = vmatprep.mubr.bf16.mxu0 0
        %3278 = vmatmul.mubr.bf16.gmra.mrb[0].mxu0 %v3229
        %v3279 = vpop.f32.mrb[0].mxu0
        %v3280 = vadd.f32 0.0, %v3279
        %v3281 = vpop.f32.mrb[0].mxu0
        %v3282 = vpop.f32.mrb[0].mxu0
        %v3283 = vadd.f32 0.0, %v3282
        %v3284 = vpop.f32.mrb[0].mxu0
        %3285 = vdwg.mxu0
        %v3287 = vsel %vm3102, %v1673, 0
        %v3290 = vsel %vm3102, %v1697, 0
        %v3293 = vsel %vm3102, %v2361, 0
        %v3296 = vsel %vm3102, %v2385, 0
        %3298 = vmatprep.subr.bf16.mxu0 0
        %3299 = vmatpush1.bf16.xpose.msra.mxu0 %v3293
        %3300 = vmatprep.subr.bf16.mxu0 0
        %3301 = vmatpush1.bf16.xpose.msra.mxu0 %v3296
        %3302 = vmatprep.subr.bf16.mxu0 0
        %3303 = vmatpush1.bf16.xpose.msra.mxu0 0
        %3304 = vmatprep.subr.bf16.mxu0 0
        %3305 = vmatpush1.bf16.xpose.msra.mxu0 0
        %3306 = vmatprep.subr.bf16.mxu0 0
        %3307 = vmatpush1.bf16.xpose.msra.mxu0 0
        %3308 = vmatprep.subr.bf16.mxu0 0
        %3309 = vmatpush1.bf16.xpose.msra.mxu0 0
        %3310 = vmatprep.subr.bf16.mxu0 0
        %3311 = vmatpush1.bf16.xpose.msra.mxu0 0
        %3312 = vmatprep.subr.bf16.mxu0 0
        %3313 = vmatpush1.bf16.xpose.msra.mxu0 0
        %3314 = vmatprep.subr.bf16.mxu0 0
        %3315 = vmatpush1.bf16.xpose.msra.mxu0 0
        %3316 = vmatprep.subr.bf16.mxu0 0
        %3317 = vmatpush1.bf16.xpose.msra.mxu0 0
        %3318 = vmatprep.subr.bf16.mxu0 0
        %3319 = vmatpush1.bf16.xpose.msra.mxu0 0
        %3320 = vmatprep.subr.bf16.mxu0 0
        %3321 = vmatpush1.bf16.xpose.msra.mxu0 0
        %3322 = vmatprep.subr.bf16.mxu0 0
        %3323 = vmatpush1.bf16.xpose.msra.mxu0 0
        %3324 = vmatprep.subr.bf16.mxu0 0
        %3325 = vmatpush1.bf16.xpose.msra.mxu0 0
        %3326 = vmatprep.subr.bf16.mxu0 0
        %3327 = vmatpush1.bf16.xpose.msra.mxu0 0
        %3328 = vmatprep.subr.bf16.mxu0 0
        %3329 = vmatpush1.bf16.xpose.msra.mxu0 0
        %3330 = vmatprep.mubr.bf16.mxu0 0
        %3331 = vmatmul.mubr.bf16.gmra.mrb[0].mxu0 %v3287
        %v3332 = vpop.f32.mrb[0].mxu0
        %v3333 = vadd.f32 0.0, %v3332
        %v3334 = vpop.f32.mrb[0].mxu0
        %v3335 = vpop.f32.mrb[0].mxu0
        %v3336 = vadd.f32 0.0, %v3335
        %v3337 = vpop.f32.mrb[0].mxu0
        %3338 = vmatprep.mubr.bf16.mxu0 0
        %3339 = vmatmul.mubr.bf16.gmra.mrb[0].mxu0 %v3290
        %v3340 = vpop.f32.mrb[0].mxu0
        %v3341 = vadd.f32 0.0, %v3340
        %v3342 = vpop.f32.mrb[0].mxu0
        %v3343 = vpop.f32.mrb[0].mxu0
        %v3344 = vadd.f32 0.0, %v3343
        %v3345 = vpop.f32.mrb[0].mxu0
        %3346 = vdwg.mxu0
        %v3348 = vsel %vm3102, %v1676, 0
        %v3351 = vsel %vm3102, %v1700, 0
        %v3354 = vsel %vm3102, %v2364, 0
        %v3357 = vsel %vm3102, %v2388, 0
        %3359 = vmatprep.subr.bf16.mxu0 0
        %3360 = vmatpush1.bf16.xpose.msra.mxu0 %v3354
        %3361 = vmatprep.subr.bf16.mxu0 0
        %3362 = vmatpush1.bf16.xpose.msra.mxu0 %v3357
        %3363 = vmatprep.subr.bf16.mxu0 0
        %3364 = vmatpush1.bf16.xpose.msra.mxu0 0
        %3365 = vmatprep.subr.bf16.mxu0 0
        %3366 = vmatpush1.bf16.xpose.msra.mxu0 0
        %3367 = vmatprep.subr.bf16.mxu0 0
        %3368 = vmatpush1.bf16.xpose.msra.mxu0 0
        %3369 = vmatprep.subr.bf16.mxu0 0
        %3370 = vmatpush1.bf16.xpose.msra.mxu0 0
        %3371 = vmatprep.subr.bf16.mxu0 0
        %3372 = vmatpush1.bf16.xpose.msra.mxu0 0
        %3373 = vmatprep.subr.bf16.mxu0 0
        %3374 = vmatpush1.bf16.xpose.msra.mxu0 0
        %3375 = vmatprep.subr.bf16.mxu0 0
        %3376 = vmatpush1.bf16.xpose.msra.mxu0 0
        %3377 = vmatprep.subr.bf16.mxu0 0
        %3378 = vmatpush1.bf16.xpose.msra.mxu0 0
        %3379 = vmatprep.subr.bf16.mxu0 0
        %3380 = vmatpush1.bf16.xpose.msra.mxu0 0
        %3381 = vmatprep.subr.bf16.mxu0 0
        %3382 = vmatpush1.bf16.xpose.msra.mxu0 0
        %3383 = vmatprep.subr.bf16.mxu0 0
        %3384 = vmatpush1.bf16.xpose.msra.mxu0 0
        %3385 = vmatprep.subr.bf16.mxu0 0
        %3386 = vmatpush1.bf16.xpose.msra.mxu0 0
        %3387 = vmatprep.subr.bf16.mxu0 0
        %3388 = vmatpush1.bf16.xpose.msra.mxu0 0
        %3389 = vmatprep.subr.bf16.mxu0 0
        %3390 = vmatpush1.bf16.xpose.msra.mxu0 0
        %3391 = vmatprep.mubr.bf16.mxu0 0
        %3392 = vmatmul.mubr.bf16.gmra.mrb[0].mxu0 %v3348
        %v3393 = vpop.f32.mrb[0].mxu0
        %v3394 = vadd.f32 0.0, %v3393
        %v3395 = vpop.f32.mrb[0].mxu0
        %v3396 = vpop.f32.mrb[0].mxu0
        %v3397 = vadd.f32 0.0, %v3396
        %v3398 = vpop.f32.mrb[0].mxu0
        %3399 = vmatprep.mubr.bf16.mxu0 0
        %3400 = vmatmul.mubr.bf16.gmra.mrb[0].mxu0 %v3351
        %v3401 = vpop.f32.mrb[0].mxu0
        %v3402 = vadd.f32 0.0, %v3401
        %v3403 = vpop.f32.mrb[0].mxu0
        %v3404 = vpop.f32.mrb[0].mxu0
        %v3405 = vadd.f32 0.0, %v3404
        %v3406 = vpop.f32.mrb[0].mxu0
        %3407 = vdwg.mxu0
        %v3409 = vsel %vm3102, %v1679, 0
        %v3412 = vsel %vm3102, %v1703, 0
        %v3415 = vsel %vm3102, %v2367, 0
        %v3418 = vsel %vm3102, %v2391, 0
        %3420 = vmatprep.subr.bf16.mxu0 0
        %3421 = vmatpush1.bf16.xpose.msra.mxu0 %v3415
        %3422 = vmatprep.subr.bf16.mxu0 0
        %3423 = vmatpush1.bf16.xpose.msra.mxu0 %v3418
        %3424 = vmatprep.subr.bf16.mxu0 0
        %3425 = vmatpush1.bf16.xpose.msra.mxu0 0
        %3426 = vmatprep.subr.bf16.mxu0 0
        %3427 = vmatpush1.bf16.xpose.msra.mxu0 0
        %3428 = vmatprep.subr.bf16.mxu0 0
        %3429 = vmatpush1.bf16.xpose.msra.mxu0 0
        %3430 = vmatprep.subr.bf16.mxu0 0
        %3431 = vmatpush1.bf16.xpose.msra.mxu0 0
        %3432 = vmatprep.subr.bf16.mxu0 0
        %3433 = vmatpush1.bf16.xpose.msra.mxu0 0
        %3434 = vmatprep.subr.bf16.mxu0 0
        %3435 = vmatpush1.bf16.xpose.msra.mxu0 0
        %3436 = vmatprep.subr.bf16.mxu0 0
        %3437 = vmatpush1.bf16.xpose.msra.mxu0 0
        %3438 = vmatprep.subr.bf16.mxu0 0
        %3439 = vmatpush1.bf16.xpose.msra.mxu0 0
        %3440 = vmatprep.subr.bf16.mxu0 0
        %3441 = vmatpush1.bf16.xpose.msra.mxu0 0
        %3442 = vmatprep.subr.bf16.mxu0 0
        %3443 = vmatpush1.bf16.xpose.msra.mxu0 0
        %3444 = vmatprep.subr.bf16.mxu0 0
        %3445 = vmatpush1.bf16.xpose.msra.mxu0 0
        %3446 = vmatprep.subr.bf16.mxu0 0
        %3447 = vmatpush1.bf16.xpose.msra.mxu0 0
        %3448 = vmatprep.subr.bf16.mxu0 0
        %3449 = vmatpush1.bf16.xpose.msra.mxu0 0
        %3450 = vmatprep.subr.bf16.mxu0 0
        %3451 = vmatpush1.bf16.xpose.msra.mxu0 0
        %3452 = vmatprep.mubr.bf16.mxu0 0
        %3453 = vmatmul.mubr.bf16.gmra.mrb[0].mxu0 %v3409
        %v3454 = vpop.f32.mrb[0].mxu0
        %v3455 = vadd.f32 0.0, %v3454
        %v3456 = vpop.f32.mrb[0].mxu0
        %v3457 = vpop.f32.mrb[0].mxu0
        %v3458 = vadd.f32 0.0, %v3457
        %v3459 = vpop.f32.mrb[0].mxu0
        %3460 = vmatprep.mubr.bf16.mxu0 0
        %3461 = vmatmul.mubr.bf16.gmra.mrb[0].mxu0 %v3412
        %v3462 = vpop.f32.mrb[0].mxu0
        %v3463 = vadd.f32 0.0, %v3462
        %v3464 = vpop.f32.mrb[0].mxu0
        %v3465 = vpop.f32.mrb[0].mxu0
        %v3466 = vadd.f32 0.0, %v3465
        %v3467 = vpop.f32.mrb[0].mxu0
        %3468 = vdwg.mxu0
        %v3470 = vsel %vm3102, %v1682, 0
        %v3473 = vsel %vm3102, %v1706, 0
        %v3476 = vsel %vm3102, %v2370, 0
        %v3479 = vsel %vm3102, %v2394, 0
        %3481 = vmatprep.subr.bf16.mxu0 0
        %3482 = vmatpush1.bf16.xpose.msra.mxu0 %v3476
        %3483 = vmatprep.subr.bf16.mxu0 0
        %3484 = vmatpush1.bf16.xpose.msra.mxu0 %v3479
        %3485 = vmatprep.subr.bf16.mxu0 0
        %3486 = vmatpush1.bf16.xpose.msra.mxu0 0
        %3487 = vmatprep.subr.bf16.mxu0 0
        %3488 = vmatpush1.bf16.xpose.msra.mxu0 0
        %3489 = vmatprep.subr.bf16.mxu0 0
        %3490 = vmatpush1.bf16.xpose.msra.mxu0 0
        %3491 = vmatprep.subr.bf16.mxu0 0
        %3492 = vmatpush1.bf16.xpose.msra.mxu0 0
        %3493 = vmatprep.subr.bf16.mxu0 0
        %3494 = vmatpush1.bf16.xpose.msra.mxu0 0
        %3495 = vmatprep.subr.bf16.mxu0 0
        %3496 = vmatpush1.bf16.xpose.msra.mxu0 0
        %3497 = vmatprep.subr.bf16.mxu0 0
        %3498 = vmatpush1.bf16.xpose.msra.mxu0 0
        %3499 = vmatprep.subr.bf16.mxu0 0
        %3500 = vmatpush1.bf16.xpose.msra.mxu0 0
        %3501 = vmatprep.subr.bf16.mxu0 0
        %3502 = vmatpush1.bf16.xpose.msra.mxu0 0
        %3503 = vmatprep.subr.bf16.mxu0 0
        %3504 = vmatpush1.bf16.xpose.msra.mxu0 0
        %3505 = vmatprep.subr.bf16.mxu0 0
        %3506 = vmatpush1.bf16.xpose.msra.mxu0 0
        %3507 = vmatprep.subr.bf16.mxu0 0
        %3508 = vmatpush1.bf16.xpose.msra.mxu0 0
        %3509 = vmatprep.subr.bf16.mxu0 0
        %3510 = vmatpush1.bf16.xpose.msra.mxu0 0
        %3511 = vmatprep.subr.bf16.mxu0 0
        %3512 = vmatpush1.bf16.xpose.msra.mxu0 0
        %3513 = vmatprep.mubr.bf16.mxu0 0
        %3514 = vmatmul.mubr.bf16.gmra.mrb[0].mxu0 %v3470
        %v3515 = vpop.f32.mrb[0].mxu0
        %v3516 = vadd.f32 0.0, %v3515
        %v3517 = vpop.f32.mrb[0].mxu0
        %v3518 = vpop.f32.mrb[0].mxu0
        %v3519 = vadd.f32 0.0, %v3518
        %v3520 = vpop.f32.mrb[0].mxu0
        %3521 = vmatprep.mubr.bf16.mxu0 0
        %3522 = vmatmul.mubr.bf16.gmra.mrb[0].mxu0 %v3473
        %v3523 = vpop.f32.mrb[0].mxu0
        %v3524 = vadd.f32 0.0, %v3523
        %v3525 = vpop.f32.mrb[0].mxu0
        %v3526 = vpop.f32.mrb[0].mxu0
        %v3527 = vadd.f32 0.0, %v3526
        %v3528 = vpop.f32.mrb[0].mxu0
        %3529 = vdwg.mxu0
        %v3531 = vsel %vm3102, %v1685, 0
        %v3534 = vsel %vm3102, %v1709, 0
        %v3537 = vsel %vm3102, %v2373, 0
        %v3540 = vsel %vm3102, %v2397, 0
        %3542 = vmatprep.subr.bf16.mxu0 0
        %3543 = vmatpush1.bf16.xpose.msra.mxu0 %v3537
        %3544 = vmatprep.subr.bf16.mxu0 0
        %3545 = vmatpush1.bf16.xpose.msra.mxu0 %v3540
        %3546 = vmatprep.subr.bf16.mxu0 0
        %3547 = vmatpush1.bf16.xpose.msra.mxu0 0
        %3548 = vmatprep.subr.bf16.mxu0 0
        %3549 = vmatpush1.bf16.xpose.msra.mxu0 0
        %3550 = vmatprep.subr.bf16.mxu0 0
        %3551 = vmatpush1.bf16.xpose.msra.mxu0 0
        %3552 = vmatprep.subr.bf16.mxu0 0
        %3553 = vmatpush1.bf16.xpose.msra.mxu0 0
        %3554 = vmatprep.subr.bf16.mxu0 0
        %3555 = vmatpush1.bf16.xpose.msra.mxu0 0
        %3556 = vmatprep.subr.bf16.mxu0 0
        %3557 = vmatpush1.bf16.xpose.msra.mxu0 0
        %3558 = vmatprep.subr.bf16.mxu0 0
        %3559 = vmatpush1.bf16.xpose.msra.mxu0 0
        %3560 = vmatprep.subr.bf16.mxu0 0
        %3561 = vmatpush1.bf16.xpose.msra.mxu0 0
        %3562 = vmatprep.subr.bf16.mxu0 0
        %3563 = vmatpush1.bf16.xpose.msra.mxu0 0
        %3564 = vmatprep.subr.bf16.mxu0 0
        %3565 = vmatpush1.bf16.xpose.msra.mxu0 0
        %3566 = vmatprep.subr.bf16.mxu0 0
        %3567 = vmatpush1.bf16.xpose.msra.mxu0 0
        %3568 = vmatprep.subr.bf16.mxu0 0
        %3569 = vmatpush1.bf16.xpose.msra.mxu0 0
        %3570 = vmatprep.subr.bf16.mxu0 0
        %3571 = vmatpush1.bf16.xpose.msra.mxu0 0
        %3572 = vmatprep.subr.bf16.mxu0 0
        %3573 = vmatpush1.bf16.xpose.msra.mxu0 0
        %3574 = vmatprep.mubr.bf16.mxu0 0
        %3575 = vmatmul.mubr.bf16.gmra.mrb[0].mxu0 %v3531
        %v3576 = vpop.f32.mrb[0].mxu0
        %v3577 = vadd.f32 0.0, %v3576
        %v3578 = vpop.f32.mrb[0].mxu0
        %v3579 = vpop.f32.mrb[0].mxu0
        %v3580 = vadd.f32 0.0, %v3579
        %v3581 = vpop.f32.mrb[0].mxu0
        %3582 = vmatprep.mubr.bf16.mxu0 0
        %3583 = vmatmul.mubr.bf16.gmra.mrb[0].mxu0 %v3534
        %v3584 = vpop.f32.mrb[0].mxu0
        %v3585 = vadd.f32 0.0, %v3584
        %v3586 = vpop.f32.mrb[0].mxu0
        %v3587 = vpop.f32.mrb[0].mxu0
        %v3588 = vadd.f32 0.0, %v3587
        %v3589 = vpop.f32.mrb[0].mxu0
        %3590 = vdwg.mxu0
        %v3591 = vmul.f32 %v3150, 0.25
        %v3592 = vmul.f32 %v3153, 0.25
        %v3593 = vmul.f32 %v3158, 0.25
        %v3594 = vmul.f32 %v3161, 0.25
        %v3595 = vmul.f32 %v3211, 0.25
        %v3596 = vmul.f32 %v3214, 0.25
        %v3597 = vmul.f32 %v3219, 0.25
        %v3598 = vmul.f32 %v3222, 0.25
        %v3599 = vmul.f32 %v3272, 0.25
        %v3600 = vmul.f32 %v3275, 0.25
        %v3601 = vmul.f32 %v3280, 0.25
        %v3602 = vmul.f32 %v3283, 0.25
        %v3603 = vmul.f32 %v3333, 0.25
        %v3604 = vmul.f32 %v3336, 0.25
        %v3605 = vmul.f32 %v3341, 0.25
        %v3606 = vmul.f32 %v3344, 0.25
        %v3607 = vmul.f32 %v3394, 0.25
        %v3608 = vmul.f32 %v3397, 0.25
        %v3609 = vmul.f32 %v3402, 0.25
        %v3610 = vmul.f32 %v3405, 0.25
        %v3611 = vmul.f32 %v3455, 0.25
        %v3612 = vmul.f32 %v3458, 0.25
        %v3613 = vmul.f32 %v3463, 0.25
        %v3614 = vmul.f32 %v3466, 0.25
        %v3615 = vmul.f32 %v3516, 0.25
        %v3616 = vmul.f32 %v3519, 0.25
        %v3617 = vmul.f32 %v3524, 0.25
        %v3618 = vmul.f32 %v3527, 0.25
        %v3619 = vmul.f32 %v3577, 0.25
        %v3620 = vmul.f32 %v3580, 0.25
        %v3621 = vmul.f32 %v3585, 0.25
        %v3622 = vmul.f32 %v3588, 0.25
        %vm3623 = vcmask 261120
        %v3624 = vsel %vm3623, %v3591, -inf
        %3625 = vmax.xlane.f32.xlu0 %v3624
        %v3626 = vpop.xlane.xlu0 %3625
        %v3627 = vsel %vm3623, %v3592, -inf
        %3628 = vmax.xlane.f32.xlu0 %v3627
        %v3629 = vpop.xlane.xlu0 %3628
        %v3630 = vsel %vm3623, %v3593, -inf
        %3631 = vmax.xlane.f32.xlu0 %v3630
        %v3632 = vpop.xlane.xlu0 %3631
        %v3633 = vsel %vm3623, %v3594, -inf
        %3634 = vmax.xlane.f32.xlu0 %v3633
        %v3635 = vpop.xlane.xlu0 %3634
        %v3636 = vsel %vm3623, %v3595, -inf
        %3637 = vmax.xlane.f32.xlu0 %v3636
        %v3638 = vpop.xlane.xlu0 %3637
        %v3639 = vsel %vm3623, %v3596, -inf
        %3640 = vmax.xlane.f32.xlu0 %v3639
        %v3641 = vpop.xlane.xlu0 %3640
        %v3642 = vsel %vm3623, %v3597, -inf
        %3643 = vmax.xlane.f32.xlu0 %v3642
        %v3644 = vpop.xlane.xlu0 %3643
        %v3645 = vsel %vm3623, %v3598, -inf
        %3646 = vmax.xlane.f32.xlu0 %v3645
        %v3647 = vpop.xlane.xlu0 %3646
        %v3648 = vsel %vm3623, %v3599, -inf
        %3649 = vmax.xlane.f32.xlu0 %v3648
        %v3650 = vpop.xlane.xlu0 %3649
        %v3651 = vsel %vm3623, %v3600, -inf
        %3652 = vmax.xlane.f32.xlu0 %v3651
        %v3653 = vpop.xlane.xlu0 %3652
        %v3654 = vsel %vm3623, %v3601, -inf
        %3655 = vmax.xlane.f32.xlu0 %v3654
        %v3656 = vpop.xlane.xlu0 %3655
        %v3657 = vsel %vm3623, %v3602, -inf
        %3658 = vmax.xlane.f32.xlu0 %v3657
        %v3659 = vpop.xlane.xlu0 %3658
        %v3660 = vsel %vm3623, %v3603, -inf
        %3661 = vmax.xlane.f32.xlu0 %v3660
        %v3662 = vpop.xlane.xlu0 %3661
        %v3663 = vsel %vm3623, %v3604, -inf
        %3664 = vmax.xlane.f32.xlu0 %v3663
        %v3665 = vpop.xlane.xlu0 %3664
        %v3666 = vsel %vm3623, %v3605, -inf
        %3667 = vmax.xlane.f32.xlu0 %v3666
        %v3668 = vpop.xlane.xlu0 %3667
        %v3669 = vsel %vm3623, %v3606, -inf
        %3670 = vmax.xlane.f32.xlu0 %v3669
        %v3671 = vpop.xlane.xlu0 %3670
        %v3672 = vsel %vm3623, %v3607, -inf
        %3673 = vmax.xlane.f32.xlu0 %v3672
        %v3674 = vpop.xlane.xlu0 %3673
        %v3675 = vsel %vm3623, %v3608, -inf
        %3676 = vmax.xlane.f32.xlu0 %v3675
        %v3677 = vpop.xlane.xlu0 %3676
        %v3678 = vsel %vm3623, %v3609, -inf
        %3679 = vmax.xlane.f32.xlu0 %v3678
        %v3680 = vpop.xlane.xlu0 %3679
        %v3681 = vsel %vm3623, %v3610, -inf
        %3682 = vmax.xlane.f32.xlu0 %v3681
        %v3683 = vpop.xlane.xlu0 %3682
        %v3684 = vsel %vm3623, %v3611, -inf
        %3685 = vmax.xlane.f32.xlu0 %v3684
        %v3686 = vpop.xlane.xlu0 %3685
        %v3687 = vsel %vm3623, %v3612, -inf
        %3688 = vmax.xlane.f32.xlu0 %v3687
        %v3689 = vpop.xlane.xlu0 %3688
        %v3690 = vsel %vm3623, %v3613, -inf
        %3691 = vmax.xlane.f32.xlu0 %v3690
        %v3692 = vpop.xlane.xlu0 %3691
        %v3693 = vsel %vm3623, %v3614, -inf
        %3694 = vmax.xlane.f32.xlu0 %v3693
        %v3695 = vpop.xlane.xlu0 %3694
        %v3696 = vsel %vm3623, %v3615, -inf
        %3697 = vmax.xlane.f32.xlu0 %v3696
        %v3698 = vpop.xlane.xlu0 %3697
        %v3699 = vsel %vm3623, %v3616, -inf
        %3700 = vmax.xlane.f32.xlu0 %v3699
        %v3701 = vpop.xlane.xlu0 %3700
        %v3702 = vsel %vm3623, %v3617, -inf
        %3703 = vmax.xlane.f32.xlu0 %v3702
        %v3704 = vpop.xlane.xlu0 %3703
        %v3705 = vsel %vm3623, %v3618, -inf
        %3706 = vmax.xlane.f32.xlu0 %v3705
        %v3707 = vpop.xlane.xlu0 %3706
        %v3708 = vsel %vm3623, %v3619, -inf
        %3709 = vmax.xlane.f32.xlu0 %v3708
        %v3710 = vpop.xlane.xlu0 %3709
        %v3711 = vsel %vm3623, %v3620, -inf
        %3712 = vmax.xlane.f32.xlu0 %v3711
        %v3713 = vpop.xlane.xlu0 %3712
        %v3714 = vsel %vm3623, %v3621, -inf
        %3715 = vmax.xlane.f32.xlu0 %v3714
        %v3716 = vpop.xlane.xlu0 %3715
        %v3717 = vsel %vm3623, %v3622, -inf
        %3718 = vmax.xlane.f32.xlu0 %v3717
        %v3719 = vpop.xlane.xlu0 %3718
        %v3720 = vsub.f32 %v3591, %v3626
        %v3721 = vsub.f32 %v3592, %v3629
        %v3722 = vsub.f32 %v3593, %v3632
        %v3723 = vsub.f32 %v3594, %v3635
        %v3724 = vsub.f32 %v3595, %v3638
        %v3725 = vsub.f32 %v3596, %v3641
        %v3726 = vsub.f32 %v3597, %v3644
        %v3727 = vsub.f32 %v3598, %v3647
        %v3728 = vsub.f32 %v3599, %v3650
        %v3729 = vsub.f32 %v3600, %v3653
        %v3730 = vsub.f32 %v3601, %v3656
        %v3731 = vsub.f32 %v3602, %v3659
        %v3732 = vsub.f32 %v3603, %v3662
        %v3733 = vsub.f32 %v3604, %v3665
        %v3734 = vsub.f32 %v3605, %v3668
        %v3735 = vsub.f32 %v3606, %v3671
        %v3736 = vsub.f32 %v3607, %v3674
        %v3737 = vsub.f32 %v3608, %v3677
        %v3738 = vsub.f32 %v3609, %v3680
        %v3739 = vsub.f32 %v3610, %v3683
        %v3740 = vsub.f32 %v3611, %v3686
        %v3741 = vsub.f32 %v3612, %v3689
        %v3742 = vsub.f32 %v3613, %v3692
        %v3743 = vsub.f32 %v3614, %v3695
        %v3744 = vsub.f32 %v3615, %v3698
        %v3745 = vsub.f32 %v3616, %v3701
        %v3746 = vsub.f32 %v3617, %v3704
        %v3747 = vsub.f32 %v3618, %v3707
        %v3748 = vsub.f32 %v3619, %v3710
        %v3749 = vsub.f32 %v3620, %v3713
        %v3750 = vsub.f32 %v3621, %v3716
        %v3751 = vsub.f32 %v3622, %v3719
        %v3752 = vmul.f32 %v3720, 1.442695
        %v3753 = vpow.pop %v3752
        %v3754 = vmul.f32 %v3721, 1.442695
        %v3755 = vpow.pop %v3754
        %v3756 = vmul.f32 %v3722, 1.442695
        %v3757 = vpow.pop %v3756
        %v3758 = vmul.f32 %v3723, 1.442695
        %v3759 = vpow.pop %v3758
        %v3760 = vmul.f32 %v3724, 1.442695
        %v3761 = vpow.pop %v3760
        %v3762 = vmul.f32 %v3725, 1.442695
        %v3763 = vpow.pop %v3762
        %v3764 = vmul.f32 %v3726, 1.442695
        %v3765 = vpow.pop %v3764
        %v3766 = vmul.f32 %v3727, 1.442695
        %v3767 = vpow.pop %v3766
        %v3768 = vmul.f32 %v3728, 1.442695
        %v3769 = vpow.pop %v3768
        %v3770 = vmul.f32 %v3729, 1.442695
        %v3771 = vpow.pop %v3770
        %v3772 = vmul.f32 %v3730, 1.442695
        %v3773 = vpow.pop %v3772
        %v3774 = vmul.f32 %v3731, 1.442695
        %v3775 = vpow.pop %v3774
        %v3776 = vmul.f32 %v3732, 1.442695
        %v3777 = vpow.pop %v3776
        %v3778 = vmul.f32 %v3733, 1.442695
        %v3779 = vpow.pop %v3778
        %v3780 = vmul.f32 %v3734, 1.442695
        %v3781 = vpow.pop %v3780
        %v3782 = vmul.f32 %v3735, 1.442695
        %v3783 = vpow.pop %v3782
        %v3784 = vmul.f32 %v3736, 1.442695
        %v3785 = vpow.pop %v3784
        %v3786 = vmul.f32 %v3737, 1.442695
        %v3787 = vpow.pop %v3786
        %v3788 = vmul.f32 %v3738, 1.442695
        %v3789 = vpow.pop %v3788
        %v3790 = vmul.f32 %v3739, 1.442695
        %v3791 = vpow.pop %v3790
        %v3792 = vmul.f32 %v3740, 1.442695
        %v3793 = vpow.pop %v3792
        %v3794 = vmul.f32 %v3741, 1.442695
        %v3795 = vpow.pop %v3794
        %v3796 = vmul.f32 %v3742, 1.442695
        %v3797 = vpow.pop %v3796
        %v3798 = vmul.f32 %v3743, 1.442695
        %v3799 = vpow.pop %v3798
        %v3800 = vmul.f32 %v3744, 1.442695
        %v3801 = vpow.pop %v3800
        %v3802 = vmul.f32 %v3745, 1.442695
        %v3803 = vpow.pop %v3802
        %v3804 = vmul.f32 %v3746, 1.442695
        %v3805 = vpow.pop %v3804
        %v3806 = vmul.f32 %v3747, 1.442695
        %v3807 = vpow.pop %v3806
        %v3808 = vmul.f32 %v3748, 1.442695
        %v3809 = vpow.pop %v3808
        %v3810 = vmul.f32 %v3749, 1.442695
        %v3811 = vpow.pop %v3810
        %v3812 = vmul.f32 %v3750, 1.442695
        %v3813 = vpow.pop %v3812
        %v3814 = vmul.f32 %v3751, 1.442695
        %v3815 = vpow.pop %v3814
        %v3816 = vsel %vm3623, %v3753, 0.0
        %3817 = vadd.xlane.f32.xlu0 %v3816
        %v3818 = vpop.xlane.xlu0 %3817
        %v3819 = vsel %vm3623, %v3755, 0.0
        %3820 = vadd.xlane.f32.xlu0 %v3819
        %v3821 = vpop.xlane.xlu0 %3820
        %v3822 = vsel %vm3623, %v3757, 0.0
        %3823 = vadd.xlane.f32.xlu0 %v3822
        %v3824 = vpop.xlane.xlu0 %3823
        %v3825 = vsel %vm3623, %v3759, 0.0
        %3826 = vadd.xlane.f32.xlu0 %v3825
        %v3827 = vpop.xlane.xlu0 %3826
        %v3828 = vsel %vm3623, %v3761, 0.0
        %3829 = vadd.xlane.f32.xlu0 %v3828
        %v3830 = vpop.xlane.xlu0 %3829
        %v3831 = vsel %vm3623, %v3763, 0.0
        %3832 = vadd.xlane.f32.xlu0 %v3831
        %v3833 = vpop.xlane.xlu0 %3832
        %v3834 = vsel %vm3623, %v3765, 0.0
        %3835 = vadd.xlane.f32.xlu0 %v3834
        %v3836 = vpop.xlane.xlu0 %3835
        %v3837 = vsel %vm3623, %v3767, 0.0
        %3838 = vadd.xlane.f32.xlu0 %v3837
        %v3839 = vpop.xlane.xlu0 %3838
        %v3840 = vsel %vm3623, %v3769, 0.0
        %3841 = vadd.xlane.f32.xlu0 %v3840
        %v3842 = vpop.xlane.xlu0 %3841
        %v3843 = vsel %vm3623, %v3771, 0.0
        %3844 = vadd.xlane.f32.xlu0 %v3843
        %v3845 = vpop.xlane.xlu0 %3844
        %v3846 = vsel %vm3623, %v3773, 0.0
        %3847 = vadd.xlane.f32.xlu0 %v3846
        %v3848 = vpop.xlane.xlu0 %3847
        %v3849 = vsel %vm3623, %v3775, 0.0
        %3850 = vadd.xlane.f32.xlu0 %v3849
        %v3851 = vpop.xlane.xlu0 %3850
        %v3852 = vsel %vm3623, %v3777, 0.0
        %3853 = vadd.xlane.f32.xlu0 %v3852
        %v3854 = vpop.xlane.xlu0 %3853
        %v3855 = vsel %vm3623, %v3779, 0.0
        %3856 = vadd.xlane.f32.xlu0 %v3855
        %v3857 = vpop.xlane.xlu0 %3856
        %v3858 = vsel %vm3623, %v3781, 0.0
        %3859 = vadd.xlane.f32.xlu0 %v3858
        %v3860 = vpop.xlane.xlu0 %3859
        %v3861 = vsel %vm3623, %v3783, 0.0
        %3862 = vadd.xlane.f32.xlu0 %v3861
        %v3863 = vpop.xlane.xlu0 %3862
        %v3864 = vsel %vm3623, %v3785, 0.0
        %3865 = vadd.xlane.f32.xlu0 %v3864
        %v3866 = vpop.xlane.xlu0 %3865
        %v3867 = vsel %vm3623, %v3787, 0.0
        %3868 = vadd.xlane.f32.xlu0 %v3867
        %v3869 = vpop.xlane.xlu0 %3868
        %v3870 = vsel %vm3623, %v3789, 0.0
        %3871 = vadd.xlane.f32.xlu0 %v3870
        %v3872 = vpop.xlane.xlu0 %3871
        %v3873 = vsel %vm3623, %v3791, 0.0
        %3874 = vadd.xlane.f32.xlu0 %v3873
        %v3875 = vpop.xlane.xlu0 %3874
        %v3876 = vsel %vm3623, %v3793, 0.0
        %3877 = vadd.xlane.f32.xlu0 %v3876
        %v3878 = vpop.xlane.xlu0 %3877
        %v3879 = vsel %vm3623, %v3795, 0.0
        %3880 = vadd.xlane.f32.xlu0 %v3879
        %v3881 = vpop.xlane.xlu0 %3880
        %v3882 = vsel %vm3623, %v3797, 0.0
        %3883 = vadd.xlane.f32.xlu0 %v3882
        %v3884 = vpop.xlane.xlu0 %3883
        %v3885 = vsel %vm3623, %v3799, 0.0
        %3886 = vadd.xlane.f32.xlu0 %v3885
        %v3887 = vpop.xlane.xlu0 %3886
        %v3888 = vsel %vm3623, %v3801, 0.0
        %3889 = vadd.xlane.f32.xlu0 %v3888
        %v3890 = vpop.xlane.xlu0 %3889
        %v3891 = vsel %vm3623, %v3803, 0.0
        %3892 = vadd.xlane.f32.xlu0 %v3891
        %v3893 = vpop.xlane.xlu0 %3892
        %v3894 = vsel %vm3623, %v3805, 0.0
        %3895 = vadd.xlane.f32.xlu0 %v3894
        %v3896 = vpop.xlane.xlu0 %3895
        %v3897 = vsel %vm3623, %v3807, 0.0
        %3898 = vadd.xlane.f32.xlu0 %v3897
        %v3899 = vpop.xlane.xlu0 %3898
        %v3900 = vsel %vm3623, %v3809, 0.0
        %3901 = vadd.xlane.f32.xlu0 %v3900
        %v3902 = vpop.xlane.xlu0 %3901
        %v3903 = vsel %vm3623, %v3811, 0.0
        %3904 = vadd.xlane.f32.xlu0 %v3903
        %v3905 = vpop.xlane.xlu0 %3904
        %v3906 = vsel %vm3623, %v3813, 0.0
        %3907 = vadd.xlane.f32.xlu0 %v3906
        %v3908 = vpop.xlane.xlu0 %3907
        %v3909 = vsel %vm3623, %v3815, 0.0
        %3910 = vadd.xlane.f32.xlu0 %v3909
        %v3911 = vpop.xlane.xlu0 %3910
        %v3912 = vrcp.pop %v3818
        %v3913 = vrcp.pop %v3821
        %v3914 = vrcp.pop %v3824
        %v3915 = vrcp.pop %v3827
        %v3916 = vrcp.pop %v3830
        %v3917 = vrcp.pop %v3833
        %v3918 = vrcp.pop %v3836
        %v3919 = vrcp.pop %v3839
        %v3920 = vrcp.pop %v3842
        %v3921 = vrcp.pop %v3845
        %v3922 = vrcp.pop %v3848
        %v3923 = vrcp.pop %v3851
        %v3924 = vrcp.pop %v3854
        %v3925 = vrcp.pop %v3857
        %v3926 = vrcp.pop %v3860
        %v3927 = vrcp.pop %v3863
        %v3928 = vrcp.pop %v3866
        %v3929 = vrcp.pop %v3869
        %v3930 = vrcp.pop %v3872
        %v3931 = vrcp.pop %v3875
        %v3932 = vrcp.pop %v3878
        %v3933 = vrcp.pop %v3881
        %v3934 = vrcp.pop %v3884
        %v3935 = vrcp.pop %v3887
        %v3936 = vrcp.pop %v3890
        %v3937 = vrcp.pop %v3893
        %v3938 = vrcp.pop %v3896
        %v3939 = vrcp.pop %v3899
        %v3940 = vrcp.pop %v3902
        %v3941 = vrcp.pop %v3905
        %v3942 = vrcp.pop %v3908
        %v3943 = vrcp.pop %v3911
        %v3944 = vmul.f32 %v3753, %v3912
        %v3945 = vmul.f32 %v3755, %v3913
        %v3946 = vmul.f32 %v3757, %v3914
        %v3947 = vmul.f32 %v3759, %v3915
        %v3948 = vmul.f32 %v3761, %v3916
        %v3949 = vmul.f32 %v3763, %v3917
        %v3950 = vmul.f32 %v3765, %v3918
        %v3951 = vmul.f32 %v3767, %v3919
        %v3952 = vmul.f32 %v3769, %v3920
        %v3953 = vmul.f32 %v3771, %v3921
        %v3954 = vmul.f32 %v3773, %v3922
        %v3955 = vmul.f32 %v3775, %v3923
        %v3956 = vmul.f32 %v3777, %v3924
        %v3957 = vmul.f32 %v3779, %v3925
        %v3958 = vmul.f32 %v3781, %v3926
        %v3959 = vmul.f32 %v3783, %v3927
        %v3960 = vmul.f32 %v3785, %v3928
        %v3961 = vmul.f32 %v3787, %v3929
        %v3962 = vmul.f32 %v3789, %v3930
        %v3963 = vmul.f32 %v3791, %v3931
        %v3964 = vmul.f32 %v3793, %v3932
        %v3965 = vmul.f32 %v3795, %v3933
        %v3966 = vmul.f32 %v3797, %v3934
        %v3967 = vmul.f32 %v3799, %v3935
        %v3968 = vmul.f32 %v3801, %v3936
        %v3969 = vmul.f32 %v3803, %v3937
        %v3970 = vmul.f32 %v3805, %v3938
        %v3971 = vmul.f32 %v3807, %v3939
        %v3972 = vmul.f32 %v3809, %v3940
        %v3973 = vmul.f32 %v3811, %v3941
        %v3974 = vmul.f32 %v3813, %v3942
        %v3975 = vmul.f32 %v3815, %v3943
        %v3976 = vpack.c.bf16 %v3945, %v3944
        %v3977 = vpack.c.bf16 %v3947, %v3946
        %v3978 = vpack.c.bf16 %v3949, %v3948
        %v3979 = vpack.c.bf16 %v3951, %v3950
        %v3980 = vpack.c.bf16 %v3953, %v3952
        %v3981 = vpack.c.bf16 %v3955, %v3954
        %v3982 = vpack.c.bf16 %v3957, %v3956
        %v3983 = vpack.c.bf16 %v3959, %v3958
        %v3984 = vpack.c.bf16 %v3961, %v3960
        %v3985 = vpack.c.bf16 %v3963, %v3962
        %v3986 = vpack.c.bf16 %v3965, %v3964
        %v3987 = vpack.c.bf16 %v3967, %v3966
        %v3988 = vpack.c.bf16 %v3969, %v3968
        %v3989 = vpack.c.bf16 %v3971, %v3970
        %v3990 = vpack.c.bf16 %v3973, %v3972
        %v3991 = vpack.c.bf16 %v3975, %v3974
        %v3993 = vsel %vm3623, %v3976, 0
        %v3996 = vsel %vm3623, %v3977, 0
        %3998 = vmatprep.subr.bf16.mxu0 0
        %3999 = vmatpush1.bf16.msra.mxu0 %v3040
        %4000 = vmatprep.subr.bf16.mxu0 0
        %4001 = vmatpush1.bf16.msra.mxu0 %v3072
        %4002 = vmatprep.subr.bf16.mxu0 0
        %4003 = vmatpush1.bf16.msra.mxu0 0
        %4004 = vmatprep.subr.bf16.mxu0 0
        %4005 = vmatpush1.bf16.msra.mxu0 0
        %4006 = vmatprep.subr.bf16.mxu0 0
        %4007 = vmatpush1.bf16.msra.mxu0 0
        %4008 = vmatprep.subr.bf16.mxu0 0
        %4009 = vmatpush1.bf16.msra.mxu0 0
        %4010 = vmatprep.subr.bf16.mxu0 0
        %4011 = vmatpush1.bf16.msra.mxu0 0
        %4012 = vmatprep.subr.bf16.mxu0 0
        %4013 = vmatpush1.bf16.msra.mxu0 0
        %4014 = vmatprep.subr.bf16.mxu0 0
        %4015 = vmatpush1.bf16.msra.mxu0 0
        %4016 = vmatprep.subr.bf16.mxu0 0
        %4017 = vmatpush1.bf16.msra.mxu0 0
        %4018 = vmatprep.subr.bf16.mxu0 0
        %4019 = vmatpush1.bf16.msra.mxu0 0
        %4020 = vmatprep.subr.bf16.mxu0 0
        %4021 = vmatpush1.bf16.msra.mxu0 0
        %4022 = vmatprep.subr.bf16.mxu0 0
        %4023 = vmatpush1.bf16.msra.mxu0 0
        %4024 = vmatprep.subr.bf16.mxu0 0
        %4025 = vmatpush1.bf16.msra.mxu0 0
        %4026 = vmatprep.subr.bf16.mxu0 0
        %4027 = vmatpush1.bf16.msra.mxu0 0
        %4028 = vmatprep.subr.bf16.mxu0 0
        %4029 = vmatpush1.bf16.msra.mxu0 0
        %4030 = vmatprep.mubr.bf16.mxu0 0
        %4031 = vmatmul.mubr.bf16.gmra.mrb[0].mxu0 %v3993
        %v4032 = vpop.f32.mrb[0].mxu0
        %v4033 = vadd.f32 0.0, %v4032
        %v4034 = vpop.f32.mrb[0].mxu0
        %v4035 = vpop.f32.mrb[0].mxu0
        %v4036 = vadd.f32 0.0, %v4035
        %v4037 = vpop.f32.mrb[0].mxu0
        %4038 = vmatprep.mubr.bf16.mxu0 0
        %4039 = vmatmul.mubr.bf16.gmra.mrb[0].mxu0 %v3996
        %v4040 = vpop.f32.mrb[0].mxu0
        %v4041 = vadd.f32 0.0, %v4040
        %v4042 = vpop.f32.mrb[0].mxu0
        %v4043 = vpop.f32.mrb[0].mxu0
        %v4044 = vadd.f32 0.0, %v4043
        %v4045 = vpop.f32.mrb[0].mxu0
        %4046 = vdwg.mxu0
        %v4048 = vsel %vm3623, %v3978, 0
        %v4051 = vsel %vm3623, %v3979, 0
        %4053 = vmatprep.subr.bf16.mxu0 0
        %4054 = vmatpush1.bf16.msra.mxu0 %v3044
        %4055 = vmatprep.subr.bf16.mxu0 0
        %4056 = vmatpush1.bf16.msra.mxu0 %v3076
        %4057 = vmatprep.subr.bf16.mxu0 0
        %4058 = vmatpush1.bf16.msra.mxu0 0
        %4059 = vmatprep.subr.bf16.mxu0 0
        %4060 = vmatpush1.bf16.msra.mxu0 0
        %4061 = vmatprep.subr.bf16.mxu0 0
        %4062 = vmatpush1.bf16.msra.mxu0 0
        %4063 = vmatprep.subr.bf16.mxu0 0
        %4064 = vmatpush1.bf16.msra.mxu0 0
        %4065 = vmatprep.subr.bf16.mxu0 0
        %4066 = vmatpush1.bf16.msra.mxu0 0
        %4067 = vmatprep.subr.bf16.mxu0 0
        %4068 = vmatpush1.bf16.msra.mxu0 0
        %4069 = vmatprep.subr.bf16.mxu0 0
        %4070 = vmatpush1.bf16.msra.mxu0 0
        %4071 = vmatprep.subr.bf16.mxu0 0
        %4072 = vmatpush1.bf16.msra.mxu0 0
        %4073 = vmatprep.subr.bf16.mxu0 0
        %4074 = vmatpush1.bf16.msra.mxu0 0
        %4075 = vmatprep.subr.bf16.mxu0 0
        %4076 = vmatpush1.bf16.msra.mxu0 0
        %4077 = vmatprep.subr.bf16.mxu0 0
        %4078 = vmatpush1.bf16.msra.mxu0 0
        %4079 = vmatprep.subr.bf16.mxu0 0
        %4080 = vmatpush1.bf16.msra.mxu0 0
        %4081 = vmatprep.subr.bf16.mxu0 0
        %4082 = vmatpush1.bf16.msra.mxu0 0
        %4083 = vmatprep.subr.bf16.mxu0 0
        %4084 = vmatpush1.bf16.msra.mxu0 0
        %4085 = vmatprep.mubr.bf16.mxu0 0
        %4086 = vmatmul.mubr.bf16.gmra.mrb[0].mxu0 %v4048
        %v4087 = vpop.f32.mrb[0].mxu0
        %v4088 = vadd.f32 0.0, %v4087
        %v4089 = vpop.f32.mrb[0].mxu0
        %v4090 = vpop.f32.mrb[0].mxu0
        %v4091 = vadd.f32 0.0, %v4090
        %v4092 = vpop.f32.mrb[0].mxu0
        %4093 = vmatprep.mubr.bf16.mxu0 0
        %4094 = vmatmul.mubr.bf16.gmra.mrb[0].mxu0 %v4051
        %v4095 = vpop.f32.mrb[0].mxu0
        %v4096 = vadd.f32 0.0, %v4095
        %v4097 = vpop.f32.mrb[0].mxu0
        %v4098 = vpop.f32.mrb[0].mxu0
        %v4099 = vadd.f32 0.0, %v4098
        %v4100 = vpop.f32.mrb[0].mxu0
        %4101 = vdwg.mxu0
        %v4103 = vsel %vm3623, %v3980, 0
        %v4106 = vsel %vm3623, %v3981, 0
        %4108 = vmatprep.subr.bf16.mxu0 0
        %4109 = vmatpush1.bf16.msra.mxu0 %v3048
        %4110 = vmatprep.subr.bf16.mxu0 0
        %4111 = vmatpush1.bf16.msra.mxu0 %v3080
        %4112 = vmatprep.subr.bf16.mxu0 0
        %4113 = vmatpush1.bf16.msra.mxu0 0
        %4114 = vmatprep.subr.bf16.mxu0 0
        %4115 = vmatpush1.bf16.msra.mxu0 0
        %4116 = vmatprep.subr.bf16.mxu0 0
        %4117 = vmatpush1.bf16.msra.mxu0 0
        %4118 = vmatprep.subr.bf16.mxu0 0
        %4119 = vmatpush1.bf16.msra.mxu0 0
        %4120 = vmatprep.subr.bf16.mxu0 0
        %4121 = vmatpush1.bf16.msra.mxu0 0
        %4122 = vmatprep.subr.bf16.mxu0 0
        %4123 = vmatpush1.bf16.msra.mxu0 0
        %4124 = vmatprep.subr.bf16.mxu0 0
        %4125 = vmatpush1.bf16.msra.mxu0 0
        %4126 = vmatprep.subr.bf16.mxu0 0
        %4127 = vmatpush1.bf16.msra.mxu0 0
        %4128 = vmatprep.subr.bf16.mxu0 0
        %4129 = vmatpush1.bf16.msra.mxu0 0
        %4130 = vmatprep.subr.bf16.mxu0 0
        %4131 = vmatpush1.bf16.msra.mxu0 0
        %4132 = vmatprep.subr.bf16.mxu0 0
        %4133 = vmatpush1.bf16.msra.mxu0 0
        %4134 = vmatprep.subr.bf16.mxu0 0
        %4135 = vmatpush1.bf16.msra.mxu0 0
        %4136 = vmatprep.subr.bf16.mxu0 0
        %4137 = vmatpush1.bf16.msra.mxu0 0
        %4138 = vmatprep.subr.bf16.mxu0 0
        %4139 = vmatpush1.bf16.msra.mxu0 0
        %4140 = vmatprep.mubr.bf16.mxu0 0
        %4141 = vmatmul.mubr.bf16.gmra.mrb[0].mxu0 %v4103
        %v4142 = vpop.f32.mrb[0].mxu0
        %v4143 = vadd.f32 0.0, %v4142
        %v4144 = vpop.f32.mrb[0].mxu0
        %v4145 = vpop.f32.mrb[0].mxu0
        %v4146 = vadd.f32 0.0, %v4145
        %v4147 = vpop.f32.mrb[0].mxu0
        %4148 = vmatprep.mubr.bf16.mxu0 0
        %4149 = vmatmul.mubr.bf16.gmra.mrb[0].mxu0 %v4106
        %v4150 = vpop.f32.mrb[0].mxu0
        %v4151 = vadd.f32 0.0, %v4150
        %v4152 = vpop.f32.mrb[0].mxu0
        %v4153 = vpop.f32.mrb[0].mxu0
        %v4154 = vadd.f32 0.0, %v4153
        %v4155 = vpop.f32.mrb[0].mxu0
        %4156 = vdwg.mxu0
        %v4158 = vsel %vm3623, %v3982, 0
        %v4161 = vsel %vm3623, %v3983, 0
        %4163 = vmatprep.subr.bf16.mxu0 0
        %4164 = vmatpush1.bf16.msra.mxu0 %v3052
        %4165 = vmatprep.subr.bf16.mxu0 0
        %4166 = vmatpush1.bf16.msra.mxu0 %v3084
        %4167 = vmatprep.subr.bf16.mxu0 0
        %4168 = vmatpush1.bf16.msra.mxu0 0
        %4169 = vmatprep.subr.bf16.mxu0 0
        %4170 = vmatpush1.bf16.msra.mxu0 0
        %4171 = vmatprep.subr.bf16.mxu0 0
        %4172 = vmatpush1.bf16.msra.mxu0 0
        %4173 = vmatprep.subr.bf16.mxu0 0
        %4174 = vmatpush1.bf16.msra.mxu0 0
        %4175 = vmatprep.subr.bf16.mxu0 0
        %4176 = vmatpush1.bf16.msra.mxu0 0
        %4177 = vmatprep.subr.bf16.mxu0 0
        %4178 = vmatpush1.bf16.msra.mxu0 0
        %4179 = vmatprep.subr.bf16.mxu0 0
        %4180 = vmatpush1.bf16.msra.mxu0 0
        %4181 = vmatprep.subr.bf16.mxu0 0
        %4182 = vmatpush1.bf16.msra.mxu0 0
        %4183 = vmatprep.subr.bf16.mxu0 0
        %4184 = vmatpush1.bf16.msra.mxu0 0
        %4185 = vmatprep.subr.bf16.mxu0 0
        %4186 = vmatpush1.bf16.msra.mxu0 0
        %4187 = vmatprep.subr.bf16.mxu0 0
        %4188 = vmatpush1.bf16.msra.mxu0 0
        %4189 = vmatprep.subr.bf16.mxu0 0
        %4190 = vmatpush1.bf16.msra.mxu0 0
        %4191 = vmatprep.subr.bf16.mxu0 0
        %4192 = vmatpush1.bf16.msra.mxu0 0
        %4193 = vmatprep.subr.bf16.mxu0 0
        %4194 = vmatpush1.bf16.msra.mxu0 0
        %4195 = vmatprep.mubr.bf16.mxu0 0
        %4196 = vmatmul.mubr.bf16.gmra.mrb[0].mxu0 %v4158
        %v4197 = vpop.f32.mrb[0].mxu0
        %v4198 = vadd.f32 0.0, %v4197
        %v4199 = vpop.f32.mrb[0].mxu0
        %v4200 = vpop.f32.mrb[0].mxu0
        %v4201 = vadd.f32 0.0, %v4200
        %v4202 = vpop.f32.mrb[0].mxu0
        %4203 = vmatprep.mubr.bf16.mxu0 0
        %4204 = vmatmul.mubr.bf16.gmra.mrb[0].mxu0 %v4161
        %v4205 = vpop.f32.mrb[0].mxu0
        %v4206 = vadd.f32 0.0, %v4205
        %v4207 = vpop.f32.mrb[0].mxu0
        %v4208 = vpop.f32.mrb[0].mxu0
        %v4209 = vadd.f32 0.0, %v4208
        %v4210 = vpop.f32.mrb[0].mxu0
        %4211 = vdwg.mxu0
        %v4213 = vsel %vm3623, %v3984, 0
        %v4216 = vsel %vm3623, %v3985, 0
        %4218 = vmatprep.subr.bf16.mxu0 0
        %4219 = vmatpush1.bf16.msra.mxu0 %v3056
        %4220 = vmatprep.subr.bf16.mxu0 0
        %4221 = vmatpush1.bf16.msra.mxu0 %v3088
        %4222 = vmatprep.subr.bf16.mxu0 0
        %4223 = vmatpush1.bf16.msra.mxu0 0
        %4224 = vmatprep.subr.bf16.mxu0 0
        %4225 = vmatpush1.bf16.msra.mxu0 0
        %4226 = vmatprep.subr.bf16.mxu0 0
        %4227 = vmatpush1.bf16.msra.mxu0 0
        %4228 = vmatprep.subr.bf16.mxu0 0
        %4229 = vmatpush1.bf16.msra.mxu0 0
        %4230 = vmatprep.subr.bf16.mxu0 0
        %4231 = vmatpush1.bf16.msra.mxu0 0
        %4232 = vmatprep.subr.bf16.mxu0 0
        %4233 = vmatpush1.bf16.msra.mxu0 0
        %4234 = vmatprep.subr.bf16.mxu0 0
        %4235 = vmatpush1.bf16.msra.mxu0 0
        %4236 = vmatprep.subr.bf16.mxu0 0
        %4237 = vmatpush1.bf16.msra.mxu0 0
        %4238 = vmatprep.subr.bf16.mxu0 0
        %4239 = vmatpush1.bf16.msra.mxu0 0
        %4240 = vmatprep.subr.bf16.mxu0 0
        %4241 = vmatpush1.bf16.msra.mxu0 0
        %4242 = vmatprep.subr.bf16.mxu0 0
        %4243 = vmatpush1.bf16.msra.mxu0 0
        %4244 = vmatprep.subr.bf16.mxu0 0
        %4245 = vmatpush1.bf16.msra.mxu0 0
        %4246 = vmatprep.subr.bf16.mxu0 0
        %4247 = vmatpush1.bf16.msra.mxu0 0
        %4248 = vmatprep.subr.bf16.mxu0 0
        %4249 = vmatpush1.bf16.msra.mxu0 0
        %4250 = vmatprep.mubr.bf16.mxu0 0
        %4251 = vmatmul.mubr.bf16.gmra.mrb[0].mxu0 %v4213
        %v4252 = vpop.f32.mrb[0].mxu0
        %v4253 = vadd.f32 0.0, %v4252
        %v4254 = vpop.f32.mrb[0].mxu0
        %v4255 = vpop.f32.mrb[0].mxu0
        %v4256 = vadd.f32 0.0, %v4255
        %v4257 = vpop.f32.mrb[0].mxu0
        %4258 = vmatprep.mubr.bf16.mxu0 0
        %4259 = vmatmul.mubr.bf16.gmra.mrb[0].mxu0 %v4216
        %v4260 = vpop.f32.mrb[0].mxu0
        %v4261 = vadd.f32 0.0, %v4260
        %v4262 = vpop.f32.mrb[0].mxu0
        %v4263 = vpop.f32.mrb[0].mxu0
        %v4264 = vadd.f32 0.0, %v4263
        %v4265 = vpop.f32.mrb[0].mxu0
        %4266 = vdwg.mxu0
        %v4268 = vsel %vm3623, %v3986, 0
        %v4271 = vsel %vm3623, %v3987, 0
        %4273 = vmatprep.subr.bf16.mxu0 0
        %4274 = vmatpush1.bf16.msra.mxu0 %v3060
        %4275 = vmatprep.subr.bf16.mxu0 0
        %4276 = vmatpush1.bf16.msra.mxu0 %v3092
        %4277 = vmatprep.subr.bf16.mxu0 0
        %4278 = vmatpush1.bf16.msra.mxu0 0
        %4279 = vmatprep.subr.bf16.mxu0 0
        %4280 = vmatpush1.bf16.msra.mxu0 0
        %4281 = vmatprep.subr.bf16.mxu0 0
        %4282 = vmatpush1.bf16.msra.mxu0 0
        %4283 = vmatprep.subr.bf16.mxu0 0
        %4284 = vmatpush1.bf16.msra.mxu0 0
        %4285 = vmatprep.subr.bf16.mxu0 0
        %4286 = vmatpush1.bf16.msra.mxu0 0
        %4287 = vmatprep.subr.bf16.mxu0 0
        %4288 = vmatpush1.bf16.msra.mxu0 0
        %4289 = vmatprep.subr.bf16.mxu0 0
        %4290 = vmatpush1.bf16.msra.mxu0 0
        %4291 = vmatprep.subr.bf16.mxu0 0
        %4292 = vmatpush1.bf16.msra.mxu0 0
        %4293 = vmatprep.subr.bf16.mxu0 0
        %4294 = vmatpush1.bf16.msra.mxu0 0
        %4295 = vmatprep.subr.bf16.mxu0 0
        %4296 = vmatpush1.bf16.msra.mxu0 0
        %4297 = vmatprep.subr.bf16.mxu0 0
        %4298 = vmatpush1.bf16.msra.mxu0 0
        %4299 = vmatprep.subr.bf16.mxu0 0
        %4300 = vmatpush1.bf16.msra.mxu0 0
        %4301 = vmatprep.subr.bf16.mxu0 0
        %4302 = vmatpush1.bf16.msra.mxu0 0
        %4303 = vmatprep.subr.bf16.mxu0 0
        %4304 = vmatpush1.bf16.msra.mxu0 0
        %4305 = vmatprep.mubr.bf16.mxu0 0
        %4306 = vmatmul.mubr.bf16.gmra.mrb[0].mxu0 %v4268
        %v4307 = vpop.f32.mrb[0].mxu0
        %v4308 = vadd.f32 0.0, %v4307
        %v4309 = vpop.f32.mrb[0].mxu0
        %v4310 = vpop.f32.mrb[0].mxu0
        %v4311 = vadd.f32 0.0, %v4310
        %v4312 = vpop.f32.mrb[0].mxu0
        %4313 = vmatprep.mubr.bf16.mxu0 0
        %4314 = vmatmul.mubr.bf16.gmra.mrb[0].mxu0 %v4271
        %v4315 = vpop.f32.mrb[0].mxu0
        %v4316 = vadd.f32 0.0, %v4315
        %v4317 = vpop.f32.mrb[0].mxu0
        %v4318 = vpop.f32.mrb[0].mxu0
        %v4319 = vadd.f32 0.0, %v4318
        %v4320 = vpop.f32.mrb[0].mxu0
        %4321 = vdwg.mxu0
        %v4323 = vsel %vm3623, %v3988, 0
        %v4326 = vsel %vm3623, %v3989, 0
        %4328 = vmatprep.subr.bf16.mxu0 0
        %4329 = vmatpush1.bf16.msra.mxu0 %v3064
        %4330 = vmatprep.subr.bf16.mxu0 0
        %4331 = vmatpush1.bf16.msra.mxu0 %v3096
        %4332 = vmatprep.subr.bf16.mxu0 0
        %4333 = vmatpush1.bf16.msra.mxu0 0
        %4334 = vmatprep.subr.bf16.mxu0 0
        %4335 = vmatpush1.bf16.msra.mxu0 0
        %4336 = vmatprep.subr.bf16.mxu0 0
        %4337 = vmatpush1.bf16.msra.mxu0 0
        %4338 = vmatprep.subr.bf16.mxu0 0
        %4339 = vmatpush1.bf16.msra.mxu0 0
        %4340 = vmatprep.subr.bf16.mxu0 0
        %4341 = vmatpush1.bf16.msra.mxu0 0
        %4342 = vmatprep.subr.bf16.mxu0 0
        %4343 = vmatpush1.bf16.msra.mxu0 0
        %4344 = vmatprep.subr.bf16.mxu0 0
        %4345 = vmatpush1.bf16.msra.mxu0 0
        %4346 = vmatprep.subr.bf16.mxu0 0
        %4347 = vmatpush1.bf16.msra.mxu0 0
        %4348 = vmatprep.subr.bf16.mxu0 0
        %4349 = vmatpush1.bf16.msra.mxu0 0
        %4350 = vmatprep.subr.bf16.mxu0 0
        %4351 = vmatpush1.bf16.msra.mxu0 0
        %4352 = vmatprep.subr.bf16.mxu0 0
        %4353 = vmatpush1.bf16.msra.mxu0 0
        %4354 = vmatprep.subr.bf16.mxu0 0
        %4355 = vmatpush1.bf16.msra.mxu0 0
        %4356 = vmatprep.subr.bf16.mxu0 0
        %4357 = vmatpush1.bf16.msra.mxu0 0
        %4358 = vmatprep.subr.bf16.mxu0 0
        %4359 = vmatpush1.bf16.msra.mxu0 0
        %4360 = vmatprep.mubr.bf16.mxu0 0
        %4361 = vmatmul.mubr.bf16.gmra.mrb[0].mxu0 %v4323
        %v4362 = vpop.f32.mrb[0].mxu0
        %v4363 = vadd.f32 0.0, %v4362
        %v4364 = vpop.f32.mrb[0].mxu0
        %v4365 = vpop.f32.mrb[0].mxu0
        %v4366 = vadd.f32 0.0, %v4365
        %v4367 = vpop.f32.mrb[0].mxu0
        %4368 = vmatprep.mubr.bf16.mxu0 0
        %4369 = vmatmul.mubr.bf16.gmra.mrb[0].mxu0 %v4326
        %v4370 = vpop.f32.mrb[0].mxu0
        %v4371 = vadd.f32 0.0, %v4370
        %v4372 = vpop.f32.mrb[0].mxu0
        %v4373 = vpop.f32.mrb[0].mxu0
        %v4374 = vadd.f32 0.0, %v4373
        %v4375 = vpop.f32.mrb[0].mxu0
        %4376 = vdwg.mxu0
        %v4378 = vsel %vm3623, %v3990, 0
        %v4381 = vsel %vm3623, %v3991, 0
        %4383 = vmatprep.subr.bf16.mxu0 0
        %4384 = vmatpush1.bf16.msra.mxu0 %v3068
        %4385 = vmatprep.subr.bf16.mxu0 0
        %4386 = vmatpush1.bf16.msra.mxu0 %v3100
        %4387 = vmatprep.subr.bf16.mxu0 0
        %4388 = vmatpush1.bf16.msra.mxu0 0
        %4389 = vmatprep.subr.bf16.mxu0 0
        %4390 = vmatpush1.bf16.msra.mxu0 0
        %4391 = vmatprep.subr.bf16.mxu0 0
        %4392 = vmatpush1.bf16.msra.mxu0 0
        %4393 = vmatprep.subr.bf16.mxu0 0
        %4394 = vmatpush1.bf16.msra.mxu0 0
        %4395 = vmatprep.subr.bf16.mxu0 0
        %4396 = vmatpush1.bf16.msra.mxu0 0
        %4397 = vmatprep.subr.bf16.mxu0 0
        %4398 = vmatpush1.bf16.msra.mxu0 0
        %4399 = vmatprep.subr.bf16.mxu0 0
        %4400 = vmatpush1.bf16.msra.mxu0 0
        %4401 = vmatprep.subr.bf16.mxu0 0
        %4402 = vmatpush1.bf16.msra.mxu0 0
        %4403 = vmatprep.subr.bf16.mxu0 0
        %4404 = vmatpush1.bf16.msra.mxu0 0
        %4405 = vmatprep.subr.bf16.mxu0 0
        %4406 = vmatpush1.bf16.msra.mxu0 0
        %4407 = vmatprep.subr.bf16.mxu0 0
        %4408 = vmatpush1.bf16.msra.mxu0 0
        %4409 = vmatprep.subr.bf16.mxu0 0
        %4410 = vmatpush1.bf16.msra.mxu0 0
        %4411 = vmatprep.subr.bf16.mxu0 0
        %4412 = vmatpush1.bf16.msra.mxu0 0
        %4413 = vmatprep.subr.bf16.mxu0 0
        %4414 = vmatpush1.bf16.msra.mxu0 0
        %4415 = vmatprep.mubr.bf16.mxu0 0
        %4416 = vmatmul.mubr.bf16.gmra.mrb[0].mxu0 %v4378
        %v4417 = vpop.f32.mrb[0].mxu0
        %v4418 = vadd.f32 0.0, %v4417
        %v4419 = vpop.f32.mrb[0].mxu0
        %v4420 = vpop.f32.mrb[0].mxu0
        %v4421 = vadd.f32 0.0, %v4420
        %v4422 = vpop.f32.mrb[0].mxu0
        %4423 = vmatprep.mubr.bf16.mxu0 0
        %4424 = vmatmul.mubr.bf16.gmra.mrb[0].mxu0 %v4381
        %v4425 = vpop.f32.mrb[0].mxu0
        %v4426 = vadd.f32 0.0, %v4425
        %v4427 = vpop.f32.mrb[0].mxu0
        %v4428 = vpop.f32.mrb[0].mxu0
        %v4429 = vadd.f32 0.0, %v4428
        %v4430 = vpop.f32.mrb[0].mxu0
        %4431 = vdwg.mxu0
        %v4432 = vcombine.low %v4033, %v4143
        %v4433 = vcombine.high %v4033, %v4143
        %v4435 = vunpack.c.l.s4 1983009808
        %v4436 = vunpack.c.0.s8 %v4435
        %v4437 = vlaneseq
        %v4438 = vshrl.u32 %v4437, 7
        %v4439 = vsub.s32 %v4436, %v4438
        %v4440 = vrot.slane %v4432, %v4439
        %v4442 = vunpack.c.l.s4 1983009808
        %v4443 = vunpack.c.0.s8 %v4442
        %v4444 = vlaneseq
        %v4445 = vshrl.u32 %v4444, 7
        %v4446 = vsub.s32 %v4443, %v4445
        %v4447 = vrot.slane %v4433, %v4446
        %v4448 = vcombine.low %v4088, %v4198
        %v4449 = vcombine.high %v4088, %v4198
        %v4451 = vunpack.c.l.s4 1983009808
        %v4452 = vunpack.c.0.s8 %v4451
        %v4453 = vlaneseq
        %v4454 = vshrl.u32 %v4453, 7
        %v4455 = vsub.s32 %v4452, %v4454
        %v4456 = vrot.slane %v4448, %v4455
        %v4458 = vunpack.c.l.s4 1983009808
        %v4459 = vunpack.c.0.s8 %v4458
        %v4460 = vlaneseq
        %v4461 = vshrl.u32 %v4460, 7
        %v4462 = vsub.s32 %v4459, %v4461
        %v4463 = vrot.slane %v4449, %v4462
        %v4464 = vcombine.low %v4253, %v4363
        %v4465 = vcombine.high %v4253, %v4363
        %v4467 = vunpack.c.l.s4 1983009808
        %v4468 = vunpack.c.0.s8 %v4467
        %v4469 = vlaneseq
        %v4470 = vshrl.u32 %v4469, 7
        %v4471 = vsub.s32 %v4468, %v4470
        %v4472 = vrot.slane %v4464, %v4471
        %v4474 = vunpack.c.l.s4 1983009808
        %v4475 = vunpack.c.0.s8 %v4474
        %v4476 = vlaneseq
        %v4477 = vshrl.u32 %v4476, 7
        %v4478 = vsub.s32 %v4475, %v4477
        %v4479 = vrot.slane %v4465, %v4478
        %v4480 = vcombine.low %v4308, %v4418
        %v4481 = vcombine.high %v4308, %v4418
        %v4483 = vunpack.c.l.s4 1983009808
        %v4484 = vunpack.c.0.s8 %v4483
        %v4485 = vlaneseq
        %v4486 = vshrl.u32 %v4485, 7
        %v4487 = vsub.s32 %v4484, %v4486
        %v4488 = vrot.slane %v4480, %v4487
        %v4490 = vunpack.c.l.s4 1983009808
        %v4491 = vunpack.c.0.s8 %v4490
        %v4492 = vlaneseq
        %v4493 = vshrl.u32 %v4492, 7
        %v4494 = vsub.s32 %v4491, %v4493
        %v4495 = vrot.slane %v4481, %v4494
        %v4496 = vcombine.low %v4440, %v4456
        %v4497 = vcombine.high %v4440, %v4456
        %v4499 = vunpack.c.l.s4 1934713408
        %v4500 = vunpack.c.0.s8 %v4499
        %v4501 = vlaneseq
        %v4502 = vshrl.u32 %v4501, 7
        %v4503 = vsub.s32 %v4500, %v4502
        %v4504 = vrot.slane %v4496, %v4503
        %v4506 = vunpack.c.l.s4 1934713408
        %v4507 = vunpack.c.0.s8 %v4506
        %v4508 = vlaneseq
        %v4509 = vshrl.u32 %v4508, 7
        %v4510 = vsub.s32 %v4507, %v4509
        %v4511 = vrot.slane %v4497, %v4510
        %v4512 = vcombine.low %v4447, %v4463
        %v4513 = vcombine.high %v4447, %v4463
        %v4515 = vunpack.c.l.s4 1934713408
        %v4516 = vunpack.c.0.s8 %v4515
        %v4517 = vlaneseq
        %v4518 = vshrl.u32 %v4517, 7
        %v4519 = vsub.s32 %v4516, %v4518
        %v4520 = vrot.slane %v4512, %v4519
        %v4522 = vunpack.c.l.s4 1934713408
        %v4523 = vunpack.c.0.s8 %v4522
        %v4524 = vlaneseq
        %v4525 = vshrl.u32 %v4524, 7
        %v4526 = vsub.s32 %v4523, %v4525
        %v4527 = vrot.slane %v4513, %v4526
        %v4528 = vcombine.low %v4472, %v4488
        %v4529 = vcombine.high %v4472, %v4488
        %v4531 = vunpack.c.l.s4 1934713408
        %v4532 = vunpack.c.0.s8 %v4531
        %v4533 = vlaneseq
        %v4534 = vshrl.u32 %v4533, 7
        %v4535 = vsub.s32 %v4532, %v4534
        %v4536 = vrot.slane %v4528, %v4535
        %v4538 = vunpack.c.l.s4 1934713408
        %v4539 = vunpack.c.0.s8 %v4538
        %v4540 = vlaneseq
        %v4541 = vshrl.u32 %v4540, 7
        %v4542 = vsub.s32 %v4539, %v4541
        %v4543 = vrot.slane %v4529, %v4542
        %v4544 = vcombine.low %v4479, %v4495
        %v4545 = vcombine.high %v4479, %v4495
        %v4547 = vunpack.c.l.s4 1934713408
        %v4548 = vunpack.c.0.s8 %v4547
        %v4549 = vlaneseq
        %v4550 = vshrl.u32 %v4549, 7
        %v4551 = vsub.s32 %v4548, %v4550
        %v4552 = vrot.slane %v4544, %v4551
        %v4554 = vunpack.c.l.s4 1934713408
        %v4555 = vunpack.c.0.s8 %v4554
        %v4556 = vlaneseq
        %v4557 = vshrl.u32 %v4556, 7
        %v4558 = vsub.s32 %v4555, %v4557
        %v4559 = vrot.slane %v4545, %v4558
        %v4560 = vcombine.low %v4504, %v4536
        %v4561 = vcombine.high %v4504, %v4536
        %v4562 = vcombine.low %v4511, %v4543
        %v4563 = vcombine.high %v4511, %v4543
        %v4564 = vcombine.low %v4520, %v4552
        %v4565 = vcombine.high %v4520, %v4552
        %v4566 = vcombine.low %v4527, %v4559
        %v4567 = vcombine.high %v4527, %v4559
        %v4568 = vcombine.low %v4036, %v4146
        %v4569 = vcombine.high %v4036, %v4146
        %v4571 = vunpack.c.l.s4 1983009808
        %v4572 = vunpack.c.0.s8 %v4571
        %v4573 = vlaneseq
        %v4574 = vshrl.u32 %v4573, 7
        %v4575 = vsub.s32 %v4572, %v4574
        %v4576 = vrot.slane %v4568, %v4575
        %v4578 = vunpack.c.l.s4 1983009808
        %v4579 = vunpack.c.0.s8 %v4578
        %v4580 = vlaneseq
        %v4581 = vshrl.u32 %v4580, 7
        %v4582 = vsub.s32 %v4579, %v4581
        %v4583 = vrot.slane %v4569, %v4582
        %v4584 = vcombine.low %v4091, %v4201
        %v4585 = vcombine.high %v4091, %v4201
        %v4587 = vunpack.c.l.s4 1983009808
        %v4588 = vunpack.c.0.s8 %v4587
        %v4589 = vlaneseq
        %v4590 = vshrl.u32 %v4589, 7
        %v4591 = vsub.s32 %v4588, %v4590
        %v4592 = vrot.slane %v4584, %v4591
        %v4594 = vunpack.c.l.s4 1983009808
        %v4595 = vunpack.c.0.s8 %v4594
        %v4596 = vlaneseq
        %v4597 = vshrl.u32 %v4596, 7
        %v4598 = vsub.s32 %v4595, %v4597
        %v4599 = vrot.slane %v4585, %v4598
        %v4600 = vcombine.low %v4256, %v4366
        %v4601 = vcombine.high %v4256, %v4366
        %v4603 = vunpack.c.l.s4 1983009808
        %v4604 = vunpack.c.0.s8 %v4603
        %v4605 = vlaneseq
        %v4606 = vshrl.u32 %v4605, 7
        %v4607 = vsub.s32 %v4604, %v4606
        %v4608 = vrot.slane %v4600, %v4607
        %v4610 = vunpack.c.l.s4 1983009808
        %v4611 = vunpack.c.0.s8 %v4610
        %v4612 = vlaneseq
        %v4613 = vshrl.u32 %v4612, 7
        %v4614 = vsub.s32 %v4611, %v4613
        %v4615 = vrot.slane %v4601, %v4614
        %v4616 = vcombine.low %v4311, %v4421
        %v4617 = vcombine.high %v4311, %v4421
        %v4619 = vunpack.c.l.s4 1983009808
        %v4620 = vunpack.c.0.s8 %v4619
        %v4621 = vlaneseq
        %v4622 = vshrl.u32 %v4621, 7
        %v4623 = vsub.s32 %v4620, %v4622
        %v4624 = vrot.slane %v4616, %v4623
        %v4626 = vunpack.c.l.s4 1983009808
        %v4627 = vunpack.c.0.s8 %v4626
        %v4628 = vlaneseq
        %v4629 = vshrl.u32 %v4628, 7
        %v4630 = vsub.s32 %v4627, %v4629
        %v4631 = vrot.slane %v4617, %v4630
        %v4632 = vcombine.low %v4576, %v4592
        %v4633 = vcombine.high %v4576, %v4592
        %v4635 = vunpack.c.l.s4 1934713408
        %v4636 = vunpack.c.0.s8 %v4635
        %v4637 = vlaneseq
        %v4638 = vshrl.u32 %v4637, 7
        %v4639 = vsub.s32 %v4636, %v4638
        %v4640 = vrot.slane %v4632, %v4639
        %v4642 = vunpack.c.l.s4 1934713408
        %v4643 = vunpack.c.0.s8 %v4642
        %v4644 = vlaneseq
        %v4645 = vshrl.u32 %v4644, 7
        %v4646 = vsub.s32 %v4643, %v4645
        %v4647 = vrot.slane %v4633, %v4646
        %v4648 = vcombine.low %v4583, %v4599
        %v4649 = vcombine.high %v4583, %v4599
        %v4651 = vunpack.c.l.s4 1934713408
        %v4652 = vunpack.c.0.s8 %v4651
        %v4653 = vlaneseq
        %v4654 = vshrl.u32 %v4653, 7
        %v4655 = vsub.s32 %v4652, %v4654
        %v4656 = vrot.slane %v4648, %v4655
        %v4658 = vunpack.c.l.s4 1934713408
        %v4659 = vunpack.c.0.s8 %v4658
        %v4660 = vlaneseq
        %v4661 = vshrl.u32 %v4660, 7
        %v4662 = vsub.s32 %v4659, %v4661
        %v4663 = vrot.slane %v4649, %v4662
        %v4664 = vcombine.low %v4608, %v4624
        %v4665 = vcombine.high %v4608, %v4624
        %v4667 = vunpack.c.l.s4 1934713408
        %v4668 = vunpack.c.0.s8 %v4667
        %v4669 = vlaneseq
        %v4670 = vshrl.u32 %v4669, 7
        %v4671 = vsub.s32 %v4668, %v4670
        %v4672 = vrot.slane %v4664, %v4671
        %v4674 = vunpack.c.l.s4 1934713408
        %v4675 = vunpack.c.0.s8 %v4674
        %v4676 = vlaneseq
        %v4677 = vshrl.u32 %v4676, 7
        %v4678 = vsub.s32 %v4675, %v4677
        %v4679 = vrot.slane %v4665, %v4678
        %v4680 = vcombine.low %v4615, %v4631
        %v4681 = vcombine.high %v4615, %v4631
        %v4683 = vunpack.c.l.s4 1934713408
        %v4684 = vunpack.c.0.s8 %v4683
        %v4685 = vlaneseq
        %v4686 = vshrl.u32 %v4685, 7
        %v4687 = vsub.s32 %v4684, %v4686
        %v4688 = vrot.slane %v4680, %v4687
        %v4690 = vunpack.c.l.s4 1934713408
        %v4691 = vunpack.c.0.s8 %v4690
        %v4692 = vlaneseq
        %v4693 = vshrl.u32 %v4692, 7
        %v4694 = vsub.s32 %v4691, %v4693
        %v4695 = vrot.slane %v4681, %v4694
        %v4696 = vcombine.low %v4640, %v4672
        %v4697 = vcombine.high %v4640, %v4672
        %v4698 = vcombine.low %v4647, %v4679
        %v4699 = vcombine.high %v4647, %v4679
        %v4700 = vcombine.low %v4656, %v4688
        %v4701 = vcombine.high %v4656, %v4688
        %v4702 = vcombine.low %v4663, %v4695
        %v4703 = vcombine.high %v4663, %v4695
        %v4704 = vcombine.low %v4041, %v4151
        %v4705 = vcombine.high %v4041, %v4151
        %v4707 = vunpack.c.l.s4 1983009808
        %v4708 = vunpack.c.0.s8 %v4707
        %v4709 = vlaneseq
        %v4710 = vshrl.u32 %v4709, 7
        %v4711 = vsub.s32 %v4708, %v4710
        %v4712 = vrot.slane %v4704, %v4711
        %v4714 = vunpack.c.l.s4 1983009808
        %v4715 = vunpack.c.0.s8 %v4714
        %v4716 = vlaneseq
        %v4717 = vshrl.u32 %v4716, 7
        %v4718 = vsub.s32 %v4715, %v4717
        %v4719 = vrot.slane %v4705, %v4718
        %v4720 = vcombine.low %v4096, %v4206
        %v4721 = vcombine.high %v4096, %v4206
        %v4723 = vunpack.c.l.s4 1983009808
        %v4724 = vunpack.c.0.s8 %v4723
        %v4725 = vlaneseq
        %v4726 = vshrl.u32 %v4725, 7
        %v4727 = vsub.s32 %v4724, %v4726
        %v4728 = vrot.slane %v4720, %v4727
        %v4730 = vunpack.c.l.s4 1983009808
        %v4731 = vunpack.c.0.s8 %v4730
        %v4732 = vlaneseq
        %v4733 = vshrl.u32 %v4732, 7
        %v4734 = vsub.s32 %v4731, %v4733
        %v4735 = vrot.slane %v4721, %v4734
        %v4736 = vcombine.low %v4261, %v4371
        %v4737 = vcombine.high %v4261, %v4371
        %v4739 = vunpack.c.l.s4 1983009808
        %v4740 = vunpack.c.0.s8 %v4739
        %v4741 = vlaneseq
        %v4742 = vshrl.u32 %v4741, 7
        %v4743 = vsub.s32 %v4740, %v4742
        %v4744 = vrot.slane %v4736, %v4743
        %v4746 = vunpack.c.l.s4 1983009808
        %v4747 = vunpack.c.0.s8 %v4746
        %v4748 = vlaneseq
        %v4749 = vshrl.u32 %v4748, 7
        %v4750 = vsub.s32 %v4747, %v4749
        %v4751 = vrot.slane %v4737, %v4750
        %v4752 = vcombine.low %v4316, %v4426
        %v4753 = vcombine.high %v4316, %v4426
        %v4755 = vunpack.c.l.s4 1983009808
        %v4756 = vunpack.c.0.s8 %v4755
        %v4757 = vlaneseq
        %v4758 = vshrl.u32 %v4757, 7
        %v4759 = vsub.s32 %v4756, %v4758
        %v4760 = vrot.slane %v4752, %v4759
        %v4762 = vunpack.c.l.s4 1983009808
        %v4763 = vunpack.c.0.s8 %v4762
        %v4764 = vlaneseq
        %v4765 = vshrl.u32 %v4764, 7
        %v4766 = vsub.s32 %v4763, %v4765
        %v4767 = vrot.slane %v4753, %v4766
        %v4768 = vcombine.low %v4712, %v4728
        %v4769 = vcombine.high %v4712, %v4728
        %v4771 = vunpack.c.l.s4 1934713408
        %v4772 = vunpack.c.0.s8 %v4771
        %v4773 = vlaneseq
        %v4774 = vshrl.u32 %v4773, 7
        %v4775 = vsub.s32 %v4772, %v4774
        %v4776 = vrot.slane %v4768, %v4775
        %v4778 = vunpack.c.l.s4 1934713408
        %v4779 = vunpack.c.0.s8 %v4778
        %v4780 = vlaneseq
        %v4781 = vshrl.u32 %v4780, 7
        %v4782 = vsub.s32 %v4779, %v4781
        %v4783 = vrot.slane %v4769, %v4782
        %v4784 = vcombine.low %v4719, %v4735
        %v4785 = vcombine.high %v4719, %v4735
        %v4787 = vunpack.c.l.s4 1934713408
        %v4788 = vunpack.c.0.s8 %v4787
        %v4789 = vlaneseq
        %v4790 = vshrl.u32 %v4789, 7
        %v4791 = vsub.s32 %v4788, %v4790
        %v4792 = vrot.slane %v4784, %v4791
        %v4794 = vunpack.c.l.s4 1934713408
        %v4795 = vunpack.c.0.s8 %v4794
        %v4796 = vlaneseq
        %v4797 = vshrl.u32 %v4796, 7
        %v4798 = vsub.s32 %v4795, %v4797
        %v4799 = vrot.slane %v4785, %v4798
        %v4800 = vcombine.low %v4744, %v4760
        %v4801 = vcombine.high %v4744, %v4760
        %v4803 = vunpack.c.l.s4 1934713408
        %v4804 = vunpack.c.0.s8 %v4803
        %v4805 = vlaneseq
        %v4806 = vshrl.u32 %v4805, 7
        %v4807 = vsub.s32 %v4804, %v4806
        %v4808 = vrot.slane %v4800, %v4807
        %v4810 = vunpack.c.l.s4 1934713408
        %v4811 = vunpack.c.0.s8 %v4810
        %v4812 = vlaneseq
        %v4813 = vshrl.u32 %v4812, 7
        %v4814 = vsub.s32 %v4811, %v4813
        %v4815 = vrot.slane %v4801, %v4814
        %v4816 = vcombine.low %v4751, %v4767
        %v4817 = vcombine.high %v4751, %v4767
        %v4819 = vunpack.c.l.s4 1934713408
        %v4820 = vunpack.c.0.s8 %v4819
        %v4821 = vlaneseq
        %v4822 = vshrl.u32 %v4821, 7
        %v4823 = vsub.s32 %v4820, %v4822
        %v4824 = vrot.slane %v4816, %v4823
        %v4826 = vunpack.c.l.s4 1934713408
        %v4827 = vunpack.c.0.s8 %v4826
        %v4828 = vlaneseq
        %v4829 = vshrl.u32 %v4828, 7
        %v4830 = vsub.s32 %v4827, %v4829
        %v4831 = vrot.slane %v4817, %v4830
        %v4832 = vcombine.low %v4776, %v4808
        %v4833 = vcombine.high %v4776, %v4808
        %v4834 = vcombine.low %v4783, %v4815
        %v4835 = vcombine.high %v4783, %v4815
        %v4836 = vcombine.low %v4792, %v4824
        %v4837 = vcombine.high %v4792, %v4824
        %v4838 = vcombine.low %v4799, %v4831
        %v4839 = vcombine.high %v4799, %v4831
        %v4840 = vcombine.low %v4044, %v4154
        %v4841 = vcombine.high %v4044, %v4154
        %v4843 = vunpack.c.l.s4 1983009808
        %v4844 = vunpack.c.0.s8 %v4843
        %v4845 = vlaneseq
        %v4846 = vshrl.u32 %v4845, 7
        %v4847 = vsub.s32 %v4844, %v4846
        %v4848 = vrot.slane %v4840, %v4847
        %v4850 = vunpack.c.l.s4 1983009808
        %v4851 = vunpack.c.0.s8 %v4850
        %v4852 = vlaneseq
        %v4853 = vshrl.u32 %v4852, 7
        %v4854 = vsub.s32 %v4851, %v4853
        %v4855 = vrot.slane %v4841, %v4854
        %v4856 = vcombine.low %v4099, %v4209
        %v4857 = vcombine.high %v4099, %v4209
        %v4859 = vunpack.c.l.s4 1983009808
        %v4860 = vunpack.c.0.s8 %v4859
        %v4861 = vlaneseq
        %v4862 = vshrl.u32 %v4861, 7
        %v4863 = vsub.s32 %v4860, %v4862
        %v4864 = vrot.slane %v4856, %v4863
        %v4866 = vunpack.c.l.s4 1983009808
        %v4867 = vunpack.c.0.s8 %v4866
        %v4868 = vlaneseq
        %v4869 = vshrl.u32 %v4868, 7
        %v4870 = vsub.s32 %v4867, %v4869
        %v4871 = vrot.slane %v4857, %v4870
        %v4872 = vcombine.low %v4264, %v4374
        %v4873 = vcombine.high %v4264, %v4374
        %v4875 = vunpack.c.l.s4 1983009808
        %v4876 = vunpack.c.0.s8 %v4875
        %v4877 = vlaneseq
        %v4878 = vshrl.u32 %v4877, 7
        %v4879 = vsub.s32 %v4876, %v4878
        %v4880 = vrot.slane %v4872, %v4879
        %v4882 = vunpack.c.l.s4 1983009808
        %v4883 = vunpack.c.0.s8 %v4882
        %v4884 = vlaneseq
        %v4885 = vshrl.u32 %v4884, 7
        %v4886 = vsub.s32 %v4883, %v4885
        %v4887 = vrot.slane %v4873, %v4886
        %v4888 = vcombine.low %v4319, %v4429
        %v4889 = vcombine.high %v4319, %v4429
        %v4891 = vunpack.c.l.s4 1983009808
        %v4892 = vunpack.c.0.s8 %v4891
        %v4893 = vlaneseq
        %v4894 = vshrl.u32 %v4893, 7
        %v4895 = vsub.s32 %v4892, %v4894
        %v4896 = vrot.slane %v4888, %v4895
        %v4898 = vunpack.c.l.s4 1983009808
        %v4899 = vunpack.c.0.s8 %v4898
        %v4900 = vlaneseq
        %v4901 = vshrl.u32 %v4900, 7
        %v4902 = vsub.s32 %v4899, %v4901
        %v4903 = vrot.slane %v4889, %v4902
        %v4904 = vcombine.low %v4848, %v4864
        %v4905 = vcombine.high %v4848, %v4864
        %v4907 = vunpack.c.l.s4 1934713408
        %v4908 = vunpack.c.0.s8 %v4907
        %v4909 = vlaneseq
        %v4910 = vshrl.u32 %v4909, 7
        %v4911 = vsub.s32 %v4908, %v4910
        %v4912 = vrot.slane %v4904, %v4911
        %v4914 = vunpack.c.l.s4 1934713408
        %v4915 = vunpack.c.0.s8 %v4914
        %v4916 = vlaneseq
        %v4917 = vshrl.u32 %v4916, 7
        %v4918 = vsub.s32 %v4915, %v4917
        %v4919 = vrot.slane %v4905, %v4918
        %v4920 = vcombine.low %v4855, %v4871
        %v4921 = vcombine.high %v4855, %v4871
        %v4923 = vunpack.c.l.s4 1934713408
        %v4924 = vunpack.c.0.s8 %v4923
        %v4925 = vlaneseq
        %v4926 = vshrl.u32 %v4925, 7
        %v4927 = vsub.s32 %v4924, %v4926
        %v4928 = vrot.slane %v4920, %v4927
        %v4930 = vunpack.c.l.s4 1934713408
        %v4931 = vunpack.c.0.s8 %v4930
        %v4932 = vlaneseq
        %v4933 = vshrl.u32 %v4932, 7
        %v4934 = vsub.s32 %v4931, %v4933
        %v4935 = vrot.slane %v4921, %v4934
        %v4936 = vcombine.low %v4880, %v4896
        %v4937 = vcombine.high %v4880, %v4896
        %v4939 = vunpack.c.l.s4 1934713408
        %v4940 = vunpack.c.0.s8 %v4939
        %v4941 = vlaneseq
        %v4942 = vshrl.u32 %v4941, 7
        %v4943 = vsub.s32 %v4940, %v4942
        %v4944 = vrot.slane %v4936, %v4943
        %v4946 = vunpack.c.l.s4 1934713408
        %v4947 = vunpack.c.0.s8 %v4946
        %v4948 = vlaneseq
        %v4949 = vshrl.u32 %v4948, 7
        %v4950 = vsub.s32 %v4947, %v4949
        %v4951 = vrot.slane %v4937, %v4950
        %v4952 = vcombine.low %v4887, %v4903
        %v4953 = vcombine.high %v4887, %v4903
        %v4955 = vunpack.c.l.s4 1934713408
        %v4956 = vunpack.c.0.s8 %v4955
        %v4957 = vlaneseq
        %v4958 = vshrl.u32 %v4957, 7
        %v4959 = vsub.s32 %v4956, %v4958
        %v4960 = vrot.slane %v4952, %v4959
        %v4962 = vunpack.c.l.s4 1934713408
        %v4963 = vunpack.c.0.s8 %v4962
        %v4964 = vlaneseq
        %v4965 = vshrl.u32 %v4964, 7
        %v4966 = vsub.s32 %v4963, %v4965
        %v4967 = vrot.slane %v4953, %v4966
        %v4968 = vcombine.low %v4912, %v4944
        %v4969 = vcombine.high %v4912, %v4944
        %v4970 = vcombine.low %v4919, %v4951
        %v4971 = vcombine.high %v4919, %v4951
        %v4972 = vcombine.low %v4928, %v4960
        %v4973 = vcombine.high %v4928, %v4960
        %v4974 = vcombine.low %v4935, %v4967
        %v4975 = vcombine.high %v4935, %v4967
        %v4976 = vcombine.low %v4560, %v4562
        %v4977 = vcombine.high %v4560, %v4562
        %v4979 = vunpack.c.l.s4 1983009808
        %v4980 = vunpack.c.0.s8 %v4979
        %v4981 = vlaneseq
        %v4982 = vshrl.u32 %v4981, 7
        %v4983 = vsub.s32 %v4980, %v4982
        %v4984 = vrot.slane %v4976, %v4983
        %v4986 = vunpack.c.l.s4 1983009808
        %v4987 = vunpack.c.0.s8 %v4986
        %v4988 = vlaneseq
        %v4989 = vshrl.u32 %v4988, 7
        %v4990 = vsub.s32 %v4987, %v4989
        %v4991 = vrot.slane %v4977, %v4990
        %v4992 = vcombine.low %v4561, %v4563
        %v4993 = vcombine.high %v4561, %v4563
        %v4995 = vunpack.c.l.s4 1983009808
        %v4996 = vunpack.c.0.s8 %v4995
        %v4997 = vlaneseq
        %v4998 = vshrl.u32 %v4997, 7
        %v4999 = vsub.s32 %v4996, %v4998
        %v5000 = vrot.slane %v4992, %v4999
        %v5002 = vunpack.c.l.s4 1983009808
        %v5003 = vunpack.c.0.s8 %v5002
        %v5004 = vlaneseq
        %v5005 = vshrl.u32 %v5004, 7
        %v5006 = vsub.s32 %v5003, %v5005
        %v5007 = vrot.slane %v4993, %v5006
        %v5008 = vcombine.low %v4564, %v4566
        %v5009 = vcombine.high %v4564, %v4566
        %v5011 = vunpack.c.l.s4 1983009808
        %v5012 = vunpack.c.0.s8 %v5011
        %v5013 = vlaneseq
        %v5014 = vshrl.u32 %v5013, 7
        %v5015 = vsub.s32 %v5012, %v5014
        %v5016 = vrot.slane %v5008, %v5015
        %v5018 = vunpack.c.l.s4 1983009808
        %v5019 = vunpack.c.0.s8 %v5018
        %v5020 = vlaneseq
        %v5021 = vshrl.u32 %v5020, 7
        %v5022 = vsub.s32 %v5019, %v5021
        %v5023 = vrot.slane %v5009, %v5022
        %v5024 = vcombine.low %v4565, %v4567
        %v5025 = vcombine.high %v4565, %v4567
        %v5027 = vunpack.c.l.s4 1983009808
        %v5028 = vunpack.c.0.s8 %v5027
        %v5029 = vlaneseq
        %v5030 = vshrl.u32 %v5029, 7
        %v5031 = vsub.s32 %v5028, %v5030
        %v5032 = vrot.slane %v5024, %v5031
        %v5034 = vunpack.c.l.s4 1983009808
        %v5035 = vunpack.c.0.s8 %v5034
        %v5036 = vlaneseq
        %v5037 = vshrl.u32 %v5036, 7
        %v5038 = vsub.s32 %v5035, %v5037
        %v5039 = vrot.slane %v5025, %v5038
        %v5040 = vcombine.low %v4984, %v5000
        %v5041 = vcombine.high %v4984, %v5000
        %v5043 = vunpack.c.l.s4 1934713408
        %v5044 = vunpack.c.0.s8 %v5043
        %v5045 = vlaneseq
        %v5046 = vshrl.u32 %v5045, 7
        %v5047 = vsub.s32 %v5044, %v5046
        %v5048 = vrot.slane %v5040, %v5047
        %v5050 = vunpack.c.l.s4 1934713408
        %v5051 = vunpack.c.0.s8 %v5050
        %v5052 = vlaneseq
        %v5053 = vshrl.u32 %v5052, 7
        %v5054 = vsub.s32 %v5051, %v5053
        %v5055 = vrot.slane %v5041, %v5054
        %v5056 = vcombine.low %v4991, %v5007
        %v5057 = vcombine.high %v4991, %v5007
        %v5059 = vunpack.c.l.s4 1934713408
        %v5060 = vunpack.c.0.s8 %v5059
        %v5061 = vlaneseq
        %v5062 = vshrl.u32 %v5061, 7
        %v5063 = vsub.s32 %v5060, %v5062
        %v5064 = vrot.slane %v5056, %v5063
        %v5066 = vunpack.c.l.s4 1934713408
        %v5067 = vunpack.c.0.s8 %v5066
        %v5068 = vlaneseq
        %v5069 = vshrl.u32 %v5068, 7
        %v5070 = vsub.s32 %v5067, %v5069
        %v5071 = vrot.slane %v5057, %v5070
        %v5072 = vcombine.low %v5016, %v5032
        %v5073 = vcombine.high %v5016, %v5032
        %v5075 = vunpack.c.l.s4 1934713408
        %v5076 = vunpack.c.0.s8 %v5075
        %v5077 = vlaneseq
        %v5078 = vshrl.u32 %v5077, 7
        %v5079 = vsub.s32 %v5076, %v5078
        %v5080 = vrot.slane %v5072, %v5079
        %v5082 = vunpack.c.l.s4 1934713408
        %v5083 = vunpack.c.0.s8 %v5082
        %v5084 = vlaneseq
        %v5085 = vshrl.u32 %v5084, 7
        %v5086 = vsub.s32 %v5083, %v5085
        %v5087 = vrot.slane %v5073, %v5086
        %v5088 = vcombine.low %v5023, %v5039
        %v5089 = vcombine.high %v5023, %v5039
        %v5091 = vunpack.c.l.s4 1934713408
        %v5092 = vunpack.c.0.s8 %v5091
        %v5093 = vlaneseq
        %v5094 = vshrl.u32 %v5093, 7
        %v5095 = vsub.s32 %v5092, %v5094
        %v5096 = vrot.slane %v5088, %v5095
        %v5098 = vunpack.c.l.s4 1934713408
        %v5099 = vunpack.c.0.s8 %v5098
        %v5100 = vlaneseq
        %v5101 = vshrl.u32 %v5100, 7
        %v5102 = vsub.s32 %v5099, %v5101
        %v5103 = vrot.slane %v5089, %v5102
        %v5104 = vcombine.low %v5048, %v5080
        %v5105 = vcombine.high %v5048, %v5080
        %v5106 = vcombine.low %v5055, %v5087
        %v5107 = vcombine.high %v5055, %v5087
        %v5108 = vcombine.low %v5064, %v5096
        %v5109 = vcombine.high %v5064, %v5096
        %v5110 = vcombine.low %v5071, %v5103
        %v5111 = vcombine.high %v5071, %v5103
        %v5112 = vcombine.low %v4696, %v4698
        %v5113 = vcombine.high %v4696, %v4698
        %v5115 = vunpack.c.l.s4 1983009808
        %v5116 = vunpack.c.0.s8 %v5115
        %v5117 = vlaneseq
        %v5118 = vshrl.u32 %v5117, 7
        %v5119 = vsub.s32 %v5116, %v5118
        %v5120 = vrot.slane %v5112, %v5119
        %v5122 = vunpack.c.l.s4 1983009808
        %v5123 = vunpack.c.0.s8 %v5122
        %v5124 = vlaneseq
        %v5125 = vshrl.u32 %v5124, 7
        %v5126 = vsub.s32 %v5123, %v5125
        %v5127 = vrot.slane %v5113, %v5126
        %v5128 = vcombine.low %v4697, %v4699
        %v5129 = vcombine.high %v4697, %v4699
        %v5131 = vunpack.c.l.s4 1983009808
        %v5132 = vunpack.c.0.s8 %v5131
        %v5133 = vlaneseq
        %v5134 = vshrl.u32 %v5133, 7
        %v5135 = vsub.s32 %v5132, %v5134
        %v5136 = vrot.slane %v5128, %v5135
        %v5138 = vunpack.c.l.s4 1983009808
        %v5139 = vunpack.c.0.s8 %v5138
        %v5140 = vlaneseq
        %v5141 = vshrl.u32 %v5140, 7
        %v5142 = vsub.s32 %v5139, %v5141
        %v5143 = vrot.slane %v5129, %v5142
        %v5144 = vcombine.low %v4700, %v4702
        %v5145 = vcombine.high %v4700, %v4702
        %v5147 = vunpack.c.l.s4 1983009808
        %v5148 = vunpack.c.0.s8 %v5147
        %v5149 = vlaneseq
        %v5150 = vshrl.u32 %v5149, 7
        %v5151 = vsub.s32 %v5148, %v5150
        %v5152 = vrot.slane %v5144, %v5151
        %v5154 = vunpack.c.l.s4 1983009808
        %v5155 = vunpack.c.0.s8 %v5154
        %v5156 = vlaneseq
        %v5157 = vshrl.u32 %v5156, 7
        %v5158 = vsub.s32 %v5155, %v5157
        %v5159 = vrot.slane %v5145, %v5158
        %v5160 = vcombine.low %v4701, %v4703
        %v5161 = vcombine.high %v4701, %v4703
        %v5163 = vunpack.c.l.s4 1983009808
        %v5164 = vunpack.c.0.s8 %v5163
        %v5165 = vlaneseq
        %v5166 = vshrl.u32 %v5165, 7
        %v5167 = vsub.s32 %v5164, %v5166
        %v5168 = vrot.slane %v5160, %v5167
        %v5170 = vunpack.c.l.s4 1983009808
        %v5171 = vunpack.c.0.s8 %v5170
        %v5172 = vlaneseq
        %v5173 = vshrl.u32 %v5172, 7
        %v5174 = vsub.s32 %v5171, %v5173
        %v5175 = vrot.slane %v5161, %v5174
        %v5176 = vcombine.low %v5120, %v5136
        %v5177 = vcombine.high %v5120, %v5136
        %v5179 = vunpack.c.l.s4 1934713408
        %v5180 = vunpack.c.0.s8 %v5179
        %v5181 = vlaneseq
        %v5182 = vshrl.u32 %v5181, 7
        %v5183 = vsub.s32 %v5180, %v5182
        %v5184 = vrot.slane %v5176, %v5183
        %v5186 = vunpack.c.l.s4 1934713408
        %v5187 = vunpack.c.0.s8 %v5186
        %v5188 = vlaneseq
        %v5189 = vshrl.u32 %v5188, 7
        %v5190 = vsub.s32 %v5187, %v5189
        %v5191 = vrot.slane %v5177, %v5190
        %v5192 = vcombine.low %v5127, %v5143
        %v5193 = vcombine.high %v5127, %v5143
        %v5195 = vunpack.c.l.s4 1934713408
        %v5196 = vunpack.c.0.s8 %v5195
        %v5197 = vlaneseq
        %v5198 = vshrl.u32 %v5197, 7
        %v5199 = vsub.s32 %v5196, %v5198
        %v5200 = vrot.slane %v5192, %v5199
        %v5202 = vunpack.c.l.s4 1934713408
        %v5203 = vunpack.c.0.s8 %v5202
        %v5204 = vlaneseq
        %v5205 = vshrl.u32 %v5204, 7
        %v5206 = vsub.s32 %v5203, %v5205
        %v5207 = vrot.slane %v5193, %v5206
        %v5208 = vcombine.low %v5152, %v5168
        %v5209 = vcombine.high %v5152, %v5168
        %v5211 = vunpack.c.l.s4 1934713408
        %v5212 = vunpack.c.0.s8 %v5211
        %v5213 = vlaneseq
        %v5214 = vshrl.u32 %v5213, 7
        %v5215 = vsub.s32 %v5212, %v5214
        %v5216 = vrot.slane %v5208, %v5215
        %v5218 = vunpack.c.l.s4 1934713408
        %v5219 = vunpack.c.0.s8 %v5218
        %v5220 = vlaneseq
        %v5221 = vshrl.u32 %v5220, 7
        %v5222 = vsub.s32 %v5219, %v5221
        %v5223 = vrot.slane %v5209, %v5222
        %v5224 = vcombine.low %v5159, %v5175
        %v5225 = vcombine.high %v5159, %v5175
        %v5227 = vunpack.c.l.s4 1934713408
        %v5228 = vunpack.c.0.s8 %v5227
        %v5229 = vlaneseq
        %v5230 = vshrl.u32 %v5229, 7
        %v5231 = vsub.s32 %v5228, %v5230
        %v5232 = vrot.slane %v5224, %v5231
        %v5234 = vunpack.c.l.s4 1934713408
        %v5235 = vunpack.c.0.s8 %v5234
        %v5236 = vlaneseq
        %v5237 = vshrl.u32 %v5236, 7
        %v5238 = vsub.s32 %v5235, %v5237
        %v5239 = vrot.slane %v5225, %v5238
        %v5240 = vcombine.low %v5184, %v5216
        %v5241 = vcombine.high %v5184, %v5216
        %v5242 = vcombine.low %v5191, %v5223
        %v5243 = vcombine.high %v5191, %v5223
        %v5244 = vcombine.low %v5200, %v5232
        %v5245 = vcombine.high %v5200, %v5232
        %v5246 = vcombine.low %v5207, %v5239
        %v5247 = vcombine.high %v5207, %v5239
        %v5248 = vcombine.low %v4832, %v4834
        %v5249 = vcombine.high %v4832, %v4834
        %v5251 = vunpack.c.l.s4 1983009808
        %v5252 = vunpack.c.0.s8 %v5251
        %v5253 = vlaneseq
        %v5254 = vshrl.u32 %v5253, 7
        %v5255 = vsub.s32 %v5252, %v5254
        %v5256 = vrot.slane %v5248, %v5255
        %v5258 = vunpack.c.l.s4 1983009808
        %v5259 = vunpack.c.0.s8 %v5258
        %v5260 = vlaneseq
        %v5261 = vshrl.u32 %v5260, 7
        %v5262 = vsub.s32 %v5259, %v5261
        %v5263 = vrot.slane %v5249, %v5262
        %v5264 = vcombine.low %v4833, %v4835
        %v5265 = vcombine.high %v4833, %v4835
        %v5267 = vunpack.c.l.s4 1983009808
        %v5268 = vunpack.c.0.s8 %v5267
        %v5269 = vlaneseq
        %v5270 = vshrl.u32 %v5269, 7
        %v5271 = vsub.s32 %v5268, %v5270
        %v5272 = vrot.slane %v5264, %v5271
        %v5274 = vunpack.c.l.s4 1983009808
        %v5275 = vunpack.c.0.s8 %v5274
        %v5276 = vlaneseq
        %v5277 = vshrl.u32 %v5276, 7
        %v5278 = vsub.s32 %v5275, %v5277
        %v5279 = vrot.slane %v5265, %v5278
        %v5280 = vcombine.low %v4836, %v4838
        %v5281 = vcombine.high %v4836, %v4838
        %v5283 = vunpack.c.l.s4 1983009808
        %v5284 = vunpack.c.0.s8 %v5283
        %v5285 = vlaneseq
        %v5286 = vshrl.u32 %v5285, 7
        %v5287 = vsub.s32 %v5284, %v5286
        %v5288 = vrot.slane %v5280, %v5287
        %v5290 = vunpack.c.l.s4 1983009808
        %v5291 = vunpack.c.0.s8 %v5290
        %v5292 = vlaneseq
        %v5293 = vshrl.u32 %v5292, 7
        %v5294 = vsub.s32 %v5291, %v5293
        %v5295 = vrot.slane %v5281, %v5294
        %v5296 = vcombine.low %v4837, %v4839
        %v5297 = vcombine.high %v4837, %v4839
        %v5299 = vunpack.c.l.s4 1983009808
        %v5300 = vunpack.c.0.s8 %v5299
        %v5301 = vlaneseq
        %v5302 = vshrl.u32 %v5301, 7
        %v5303 = vsub.s32 %v5300, %v5302
        %v5304 = vrot.slane %v5296, %v5303
        %v5306 = vunpack.c.l.s4 1983009808
        %v5307 = vunpack.c.0.s8 %v5306
        %v5308 = vlaneseq
        %v5309 = vshrl.u32 %v5308, 7
        %v5310 = vsub.s32 %v5307, %v5309
        %v5311 = vrot.slane %v5297, %v5310
        %v5312 = vcombine.low %v5256, %v5272
        %v5313 = vcombine.high %v5256, %v5272
        %v5315 = vunpack.c.l.s4 1934713408
        %v5316 = vunpack.c.0.s8 %v5315
        %v5317 = vlaneseq
        %v5318 = vshrl.u32 %v5317, 7
        %v5319 = vsub.s32 %v5316, %v5318
        %v5320 = vrot.slane %v5312, %v5319
        %v5322 = vunpack.c.l.s4 1934713408
        %v5323 = vunpack.c.0.s8 %v5322
        %v5324 = vlaneseq
        %v5325 = vshrl.u32 %v5324, 7
        %v5326 = vsub.s32 %v5323, %v5325
        %v5327 = vrot.slane %v5313, %v5326
        %v5328 = vcombine.low %v5263, %v5279
        %v5329 = vcombine.high %v5263, %v5279
        %v5331 = vunpack.c.l.s4 1934713408
        %v5332 = vunpack.c.0.s8 %v5331
        %v5333 = vlaneseq
        %v5334 = vshrl.u32 %v5333, 7
        %v5335 = vsub.s32 %v5332, %v5334
        %v5336 = vrot.slane %v5328, %v5335
        %v5338 = vunpack.c.l.s4 1934713408
        %v5339 = vunpack.c.0.s8 %v5338
        %v5340 = vlaneseq
        %v5341 = vshrl.u32 %v5340, 7
        %v5342 = vsub.s32 %v5339, %v5341
        %v5343 = vrot.slane %v5329, %v5342
        %v5344 = vcombine.low %v5288, %v5304
        %v5345 = vcombine.high %v5288, %v5304
        %v5347 = vunpack.c.l.s4 1934713408
        %v5348 = vunpack.c.0.s8 %v5347
        %v5349 = vlaneseq
        %v5350 = vshrl.u32 %v5349, 7
        %v5351 = vsub.s32 %v5348, %v5350
        %v5352 = vrot.slane %v5344, %v5351
        %v5354 = vunpack.c.l.s4 1934713408
        %v5355 = vunpack.c.0.s8 %v5354
        %v5356 = vlaneseq
        %v5357 = vshrl.u32 %v5356, 7
        %v5358 = vsub.s32 %v5355, %v5357
        %v5359 = vrot.slane %v5345, %v5358
        %v5360 = vcombine.low %v5295, %v5311
        %v5361 = vcombine.high %v5295, %v5311
        %v5363 = vunpack.c.l.s4 1934713408
        %v5364 = vunpack.c.0.s8 %v5363
        %v5365 = vlaneseq
        %v5366 = vshrl.u32 %v5365, 7
        %v5367 = vsub.s32 %v5364, %v5366
        %v5368 = vrot.slane %v5360, %v5367
        %v5370 = vunpack.c.l.s4 1934713408
        %v5371 = vunpack.c.0.s8 %v5370
        %v5372 = vlaneseq
        %v5373 = vshrl.u32 %v5372, 7
        %v5374 = vsub.s32 %v5371, %v5373
        %v5375 = vrot.slane %v5361, %v5374
        %v5376 = vcombine.low %v5320, %v5352
        %v5377 = vcombine.high %v5320, %v5352
        %v5378 = vcombine.low %v5327, %v5359
        %v5379 = vcombine.high %v5327, %v5359
        %v5380 = vcombine.low %v5336, %v5368
        %v5381 = vcombine.high %v5336, %v5368
        %v5382 = vcombine.low %v5343, %v5375
        %v5383 = vcombine.high %v5343, %v5375
        %v5384 = vcombine.low %v4968, %v4970
        %v5385 = vcombine.high %v4968, %v4970
        %v5387 = vunpack.c.l.s4 1983009808
        %v5388 = vunpack.c.0.s8 %v5387
        %v5389 = vlaneseq
        %v5390 = vshrl.u32 %v5389, 7
        %v5391 = vsub.s32 %v5388, %v5390
        %v5392 = vrot.slane %v5384, %v5391
        %v5394 = vunpack.c.l.s4 1983009808
        %v5395 = vunpack.c.0.s8 %v5394
        %v5396 = vlaneseq
        %v5397 = vshrl.u32 %v5396, 7
        %v5398 = vsub.s32 %v5395, %v5397
        %v5399 = vrot.slane %v5385, %v5398
        %v5400 = vcombine.low %v4969, %v4971
        %v5401 = vcombine.high %v4969, %v4971
        %v5403 = vunpack.c.l.s4 1983009808
        %v5404 = vunpack.c.0.s8 %v5403
        %v5405 = vlaneseq
        %v5406 = vshrl.u32 %v5405, 7
        %v5407 = vsub.s32 %v5404, %v5406
        %v5408 = vrot.slane %v5400, %v5407
        %v5410 = vunpack.c.l.s4 1983009808
        %v5411 = vunpack.c.0.s8 %v5410
        %v5412 = vlaneseq
        %v5413 = vshrl.u32 %v5412, 7
        %v5414 = vsub.s32 %v5411, %v5413
        %v5415 = vrot.slane %v5401, %v5414
        %v5416 = vcombine.low %v4972, %v4974
        %v5417 = vcombine.high %v4972, %v4974
        %v5419 = vunpack.c.l.s4 1983009808
        %v5420 = vunpack.c.0.s8 %v5419
        %v5421 = vlaneseq
        %v5422 = vshrl.u32 %v5421, 7
        %v5423 = vsub.s32 %v5420, %v5422
        %v5424 = vrot.slane %v5416, %v5423
        %v5426 = vunpack.c.l.s4 1983009808
        %v5427 = vunpack.c.0.s8 %v5426
        %v5428 = vlaneseq
        %v5429 = vshrl.u32 %v5428, 7
        %v5430 = vsub.s32 %v5427, %v5429
        %v5431 = vrot.slane %v5417, %v5430
        %v5432 = vcombine.low %v4973, %v4975
        %v5433 = vcombine.high %v4973, %v4975
        %v5435 = vunpack.c.l.s4 1983009808
        %v5436 = vunpack.c.0.s8 %v5435
        %v5437 = vlaneseq
        %v5438 = vshrl.u32 %v5437, 7
        %v5439 = vsub.s32 %v5436, %v5438
        %v5440 = vrot.slane %v5432, %v5439
        %v5442 = vunpack.c.l.s4 1983009808
        %v5443 = vunpack.c.0.s8 %v5442
        %v5444 = vlaneseq
        %v5445 = vshrl.u32 %v5444, 7
        %v5446 = vsub.s32 %v5443, %v5445
        %v5447 = vrot.slane %v5433, %v5446
        %v5448 = vcombine.low %v5392, %v5408
        %v5449 = vcombine.high %v5392, %v5408
        %v5451 = vunpack.c.l.s4 1934713408
        %v5452 = vunpack.c.0.s8 %v5451
        %v5453 = vlaneseq
        %v5454 = vshrl.u32 %v5453, 7
        %v5455 = vsub.s32 %v5452, %v5454
        %v5456 = vrot.slane %v5448, %v5455
        %v5458 = vunpack.c.l.s4 1934713408
        %v5459 = vunpack.c.0.s8 %v5458
        %v5460 = vlaneseq
        %v5461 = vshrl.u32 %v5460, 7
        %v5462 = vsub.s32 %v5459, %v5461
        %v5463 = vrot.slane %v5449, %v5462
        %v5464 = vcombine.low %v5399, %v5415
        %v5465 = vcombine.high %v5399, %v5415
        %v5467 = vunpack.c.l.s4 1934713408
        %v5468 = vunpack.c.0.s8 %v5467
        %v5469 = vlaneseq
        %v5470 = vshrl.u32 %v5469, 7
        %v5471 = vsub.s32 %v5468, %v5470
        %v5472 = vrot.slane %v5464, %v5471
        %v5474 = vunpack.c.l.s4 1934713408
        %v5475 = vunpack.c.0.s8 %v5474
        %v5476 = vlaneseq
        %v5477 = vshrl.u32 %v5476, 7
        %v5478 = vsub.s32 %v5475, %v5477
        %v5479 = vrot.slane %v5465, %v5478
        %v5480 = vcombine.low %v5424, %v5440
        %v5481 = vcombine.high %v5424, %v5440
        %v5483 = vunpack.c.l.s4 1934713408
        %v5484 = vunpack.c.0.s8 %v5483
        %v5485 = vlaneseq
        %v5486 = vshrl.u32 %v5485, 7
        %v5487 = vsub.s32 %v5484, %v5486
        %v5488 = vrot.slane %v5480, %v5487
        %v5490 = vunpack.c.l.s4 1934713408
        %v5491 = vunpack.c.0.s8 %v5490
        %v5492 = vlaneseq
        %v5493 = vshrl.u32 %v5492, 7
        %v5494 = vsub.s32 %v5491, %v5493
        %v5495 = vrot.slane %v5481, %v5494
        %v5496 = vcombine.low %v5431, %v5447
        %v5497 = vcombine.high %v5431, %v5447
        %v5499 = vunpack.c.l.s4 1934713408
        %v5500 = vunpack.c.0.s8 %v5499
        %v5501 = vlaneseq
        %v5502 = vshrl.u32 %v5501, 7
        %v5503 = vsub.s32 %v5500, %v5502
        %v5504 = vrot.slane %v5496, %v5503
        %v5506 = vunpack.c.l.s4 1934713408
        %v5507 = vunpack.c.0.s8 %v5506
        %v5508 = vlaneseq
        %v5509 = vshrl.u32 %v5508, 7
        %v5510 = vsub.s32 %v5507, %v5509
        %v5511 = vrot.slane %v5497, %v5510
        %v5512 = vcombine.low %v5456, %v5488
        %v5513 = vcombine.high %v5456, %v5488
        %v5514 = vcombine.low %v5463, %v5495
        %v5515 = vcombine.high %v5463, %v5495
        %v5516 = vcombine.low %v5472, %v5504
        %v5517 = vcombine.high %v5472, %v5504
        %v5518 = vcombine.low %v5479, %v5511
        %v5519 = vcombine.high %v5479, %v5511
        %5524 = vrot.lane.b32.xlu0 %v5105, 16
        %v5525 = vpop.permute.xlu0 %5524
        %5526 = vrot.lane.b32.xlu0 %v5241, 16
        %v5527 = vpop.permute.xlu0 %5526
        %5528 = vrot.lane.b32.xlu0 %v5377, 16
        %v5529 = vpop.permute.xlu0 %5528
        %5530 = vrot.lane.b32.xlu0 %v5513, 16
        %v5531 = vpop.permute.xlu0 %5530
        %5540 = vrot.lane.b32.xlu0 %v5106, 32
        %v5541 = vpop.permute.xlu0 %5540
        %5542 = vrot.lane.b32.xlu0 %v5242, 32
        %v5543 = vpop.permute.xlu0 %5542
        %5544 = vrot.lane.b32.xlu0 %v5378, 32
        %v5545 = vpop.permute.xlu0 %5544
        %5546 = vrot.lane.b32.xlu0 %v5514, 32
        %v5547 = vpop.permute.xlu0 %5546
        %5556 = vrot.lane.b32.xlu0 %v5107, 48
        %v5557 = vpop.permute.xlu0 %5556
        %5558 = vrot.lane.b32.xlu0 %v5243, 48
        %v5559 = vpop.permute.xlu0 %5558
        %5560 = vrot.lane.b32.xlu0 %v5379, 48
        %v5561 = vpop.permute.xlu0 %5560
        %5562 = vrot.lane.b32.xlu0 %v5515, 48
        %v5563 = vpop.permute.xlu0 %5562
        %5572 = vrot.lane.b32.xlu0 %v5108, 64
        %v5573 = vpop.permute.xlu0 %5572
        %5574 = vrot.lane.b32.xlu0 %v5244, 64
        %v5575 = vpop.permute.xlu0 %5574
        %5576 = vrot.lane.b32.xlu0 %v5380, 64
        %v5577 = vpop.permute.xlu0 %5576
        %5578 = vrot.lane.b32.xlu0 %v5516, 64
        %v5579 = vpop.permute.xlu0 %5578
        %5588 = vrot.lane.b32.xlu0 %v5109, 80
        %v5589 = vpop.permute.xlu0 %5588
        %5590 = vrot.lane.b32.xlu0 %v5245, 80
        %v5591 = vpop.permute.xlu0 %5590
        %5592 = vrot.lane.b32.xlu0 %v5381, 80
        %v5593 = vpop.permute.xlu0 %5592
        %5594 = vrot.lane.b32.xlu0 %v5517, 80
        %v5595 = vpop.permute.xlu0 %5594
        %5604 = vrot.lane.b32.xlu0 %v5110, 96
        %v5605 = vpop.permute.xlu0 %5604
        %5606 = vrot.lane.b32.xlu0 %v5246, 96
        %v5607 = vpop.permute.xlu0 %5606
        %5608 = vrot.lane.b32.xlu0 %v5382, 96
        %v5609 = vpop.permute.xlu0 %5608
        %5610 = vrot.lane.b32.xlu0 %v5518, 96
        %v5611 = vpop.permute.xlu0 %5610
        %5620 = vrot.lane.b32.xlu0 %v5111, 112
        %v5621 = vpop.permute.xlu0 %5620
        %5622 = vrot.lane.b32.xlu0 %v5247, 112
        %v5623 = vpop.permute.xlu0 %5622
        %5624 = vrot.lane.b32.xlu0 %v5383, 112
        %v5625 = vpop.permute.xlu0 %5624
        %5626 = vrot.lane.b32.xlu0 %v5519, 112
        %v5627 = vpop.permute.xlu0 %5626
        %v5632 = vsel %vm3102, %v5104, %v5525
        %v5633 = vsel %vm3102, %v5240, %v5527
        %v5634 = vsel %vm3102, %v5376, %v5529
        %v5635 = vsel %vm3102, %v5512, %v5531
        %v5636 = vsel %vm3623, %v5632, %v5541
        %v5637 = vsel %vm3623, %v5633, %v5543
        %v5638 = vsel %vm3623, %v5634, %v5545
        %v5639 = vsel %vm3623, %v5635, %v5547
        %vm5640 = vcmask 392192
        %v5641 = vsel %vm5640, %v5636, %v5557
        %v5642 = vsel %vm5640, %v5637, %v5559
        %v5643 = vsel %vm5640, %v5638, %v5561
        %v5644 = vsel %vm5640, %v5639, %v5563
        %vm5645 = vcmask 523264
        %v5646 = vsel %vm5645, %v5641, %v5573
        %v5647 = vsel %vm5645, %v5642, %v5575
        %v5648 = vsel %vm5645, %v5643, %v5577
        %v5649 = vsel %vm5645, %v5644, %v5579
        %vm5650 = vcmask 654336
        %v5651 = vsel %vm5650, %v5646, %v5589
        %v5652 = vsel %vm5650, %v5647, %v5591
        %v5653 = vsel %vm5650, %v5648, %v5593
        %v5654 = vsel %vm5650, %v5649, %v5595
        %vm5655 = vcmask 785408
        %v5656 = vsel %vm5655, %v5651, %v5605
        %v5657 = vsel %vm5655, %v5652, %v5607
        %v5658 = vsel %vm5655, %v5653, %v5609
        %v5659 = vsel %vm5655, %v5654, %v5611
        %vm5660 = vcmask 916480
        %v5661 = vsel %vm5660, %v5656, %v5621
        %v5662 = vsel %vm5660, %v5657, %v5623
        %v5663 = vsel %vm5660, %v5658, %v5625
        %v5664 = vsel %vm5660, %v5659, %v5627
        %v5665 = vpack.c.bf16 %v5662, %v5661
        %v5666 = vpack.c.bf16 %v5664, %v5663
        %v5667 = vld [vmem:[%s533] sm:$0xf]
        %v5668 = vld [vmem:[%s533 + $0x4] sm:$0xf]
        %v5669 = vld [vmem:[%s533 + $0x8] sm:$0xf]
        %v5670 = vld [vmem:[%s533 + $0xc] sm:$0xf]
        %v5671 = vld [vmem:[%s533 + $0x10] sm:$0xf]
        %v5672 = vld [vmem:[%s533 + $0x14] sm:$0xf]
        %v5673 = vld [vmem:[%s533 + $0x18] sm:$0xf]
        %v5674 = vld [vmem:[%s533 + $0x1c] sm:$0xf]
        %v5675 = vld [vmem:[%s533 + $0x20] sm:$0xf]
        %v5676 = vld [vmem:[%s533 + $0x24] sm:$0xf]
        %v5677 = vld [vmem:[%s533 + $0x28] sm:$0xf]
        %v5678 = vld [vmem:[%s533 + $0x2c] sm:$0xf]
        %v5679 = vld [vmem:[%s533 + $0x30] sm:$0xf]
        %v5680 = vld [vmem:[%s533 + $0x34] sm:$0xf]
        %v5681 = vld [vmem:[%s533 + $0x38] sm:$0xf]
        %v5682 = vld [vmem:[%s533 + $0x3c] sm:$0xf]
        %v5683 = vlaneseq
        %v5684 = vshrl.u32 %v5683, 7
        %v5685 = vsub.s32 3, %v5684
        %v5686 = vrot.slane %v662, %v5685
        %v5703 = vunpack.c.l.b16 %v5667
        %v5704 = vunpack.c.l.b16 %v5668
        %v5705 = vunpack.c.l.b16 %v5669
        %v5706 = vunpack.c.l.b16 %v5670
        %v5707 = vunpack.c.l.b16 %v5671
        %v5708 = vunpack.c.l.b16 %v5672
        %v5709 = vunpack.c.l.b16 %v5673
        %v5710 = vunpack.c.l.b16 %v5674
        %v5711 = vunpack.c.l.b16 %v5675
        %v5712 = vunpack.c.l.b16 %v5676
        %v5713 = vunpack.c.l.b16 %v5677
        %v5714 = vunpack.c.l.b16 %v5678
        %v5715 = vunpack.c.l.b16 %v5679
        %v5716 = vunpack.c.l.b16 %v5680
        %v5717 = vunpack.c.l.b16 %v5681
        %v5718 = vunpack.c.l.b16 %v5682
        %v5719 = vpack.c.b16 %v5704, %v5703
        %v5720 = vpack.c.b16 %v5706, %v5705
        %v5721 = vpack.c.b16 %v5708, %v5707
        %v5722 = vpack.c.b16 %v5710, %v5709
        %v5723 = vpack.c.b16 %v5712, %v5711
        %v5724 = vpack.c.b16 %v5714, %v5713
        %v5725 = vpack.c.b16 %v5716, %v5715
        %v5726 = vpack.c.b16 %v5718, %v5717
        %5735 = vmatprep.subr.bf16.mxu0 0
        %5736 = vmatpush1.bf16.msra.mxu0 %v5719
        %5737 = vmatprep.subr.bf16.mxu0 0
        %5738 = vmatpush1.bf16.msra.mxu0 %v5720
        %5739 = vmatprep.subr.bf16.mxu0 0
        %5740 = vmatpush1.bf16.msra.mxu0 %v5721
        %5741 = vmatprep.subr.bf16.mxu0 0
        %5742 = vmatpush1.bf16.msra.mxu0 %v5722
        %5743 = vmatprep.subr.bf16.mxu0 0
        %5744 = vmatpush1.bf16.msra.mxu0 %v5723
        %5745 = vmatprep.subr.bf16.mxu0 0
        %5746 = vmatpush1.bf16.msra.mxu0 %v5724
        %5747 = vmatprep.subr.bf16.mxu0 0
        %5748 = vmatpush1.bf16.msra.mxu0 %v5725
        %5749 = vmatprep.subr.bf16.mxu0 0
        %5750 = vmatpush1.bf16.msra.mxu0 %v5726
        %5751 = vmatprep.subr.bf16.mxu0 0
        %5752 = vmatpush1.bf16.msra.mxu0 0
        %5753 = vmatprep.subr.bf16.mxu0 0
        %5754 = vmatpush1.bf16.msra.mxu0 0
        %5755 = vmatprep.subr.bf16.mxu0 0
        %5756 = vmatpush1.bf16.msra.mxu0 0
        %5757 = vmatprep.subr.bf16.mxu0 0
        %5758 = vmatpush1.bf16.msra.mxu0 0
        %5759 = vmatprep.subr.bf16.mxu0 0
        %5760 = vmatpush1.bf16.msra.mxu0 0
        %5761 = vmatprep.subr.bf16.mxu0 0
        %5762 = vmatpush1.bf16.msra.mxu0 0
        %5763 = vmatprep.subr.bf16.mxu0 0
        %5764 = vmatpush1.bf16.msra.mxu0 0
        %5765 = vmatprep.subr.bf16.mxu0 0
        %5766 = vmatpush1.bf16.msra.mxu0 0
        %5767 = vmatprep.mubr.bf16.mxu0 0
        %5768 = vmatmul.mubr.bf16.gmra.mrb[0].mxu0 %v5665
        %v5769 = vpop.f32.mrb[0].mxu0
        %v5770 = vadd.f32 %v5686, %v5769
        %v5771 = vpop.f32.mrb[0].mxu0
        %v5772 = vpop.f32.mrb[0].mxu0
        %v5773 = vadd.f32 %v5686, %v5772
        %v5774 = vpop.f32.mrb[0].mxu0
        %5775 = vmatprep.mubr.bf16.mxu0 0
        %5776 = vmatmul.mubr.bf16.gmra.mrb[0].mxu0 %v5666
        %v5777 = vpop.f32.mrb[0].mxu0
        %v5778 = vadd.f32 %v5686, %v5777
        %v5779 = vpop.f32.mrb[0].mxu0
        %v5780 = vpop.f32.mrb[0].mxu0
        %v5781 = vadd.f32 %v5686, %v5780
        %v5782 = vpop.f32.mrb[0].mxu0
        %5783 = vdwg.mxu0
        %v5784 = vadd.f32 %v665, %v5770
        %v5785 = vadd.f32 %v666, %v5773
        %v5786 = vadd.f32 %v667, %v5778
        %v5787 = vadd.f32 %v668, %v5781
        %5788 = vadd.xlane.f32.xlu0 %v5784
        %v5789 = vpop.xlane.xlu0 %5788
        %5790 = vadd.xlane.f32.xlu0 %v5785
        %v5791 = vpop.xlane.xlu0 %5790
        %5792 = vadd.xlane.f32.xlu0 %v5786
        %v5793 = vpop.xlane.xlu0 %5792
        %5794 = vadd.xlane.f32.xlu0 %v5787
        %v5795 = vpop.xlane.xlu0 %5794
        %v5796 = vrcp.pop 128.0
        %v5797 = vmul.f32 %v5789, %v5796
        %v5798 = vmul.f32 %v5791, %v5796
        %v5799 = vmul.f32 %v5793, %v5796
        %v5800 = vmul.f32 %v5795, %v5796
        %v5801 = vsub.f32 %v5784, %v5797
        %v5802 = vsub.f32 %v5785, %v5798
        %v5803 = vsub.f32 %v5786, %v5799
        %v5804 = vsub.f32 %v5787, %v5800
        %v5805 = vmul.f32 %v5801, %v5801
        %v5806 = vmul.f32 %v5802, %v5802
        %v5807 = vmul.f32 %v5803, %v5803
        %v5808 = vmul.f32 %v5804, %v5804
        %5809 = vadd.xlane.f32.xlu0 %v5805
        %v5810 = vpop.xlane.xlu0 %5809
        %5811 = vadd.xlane.f32.xlu0 %v5806
        %v5812 = vpop.xlane.xlu0 %5811
        %5813 = vadd.xlane.f32.xlu0 %v5807
        %v5814 = vpop.xlane.xlu0 %5813
        %5815 = vadd.xlane.f32.xlu0 %v5808
        %v5816 = vpop.xlane.xlu0 %5815
        %v5817 = vmul.f32 %v5810, %v5796
        %v5818 = vmul.f32 %v5812, %v5796
        %v5819 = vmul.f32 %v5814, %v5796
        %v5820 = vmul.f32 %v5816, %v5796
        %v5821 = vadd.f32 %v5817, 1e-05
        %v5822 = vadd.f32 %v5818, 1e-05
        %v5823 = vadd.f32 %v5819, 1e-05
        %v5824 = vadd.f32 %v5820, 1e-05
        %v5825 = vrsqrt.pop %v5821
        %v5826 = vrsqrt.pop %v5822
        %v5827 = vrsqrt.pop %v5823
        %v5828 = vrsqrt.pop %v5824
        %v5829 = vmul.f32 %v5801, %v5825
        %v5830 = vmul.f32 %v5802, %v5826
        %v5831 = vmul.f32 %v5803, %v5827
        %v5832 = vmul.f32 %v5804, %v5828
        %v5833 = vlaneseq
        %v5834 = vshrl.u32 %v5833, 7
        %v5835 = vsub.s32 5, %v5834
        %v5836 = vrot.slane %v662, %v5835
        %v5837 = vmul.f32 %v5829, %v5836
        %v5838 = vmul.f32 %v5830, %v5836
        %v5839 = vmul.f32 %v5831, %v5836
        %v5840 = vmul.f32 %v5832, %v5836
        %v5841 = vlaneseq
        %v5842 = vshrl.u32 %v5841, 7
        %v5843 = vsub.s32 6, %v5842
        %v5844 = vrot.slane %v662, %v5843
        %v5845 = vadd.f32 %v5837, %v5844
        %v5846 = vadd.f32 %v5838, %v5844
        %v5847 = vadd.f32 %v5839, %v5844
        %v5848 = vadd.f32 %v5840, %v5844
        %v5849 = vpack.c.bf16 %v5846, %v5845
        %v5850 = vpack.c.bf16 %v5848, %v5847
        %v5851 = vld [vmem:[%s542] sm:$0xff]
        %v5852 = vld [vmem:[%s542 + $0x8] sm:$0xff]
        %v5853 = vld [vmem:[%s542 + $0x10] sm:$0xff]
        %v5854 = vld [vmem:[%s542 + $0x18] sm:$0xff]
        %v5855 = vld [vmem:[%s542 + $0x20] sm:$0xff]
        %v5856 = vld [vmem:[%s542 + $0x28] sm:$0xff]
        %v5857 = vld [vmem:[%s542 + $0x30] sm:$0xff]
        %v5858 = vld [vmem:[%s542 + $0x38] sm:$0xff]
        %v5859 = vld [vmem:[%s542 + $0x40] sm:$0xff]
        %v5860 = vld [vmem:[%s542 + $0x48] sm:$0xff]
        %v5861 = vld [vmem:[%s542 + $0x50] sm:$0xff]
        %v5862 = vld [vmem:[%s542 + $0x58] sm:$0xff]
        %v5863 = vld [vmem:[%s542 + $0x60] sm:$0xff]
        %v5864 = vld [vmem:[%s542 + $0x68] sm:$0xff]
        %v5865 = vld [vmem:[%s542 + $0x70] sm:$0xff]
        %v5866 = vld [vmem:[%s542 + $0x78] sm:$0xff]
        %v5867 = vld [vmem:[%s542 + $0x80] sm:$0xff]
        %v5868 = vld [vmem:[%s542 + $0x88] sm:$0xff]
        %v5869 = vld [vmem:[%s542 + $0x90] sm:$0xff]
        %v5870 = vld [vmem:[%s542 + $0x98] sm:$0xff]
        %v5871 = vld [vmem:[%s542 + $0xa0] sm:$0xff]
        %v5872 = vld [vmem:[%s542 + $0xa8] sm:$0xff]
        %v5873 = vld [vmem:[%s542 + $0xb0] sm:$0xff]
        %v5874 = vld [vmem:[%s542 + $0xb8] sm:$0xff]
        %v5875 = vld [vmem:[%s542 + $0xc0] sm:$0xff]
        %v5876 = vld [vmem:[%s542 + $0xc8] sm:$0xff]
        %v5877 = vld [vmem:[%s542 + $0xd0] sm:$0xff]
        %v5878 = vld [vmem:[%s542 + $0xd8] sm:$0xff]
        %v5879 = vld [vmem:[%s542 + $0xe0] sm:$0xff]
        %v5880 = vld [vmem:[%s542 + $0xe8] sm:$0xff]
        %v5881 = vld [vmem:[%s542 + $0xf0] sm:$0xff]
        %v5882 = vld [vmem:[%s542 + $0xf8] sm:$0xff]
        %v5884 = vlaneseq
        %v5885 = vshrl.u32 %v5884, 7
        %v5886 = vsub.s32 0, %v5885
        %v5887 = vrot.slane %v664, %v5886
        %v5888 = vlaneseq
        %v5889 = vshrl.u32 %v5888, 7
        %v5890 = vsub.s32 1, %v5889
        %v5891 = vrot.slane %v664, %v5890
        %v5892 = vlaneseq
        %v5893 = vshrl.u32 %v5892, 7
        %v5894 = vsub.s32 2, %v5893
        %v5895 = vrot.slane %v664, %v5894
        %v5896 = vlaneseq
        %v5897 = vshrl.u32 %v5896, 7
        %v5898 = vsub.s32 3, %v5897
        %v5899 = vrot.slane %v664, %v5898
        %v5936 = vunpack.c.l.b16 %v5851
        %v5937 = vunpack.c.h.b16 %v5851
        %v5938 = vunpack.c.l.b16 %v5852
        %v5939 = vunpack.c.h.b16 %v5852
        %v5940 = vunpack.c.l.b16 %v5853
        %v5941 = vunpack.c.h.b16 %v5853
        %v5942 = vunpack.c.l.b16 %v5854
        %v5943 = vunpack.c.h.b16 %v5854
        %v5944 = vunpack.c.l.b16 %v5855
        %v5945 = vunpack.c.h.b16 %v5855
        %v5946 = vunpack.c.l.b16 %v5856
        %v5947 = vunpack.c.h.b16 %v5856
        %v5948 = vunpack.c.l.b16 %v5857
        %v5949 = vunpack.c.h.b16 %v5857
        %v5950 = vunpack.c.l.b16 %v5858
        %v5951 = vunpack.c.h.b16 %v5858
        %v5952 = vunpack.c.l.b16 %v5859
        %v5953 = vunpack.c.h.b16 %v5859
        %v5954 = vunpack.c.l.b16 %v5860
        %v5955 = vunpack.c.h.b16 %v5860
        %v5956 = vunpack.c.l.b16 %v5861
        %v5957 = vunpack.c.h.b16 %v5861
        %v5958 = vunpack.c.l.b16 %v5862
        %v5959 = vunpack.c.h.b16 %v5862
        %v5960 = vunpack.c.l.b16 %v5863
        %v5961 = vunpack.c.h.b16 %v5863
        %v5962 = vunpack.c.l.b16 %v5864
        %v5963 = vunpack.c.h.b16 %v5864
        %v5964 = vunpack.c.l.b16 %v5865
        %v5965 = vunpack.c.h.b16 %v5865
        %v5966 = vunpack.c.l.b16 %v5866
        %v5967 = vunpack.c.h.b16 %v5866
        %v5968 = vunpack.c.l.b16 %v5867
        %v5969 = vunpack.c.h.b16 %v5867
        %v5970 = vunpack.c.l.b16 %v5868
        %v5971 = vunpack.c.h.b16 %v5868
        %v5972 = vunpack.c.l.b16 %v5869
        %v5973 = vunpack.c.h.b16 %v5869
        %v5974 = vunpack.c.l.b16 %v5870
        %v5975 = vunpack.c.h.b16 %v5870
        %v5976 = vunpack.c.l.b16 %v5871
        %v5977 = vunpack.c.h.b16 %v5871
        %v5978 = vunpack.c.l.b16 %v5872
        %v5979 = vunpack.c.h.b16 %v5872
        %v5980 = vunpack.c.l.b16 %v5873
        %v5981 = vunpack.c.h.b16 %v5873
        %v5982 = vunpack.c.l.b16 %v5874
        %v5983 = vunpack.c.h.b16 %v5874
        %v5984 = vunpack.c.l.b16 %v5875
        %v5985 = vunpack.c.h.b16 %v5875
        %v5986 = vunpack.c.l.b16 %v5876
        %v5987 = vunpack.c.h.b16 %v5876
        %v5988 = vunpack.c.l.b16 %v5877
        %v5989 = vunpack.c.h.b16 %v5877
        %v5990 = vunpack.c.l.b16 %v5878
        %v5991 = vunpack.c.h.b16 %v5878
        %v5992 = vunpack.c.l.b16 %v5879
        %v5993 = vunpack.c.h.b16 %v5879
        %v5994 = vunpack.c.l.b16 %v5880
        %v5995 = vunpack.c.h.b16 %v5880
        %v5996 = vunpack.c.l.b16 %v5881
        %v5997 = vunpack.c.h.b16 %v5881
        %v5998 = vunpack.c.l.b16 %v5882
        %v5999 = vunpack.c.h.b16 %v5882
        %v6000 = vpack.c.b16 %v5940, %v5936
        %v6001 = vpack.c.b16 %v5941, %v5937
        %v6002 = vpack.c.b16 %v5942, %v5938
        %v6003 = vpack.c.b16 %v5943, %v5939
        %v6004 = vpack.c.b16 %v5948, %v5944
        %v6005 = vpack.c.b16 %v5949, %v5945
        %v6006 = vpack.c.b16 %v5950, %v5946
        %v6007 = vpack.c.b16 %v5951, %v5947
        %v6008 = vpack.c.b16 %v5956, %v5952
        %v6009 = vpack.c.b16 %v5957, %v5953
        %v6010 = vpack.c.b16 %v5958, %v5954
        %v6011 = vpack.c.b16 %v5959, %v5955
        %v6012 = vpack.c.b16 %v5964, %v5960
        %v6013 = vpack.c.b16 %v5965, %v5961
        %v6014 = vpack.c.b16 %v5966, %v5962
        %v6015 = vpack.c.b16 %v5967, %v5963
        %v6016 = vpack.c.b16 %v5972, %v5968
        %v6017 = vpack.c.b16 %v5973, %v5969
        %v6018 = vpack.c.b16 %v5974, %v5970
        %v6019 = vpack.c.b16 %v5975, %v5971
        %v6020 = vpack.c.b16 %v5980, %v5976
        %v6021 = vpack.c.b16 %v5981, %v5977
        %v6022 = vpack.c.b16 %v5982, %v5978
        %v6023 = vpack.c.b16 %v5983, %v5979
        %v6024 = vpack.c.b16 %v5988, %v5984
        %v6025 = vpack.c.b16 %v5989, %v5985
        %v6026 = vpack.c.b16 %v5990, %v5986
        %v6027 = vpack.c.b16 %v5991, %v5987
        %v6028 = vpack.c.b16 %v5996, %v5992
        %v6029 = vpack.c.b16 %v5997, %v5993
        %v6030 = vpack.c.b16 %v5998, %v5994
        %v6031 = vpack.c.b16 %v5999, %v5995
        %6064 = vmatprep.subr.bf16.mxu0 %v6001
        %6065 = vmatpush1.bf16.msra.mxu0 %v6000
        %6066 = vmatprep.subr.bf16.mxu0 %v6005
        %6067 = vmatpush1.bf16.msra.mxu0 %v6004
        %6068 = vmatprep.subr.bf16.mxu0 %v6009
        %6069 = vmatpush1.bf16.msra.mxu0 %v6008
        %6070 = vmatprep.subr.bf16.mxu0 %v6013
        %6071 = vmatpush1.bf16.msra.mxu0 %v6012
        %6072 = vmatprep.subr.bf16.mxu0 %v6017
        %6073 = vmatpush1.bf16.msra.mxu0 %v6016
        %6074 = vmatprep.subr.bf16.mxu0 %v6021
        %6075 = vmatpush1.bf16.msra.mxu0 %v6020
        %6076 = vmatprep.subr.bf16.mxu0 %v6025
        %6077 = vmatpush1.bf16.msra.mxu0 %v6024
        %6078 = vmatprep.subr.bf16.mxu0 %v6029
        %6079 = vmatpush1.bf16.msra.mxu0 %v6028
        %6080 = vmatprep.subr.bf16.mxu0 0
        %6081 = vmatpush1.bf16.msra.mxu0 0
        %6082 = vmatprep.subr.bf16.mxu0 0
        %6083 = vmatpush1.bf16.msra.mxu0 0
        %6084 = vmatprep.subr.bf16.mxu0 0
        %6085 = vmatpush1.bf16.msra.mxu0 0
        %6086 = vmatprep.subr.bf16.mxu0 0
        %6087 = vmatpush1.bf16.msra.mxu0 0
        %6088 = vmatprep.subr.bf16.mxu0 0
        %6089 = vmatpush1.bf16.msra.mxu0 0
        %6090 = vmatprep.subr.bf16.mxu0 0
        %6091 = vmatpush1.bf16.msra.mxu0 0
        %6092 = vmatprep.subr.bf16.mxu0 0
        %6093 = vmatpush1.bf16.msra.mxu0 0
        %6094 = vmatprep.subr.bf16.mxu0 0
        %6095 = vmatpush1.bf16.msra.mxu0 0
        %6096 = vmatprep.mubr.bf16.mxu0 0
        %6097 = vmatmul.mubr.bf16.gmra.mrb[0].mxu0 %v5849
        %v6098 = vpop.f32.mrb[0].mxu0
        %v6099 = vadd.f32 %v5887, %v6098
        %v6100 = vpop.f32.mrb[0].mxu0
        %v6101 = vadd.f32 %v5891, %v6100
        %v6102 = vpop.f32.mrb[0].mxu0
        %v6103 = vadd.f32 %v5887, %v6102
        %v6104 = vpop.f32.mrb[0].mxu0
        %v6105 = vadd.f32 %v5891, %v6104
        %6106 = vmatprep.mubr.bf16.mxu0 0
        %6107 = vmatmul.mubr.bf16.gmra.mrb[0].mxu0 %v5850
        %v6108 = vpop.f32.mrb[0].mxu0
        %v6109 = vadd.f32 %v5887, %v6108
        %v6110 = vpop.f32.mrb[0].mxu0
        %v6111 = vadd.f32 %v5891, %v6110
        %v6112 = vpop.f32.mrb[0].mxu0
        %v6113 = vadd.f32 %v5887, %v6112
        %v6114 = vpop.f32.mrb[0].mxu0
        %v6115 = vadd.f32 %v5891, %v6114
        %6116 = vdwg.mxu0
        %6117 = vmatprep.subr.bf16.mxu0 %v6003
        %6118 = vmatpush1.bf16.msra.mxu0 %v6002
        %6119 = vmatprep.subr.bf16.mxu0 %v6007
        %6120 = vmatpush1.bf16.msra.mxu0 %v6006
        %6121 = vmatprep.subr.bf16.mxu0 %v6011
        %6122 = vmatpush1.bf16.msra.mxu0 %v6010
        %6123 = vmatprep.subr.bf16.mxu0 %v6015
        %6124 = vmatpush1.bf16.msra.mxu0 %v6014
        %6125 = vmatprep.subr.bf16.mxu0 %v6019
        %6126 = vmatpush1.bf16.msra.mxu0 %v6018
        %6127 = vmatprep.subr.bf16.mxu0 %v6023
        %6128 = vmatpush1.bf16.msra.mxu0 %v6022
        %6129 = vmatprep.subr.bf16.mxu0 %v6027
        %6130 = vmatpush1.bf16.msra.mxu0 %v6026
        %6131 = vmatprep.subr.bf16.mxu0 %v6031
        %6132 = vmatpush1.bf16.msra.mxu0 %v6030
        %6133 = vmatprep.subr.bf16.mxu0 0
        %6134 = vmatpush1.bf16.msra.mxu0 0
        %6135 = vmatprep.subr.bf16.mxu0 0
        %6136 = vmatpush1.bf16.msra.mxu0 0
        %6137 = vmatprep.subr.bf16.mxu0 0
        %6138 = vmatpush1.bf16.msra.mxu0 0
        %6139 = vmatprep.subr.bf16.mxu0 0
        %6140 = vmatpush1.bf16.msra.mxu0 0
        %6141 = vmatprep.subr.bf16.mxu0 0
        %6142 = vmatpush1.bf16.msra.mxu0 0
        %6143 = vmatprep.subr.bf16.mxu0 0
        %6144 = vmatpush1.bf16.msra.mxu0 0
        %6145 = vmatprep.subr.bf16.mxu0 0
        %6146 = vmatpush1.bf16.msra.mxu0 0
        %6147 = vmatprep.subr.bf16.mxu0 0
        %6148 = vmatpush1.bf16.msra.mxu0 0
        %6149 = vmatprep.mubr.bf16.mxu0 0
        %6150 = vmatmul.mubr.bf16.gmra.mrb[0].mxu0 %v5849
        %v6151 = vpop.f32.mrb[0].mxu0
        %v6152 = vadd.f32 %v5895, %v6151
        %v6153 = vpop.f32.mrb[0].mxu0
        %v6154 = vadd.f32 %v5899, %v6153
        %v6155 = vpop.f32.mrb[0].mxu0
        %v6156 = vadd.f32 %v5895, %v6155
        %v6157 = vpop.f32.mrb[0].mxu0
        %v6158 = vadd.f32 %v5899, %v6157
        %6159 = vmatprep.mubr.bf16.mxu0 0
        %6160 = vmatmul.mubr.bf16.gmra.mrb[0].mxu0 %v5850
        %v6161 = vpop.f32.mrb[0].mxu0
        %v6162 = vadd.f32 %v5895, %v6161
        %v6163 = vpop.f32.mrb[0].mxu0
        %v6164 = vadd.f32 %v5899, %v6163
        %v6165 = vpop.f32.mrb[0].mxu0
        %v6166 = vadd.f32 %v5895, %v6165
        %v6167 = vpop.f32.mrb[0].mxu0
        %v6168 = vadd.f32 %v5899, %v6167
        %6169 = vdwg.mxu0
        %v6170 = vmul.f32 %v6099, 0.5
        %v6171 = vmul.f32 %v6101, 0.5
        %v6172 = vmul.f32 %v6152, 0.5
        %v6173 = vmul.f32 %v6154, 0.5
        %v6174 = vmul.f32 %v6103, 0.5
        %v6175 = vmul.f32 %v6105, 0.5
        %v6176 = vmul.f32 %v6156, 0.5
        %v6177 = vmul.f32 %v6158, 0.5
        %v6178 = vmul.f32 %v6109, 0.5
        %v6179 = vmul.f32 %v6111, 0.5
        %v6180 = vmul.f32 %v6162, 0.5
        %v6181 = vmul.f32 %v6164, 0.5
        %v6182 = vmul.f32 %v6113, 0.5
        %v6183 = vmul.f32 %v6115, 0.5
        %v6184 = vmul.f32 %v6166, 0.5
        %v6185 = vmul.f32 %v6168, 0.5
        %v6186 = vmul.f32 %v6099, 0.70710677
        %v6187 = vmul.f32 %v6101, 0.70710677
        %v6188 = vmul.f32 %v6152, 0.70710677
        %v6189 = vmul.f32 %v6154, 0.70710677
        %v6190 = vmul.f32 %v6103, 0.70710677
        %v6191 = vmul.f32 %v6105, 0.70710677
        %v6192 = vmul.f32 %v6156, 0.70710677
        %v6193 = vmul.f32 %v6158, 0.70710677
        %v6194 = vmul.f32 %v6109, 0.70710677
        %v6195 = vmul.f32 %v6111, 0.70710677
        %v6196 = vmul.f32 %v6162, 0.70710677
        %v6197 = vmul.f32 %v6164, 0.70710677
        %v6198 = vmul.f32 %v6113, 0.70710677
        %v6199 = vmul.f32 %v6115, 0.70710677
        %v6200 = vmul.f32 %v6166, 0.70710677
        %v6201 = vmul.f32 %v6168, 0.70710677
        %v6202 = verf.f32.pop %v6186
        %v6203 = verf.f32.pop %v6187
        %v6204 = verf.f32.pop %v6188
        %v6205 = verf.f32.pop %v6189
        %v6206 = verf.f32.pop %v6190
        %v6207 = verf.f32.pop %v6191
        %v6208 = verf.f32.pop %v6192
        %v6209 = verf.f32.pop %v6193
        %v6210 = verf.f32.pop %v6194
        %v6211 = verf.f32.pop %v6195
        %v6212 = verf.f32.pop %v6196
        %v6213 = verf.f32.pop %v6197
        %v6214 = verf.f32.pop %v6198
        %v6215 = verf.f32.pop %v6199
        %v6216 = verf.f32.pop %v6200
        %v6217 = verf.f32.pop %v6201
        %v6218 = vadd.f32 %v6202, 1.0
        %v6219 = vadd.f32 %v6203, 1.0
        %v6220 = vadd.f32 %v6204, 1.0
        %v6221 = vadd.f32 %v6205, 1.0
        %v6222 = vadd.f32 %v6206, 1.0
        %v6223 = vadd.f32 %v6207, 1.0
        %v6224 = vadd.f32 %v6208, 1.0
        %v6225 = vadd.f32 %v6209, 1.0
        %v6226 = vadd.f32 %v6210, 1.0
        %v6227 = vadd.f32 %v6211, 1.0
        %v6228 = vadd.f32 %v6212, 1.0
        %v6229 = vadd.f32 %v6213, 1.0
        %v6230 = vadd.f32 %v6214, 1.0
        %v6231 = vadd.f32 %v6215, 1.0
        %v6232 = vadd.f32 %v6216, 1.0
        %v6233 = vadd.f32 %v6217, 1.0
        %v6234 = vmul.f32 %v6170, %v6218
        %v6235 = vmul.f32 %v6171, %v6219
        %v6236 = vmul.f32 %v6172, %v6220
        %v6237 = vmul.f32 %v6173, %v6221
        %v6238 = vmul.f32 %v6174, %v6222
        %v6239 = vmul.f32 %v6175, %v6223
        %v6240 = vmul.f32 %v6176, %v6224
        %v6241 = vmul.f32 %v6177, %v6225
        %v6242 = vmul.f32 %v6178, %v6226
        %v6243 = vmul.f32 %v6179, %v6227
        %v6244 = vmul.f32 %v6180, %v6228
        %v6245 = vmul.f32 %v6181, %v6229
        %v6246 = vmul.f32 %v6182, %v6230
        %v6247 = vmul.f32 %v6183, %v6231
        %v6248 = vmul.f32 %v6184, %v6232
        %v6249 = vmul.f32 %v6185, %v6233
        %v6250 = vpack.c.bf16 %v6238, %v6234
        %v6251 = vpack.c.bf16 %v6239, %v6235
        %v6252 = vpack.c.bf16 %v6240, %v6236
        %v6253 = vpack.c.bf16 %v6241, %v6237
        %v6254 = vpack.c.bf16 %v6246, %v6242
        %v6255 = vpack.c.bf16 %v6247, %v6243
        %v6256 = vpack.c.bf16 %v6248, %v6244
        %v6257 = vpack.c.bf16 %v6249, %v6245
        %v6258 = vld [vmem:[%s551] sm:$0xf]
        %v6259 = vld [vmem:[%s551 + $0x4] sm:$0xf]
        %v6260 = vld [vmem:[%s551 + $0x8] sm:$0xf]
        %v6261 = vld [vmem:[%s551 + $0xc] sm:$0xf]
        %v6262 = vld [vmem:[%s551 + $0x10] sm:$0xf]
        %v6263 = vld [vmem:[%s551 + $0x14] sm:$0xf]
        %v6264 = vld [vmem:[%s551 + $0x18] sm:$0xf]
        %v6265 = vld [vmem:[%s551 + $0x1c] sm:$0xf]
        %v6266 = vld [vmem:[%s551 + $0x20] sm:$0xf]
        %v6267 = vld [vmem:[%s551 + $0x24] sm:$0xf]
        %v6268 = vld [vmem:[%s551 + $0x28] sm:$0xf]
        %v6269 = vld [vmem:[%s551 + $0x2c] sm:$0xf]
        %v6270 = vld [vmem:[%s551 + $0x30] sm:$0xf]
        %v6271 = vld [vmem:[%s551 + $0x34] sm:$0xf]
        %v6272 = vld [vmem:[%s551 + $0x38] sm:$0xf]
        %v6273 = vld [vmem:[%s551 + $0x3c] sm:$0xf]
        %v6274 = vld [vmem:[%s551 + $0x40] sm:$0xf]
        %v6275 = vld [vmem:[%s551 + $0x44] sm:$0xf]
        %v6276 = vld [vmem:[%s551 + $0x48] sm:$0xf]
        %v6277 = vld [vmem:[%s551 + $0x4c] sm:$0xf]
        %v6278 = vld [vmem:[%s551 + $0x50] sm:$0xf]
        %v6279 = vld [vmem:[%s551 + $0x54] sm:$0xf]
        %v6280 = vld [vmem:[%s551 + $0x58] sm:$0xf]
        %v6281 = vld [vmem:[%s551 + $0x5c] sm:$0xf]
        %v6282 = vld [vmem:[%s551 + $0x60] sm:$0xf]
        %v6283 = vld [vmem:[%s551 + $0x64] sm:$0xf]
        %v6284 = vld [vmem:[%s551 + $0x68] sm:$0xf]
        %v6285 = vld [vmem:[%s551 + $0x6c] sm:$0xf]
        %v6286 = vld [vmem:[%s551 + $0x70] sm:$0xf]
        %v6287 = vld [vmem:[%s551 + $0x74] sm:$0xf]
        %v6288 = vld [vmem:[%s551 + $0x78] sm:$0xf]
        %v6289 = vld [vmem:[%s551 + $0x7c] sm:$0xf]
        %v6290 = vld [vmem:[%s551 + $0x80] sm:$0xf]
        %v6291 = vld [vmem:[%s551 + $0x84] sm:$0xf]
        %v6292 = vld [vmem:[%s551 + $0x88] sm:$0xf]
        %v6293 = vld [vmem:[%s551 + $0x8c] sm:$0xf]
        %v6294 = vld [vmem:[%s551 + $0x90] sm:$0xf]
        %v6295 = vld [vmem:[%s551 + $0x94] sm:$0xf]
        %v6296 = vld [vmem:[%s551 + $0x98] sm:$0xf]
        %v6297 = vld [vmem:[%s551 + $0x9c] sm:$0xf]
        %v6298 = vld [vmem:[%s551 + $0xa0] sm:$0xf]
        %v6299 = vld [vmem:[%s551 + $0xa4] sm:$0xf]
        %v6300 = vld [vmem:[%s551 + $0xa8] sm:$0xf]
        %v6301 = vld [vmem:[%s551 + $0xac] sm:$0xf]
        %v6302 = vld [vmem:[%s551 + $0xb0] sm:$0xf]
        %v6303 = vld [vmem:[%s551 + $0xb4] sm:$0xf]
        %v6304 = vld [vmem:[%s551 + $0xb8] sm:$0xf]
        %v6305 = vld [vmem:[%s551 + $0xbc] sm:$0xf]
        %v6306 = vld [vmem:[%s551 + $0xc0] sm:$0xf]
        %v6307 = vld [vmem:[%s551 + $0xc4] sm:$0xf]
        %v6308 = vld [vmem:[%s551 + $0xc8] sm:$0xf]
        %v6309 = vld [vmem:[%s551 + $0xcc] sm:$0xf]
        %v6310 = vld [vmem:[%s551 + $0xd0] sm:$0xf]
        %v6311 = vld [vmem:[%s551 + $0xd4] sm:$0xf]
        %v6312 = vld [vmem:[%s551 + $0xd8] sm:$0xf]
        %v6313 = vld [vmem:[%s551 + $0xdc] sm:$0xf]
        %v6314 = vld [vmem:[%s551 + $0xe0] sm:$0xf]
        %v6315 = vld [vmem:[%s551 + $0xe4] sm:$0xf]
        %v6316 = vld [vmem:[%s551 + $0xe8] sm:$0xf]
        %v6317 = vld [vmem:[%s551 + $0xec] sm:$0xf]
        %v6318 = vld [vmem:[%s551 + $0xf0] sm:$0xf]
        %v6319 = vld [vmem:[%s551 + $0xf4] sm:$0xf]
        %v6320 = vld [vmem:[%s551 + $0xf8] sm:$0xf]
        %v6321 = vld [vmem:[%s551 + $0xfc] sm:$0xf]
        %v6322 = vlaneseq
        %v6323 = vshrl.u32 %v6322, 7
        %v6324 = vsub.s32 4, %v6323
        %v6325 = vrot.slane %v662, %v6324
        %v6390 = vunpack.c.l.b16 %v6258
        %v6391 = vunpack.c.l.b16 %v6259
        %v6392 = vunpack.c.l.b16 %v6260
        %v6393 = vunpack.c.l.b16 %v6261
        %v6394 = vunpack.c.l.b16 %v6262
        %v6395 = vunpack.c.l.b16 %v6263
        %v6396 = vunpack.c.l.b16 %v6264
        %v6397 = vunpack.c.l.b16 %v6265
        %v6398 = vunpack.c.l.b16 %v6266
        %v6399 = vunpack.c.l.b16 %v6267
        %v6400 = vunpack.c.l.b16 %v6268
        %v6401 = vunpack.c.l.b16 %v6269
        %v6402 = vunpack.c.l.b16 %v6270
        %v6403 = vunpack.c.l.b16 %v6271
        %v6404 = vunpack.c.l.b16 %v6272
        %v6405 = vunpack.c.l.b16 %v6273
        %v6406 = vunpack.c.l.b16 %v6274
        %v6407 = vunpack.c.l.b16 %v6275
        %v6408 = vunpack.c.l.b16 %v6276
        %v6409 = vunpack.c.l.b16 %v6277
        %v6410 = vunpack.c.l.b16 %v6278
        %v6411 = vunpack.c.l.b16 %v6279
        %v6412 = vunpack.c.l.b16 %v6280
        %v6413 = vunpack.c.l.b16 %v6281
        %v6414 = vunpack.c.l.b16 %v6282
        %v6415 = vunpack.c.l.b16 %v6283
        %v6416 = vunpack.c.l.b16 %v6284
        %v6417 = vunpack.c.l.b16 %v6285
        %v6418 = vunpack.c.l.b16 %v6286
        %v6419 = vunpack.c.l.b16 %v6287
        %v6420 = vunpack.c.l.b16 %v6288
        %v6421 = vunpack.c.l.b16 %v6289
        %v6422 = vunpack.c.l.b16 %v6290
        %v6423 = vunpack.c.l.b16 %v6291
        %v6424 = vunpack.c.l.b16 %v6292
        %v6425 = vunpack.c.l.b16 %v6293
        %v6426 = vunpack.c.l.b16 %v6294
        %v6427 = vunpack.c.l.b16 %v6295
        %v6428 = vunpack.c.l.b16 %v6296
        %v6429 = vunpack.c.l.b16 %v6297
        %v6430 = vunpack.c.l.b16 %v6298
        %v6431 = vunpack.c.l.b16 %v6299
        %v6432 = vunpack.c.l.b16 %v6300
        %v6433 = vunpack.c.l.b16 %v6301
        %v6434 = vunpack.c.l.b16 %v6302
        %v6435 = vunpack.c.l.b16 %v6303
        %v6436 = vunpack.c.l.b16 %v6304
        %v6437 = vunpack.c.l.b16 %v6305
        %v6438 = vunpack.c.l.b16 %v6306
        %v6439 = vunpack.c.l.b16 %v6307
        %v6440 = vunpack.c.l.b16 %v6308
        %v6441 = vunpack.c.l.b16 %v6309
        %v6442 = vunpack.c.l.b16 %v6310
        %v6443 = vunpack.c.l.b16 %v6311
        %v6444 = vunpack.c.l.b16 %v6312
        %v6445 = vunpack.c.l.b16 %v6313
        %v6446 = vunpack.c.l.b16 %v6314
        %v6447 = vunpack.c.l.b16 %v6315
        %v6448 = vunpack.c.l.b16 %v6316
        %v6449 = vunpack.c.l.b16 %v6317
        %v6450 = vunpack.c.l.b16 %v6318
        %v6451 = vunpack.c.l.b16 %v6319
        %v6452 = vunpack.c.l.b16 %v6320
        %v6453 = vunpack.c.l.b16 %v6321
        %v6454 = vpack.c.b16 %v6391, %v6390
        %v6455 = vpack.c.b16 %v6393, %v6392
        %v6456 = vpack.c.b16 %v6395, %v6394
        %v6457 = vpack.c.b16 %v6397, %v6396
        %v6458 = vpack.c.b16 %v6399, %v6398
        %v6459 = vpack.c.b16 %v6401, %v6400
        %v6460 = vpack.c.b16 %v6403, %v6402
        %v6461 = vpack.c.b16 %v6405, %v6404
        %v6462 = vpack.c.b16 %v6407, %v6406
        %v6463 = vpack.c.b16 %v6409, %v6408
        %v6464 = vpack.c.b16 %v6411, %v6410
        %v6465 = vpack.c.b16 %v6413, %v6412
        %v6466 = vpack.c.b16 %v6415, %v6414
        %v6467 = vpack.c.b16 %v6417, %v6416
        %v6468 = vpack.c.b16 %v6419, %v6418
        %v6469 = vpack.c.b16 %v6421, %v6420
        %v6470 = vpack.c.b16 %v6423, %v6422
        %v6471 = vpack.c.b16 %v6425, %v6424
        %v6472 = vpack.c.b16 %v6427, %v6426
        %v6473 = vpack.c.b16 %v6429, %v6428
        %v6474 = vpack.c.b16 %v6431, %v6430
        %v6475 = vpack.c.b16 %v6433, %v6432
        %v6476 = vpack.c.b16 %v6435, %v6434
        %v6477 = vpack.c.b16 %v6437, %v6436
        %v6478 = vpack.c.b16 %v6439, %v6438
        %v6479 = vpack.c.b16 %v6441, %v6440
        %v6480 = vpack.c.b16 %v6443, %v6442
        %v6481 = vpack.c.b16 %v6445, %v6444
        %v6482 = vpack.c.b16 %v6447, %v6446
        %v6483 = vpack.c.b16 %v6449, %v6448
        %v6484 = vpack.c.b16 %v6451, %v6450
        %v6485 = vpack.c.b16 %v6453, %v6452
        %6518 = vmatprep.subr.bf16.mxu0 0
        %6519 = vmatpush1.bf16.msra.mxu0 %v6454
        %6520 = vmatprep.subr.bf16.mxu0 0
        %6521 = vmatpush1.bf16.msra.mxu0 %v6455
        %6522 = vmatprep.subr.bf16.mxu0 0
        %6523 = vmatpush1.bf16.msra.mxu0 %v6456
        %6524 = vmatprep.subr.bf16.mxu0 0
        %6525 = vmatpush1.bf16.msra.mxu0 %v6457
        %6526 = vmatprep.subr.bf16.mxu0 0
        %6527 = vmatpush1.bf16.msra.mxu0 %v6458
        %6528 = vmatprep.subr.bf16.mxu0 0
        %6529 = vmatpush1.bf16.msra.mxu0 %v6459
        %6530 = vmatprep.subr.bf16.mxu0 0
        %6531 = vmatpush1.bf16.msra.mxu0 %v6460
        %6532 = vmatprep.subr.bf16.mxu0 0
        %6533 = vmatpush1.bf16.msra.mxu0 %v6461
        %6534 = vmatprep.subr.bf16.mxu0 0
        %6535 = vmatpush1.bf16.msra.mxu0 %v6462
        %6536 = vmatprep.subr.bf16.mxu0 0
        %6537 = vmatpush1.bf16.msra.mxu0 %v6463
        %6538 = vmatprep.subr.bf16.mxu0 0
        %6539 = vmatpush1.bf16.msra.mxu0 %v6464
        %6540 = vmatprep.subr.bf16.mxu0 0
        %6541 = vmatpush1.bf16.msra.mxu0 %v6465
        %6542 = vmatprep.subr.bf16.mxu0 0
        %6543 = vmatpush1.bf16.msra.mxu0 %v6466
        %6544 = vmatprep.subr.bf16.mxu0 0
        %6545 = vmatpush1.bf16.msra.mxu0 %v6467
        %6546 = vmatprep.subr.bf16.mxu0 0
        %6547 = vmatpush1.bf16.msra.mxu0 %v6468
        %6548 = vmatprep.subr.bf16.mxu0 0
        %6549 = vmatpush1.bf16.msra.mxu0 %v6469
        %6550 = vmatprep.mubr.bf16.mxu0 %v6251
        %6551 = vmatmul.mubr.bf16.gmra.mrb[0].mxu0 %v6250
        %v6552 = vpop.f32.mrb[0].mxu0
        %v6553 = vadd.f32 %v6325, %v6552
        %v6554 = vpop.f32.mrb[0].mxu0
        %v6555 = vpop.f32.mrb[0].mxu0
        %v6556 = vadd.f32 %v6325, %v6555
        %v6557 = vpop.f32.mrb[0].mxu0
        %6558 = vmatprep.mubr.bf16.mxu0 %v6255
        %6559 = vmatmul.mubr.bf16.gmra.mrb[0].mxu0 %v6254
        %v6560 = vpop.f32.mrb[0].mxu0
        %v6561 = vadd.f32 %v6325, %v6560
        %v6562 = vpop.f32.mrb[0].mxu0
        %v6563 = vpop.f32.mrb[0].mxu0
        %v6564 = vadd.f32 %v6325, %v6563
        %v6565 = vpop.f32.mrb[0].mxu0
        %6566 = vdwg.mxu0
        %6567 = vmatprep.subr.bf16.mxu0 0
        %6568 = vmatpush1.bf16.msra.mxu0 %v6470
        %6569 = vmatprep.subr.bf16.mxu0 0
        %6570 = vmatpush1.bf16.msra.mxu0 %v6471
        %6571 = vmatprep.subr.bf16.mxu0 0
        %6572 = vmatpush1.bf16.msra.mxu0 %v6472
        %6573 = vmatprep.subr.bf16.mxu0 0
        %6574 = vmatpush1.bf16.msra.mxu0 %v6473
        %6575 = vmatprep.subr.bf16.mxu0 0
        %6576 = vmatpush1.bf16.msra.mxu0 %v6474
        %6577 = vmatprep.subr.bf16.mxu0 0
        %6578 = vmatpush1.bf16.msra.mxu0 %v6475
        %6579 = vmatprep.subr.bf16.mxu0 0
        %6580 = vmatpush1.bf16.msra.mxu0 %v6476
        %6581 = vmatprep.subr.bf16.mxu0 0
        %6582 = vmatpush1.bf16.msra.mxu0 %v6477
        %6583 = vmatprep.subr.bf16.mxu0 0
        %6584 = vmatpush1.bf16.msra.mxu0 %v6478
        %6585 = vmatprep.subr.bf16.mxu0 0
        %6586 = vmatpush1.bf16.msra.mxu0 %v6479
        %6587 = vmatprep.subr.bf16.mxu0 0
        %6588 = vmatpush1.bf16.msra.mxu0 %v6480
        %6589 = vmatprep.subr.bf16.mxu0 0
        %6590 = vmatpush1.bf16.msra.mxu0 %v6481
        %6591 = vmatprep.subr.bf16.mxu0 0
        %6592 = vmatpush1.bf16.msra.mxu0 %v6482
        %6593 = vmatprep.subr.bf16.mxu0 0
        %6594 = vmatpush1.bf16.msra.mxu0 %v6483
        %6595 = vmatprep.subr.bf16.mxu0 0
        %6596 = vmatpush1.bf16.msra.mxu0 %v6484
        %6597 = vmatprep.subr.bf16.mxu0 0
        %6598 = vmatpush1.bf16.msra.mxu0 %v6485
        %6599 = vmatprep.mubr.bf16.mxu0 %v6253
        %6600 = vmatmul.mubr.bf16.gmra.mrb[0].mxu0 %v6252
        %v6601 = vpop.f32.mrb[0].mxu0
        %v6602 = vadd.f32 %v6553, %v6601
        %v6603 = vpop.f32.mrb[0].mxu0
        %v6604 = vpop.f32.mrb[0].mxu0
        %v6605 = vadd.f32 %v6556, %v6604
        %v6606 = vpop.f32.mrb[0].mxu0
        %6607 = vmatprep.mubr.bf16.mxu0 %v6257
        %6608 = vmatmul.mubr.bf16.gmra.mrb[0].mxu0 %v6256
        %v6609 = vpop.f32.mrb[0].mxu0
        %v6610 = vadd.f32 %v6561, %v6609
        %v6611 = vpop.f32.mrb[0].mxu0
        %v6612 = vpop.f32.mrb[0].mxu0
        %v6613 = vadd.f32 %v6564, %v6612
        %v6614 = vpop.f32.mrb[0].mxu0
        %6615 = vdwg.mxu0
        %v6616 = vadd.f32 %v5845, %v6602
        %v6617 = vadd.f32 %v5846, %v6605
        %v6618 = vadd.f32 %v5847, %v6610
        %v6619 = vadd.f32 %v5848, %v6613
        %6620 = vadd.xlane.f32.xlu0 %v6616
        %v6621 = vpop.xlane.xlu0 %6620
        %6622 = vadd.xlane.f32.xlu0 %v6617
        %v6623 = vpop.xlane.xlu0 %6622
        %6624 = vadd.xlane.f32.xlu0 %v6618
        %v6625 = vpop.xlane.xlu0 %6624
        %6626 = vadd.xlane.f32.xlu0 %v6619
        %v6627 = vpop.xlane.xlu0 %6626
        %v6628 = vmul.f32 %v6621, %v5796
        %v6629 = vmul.f32 %v6623, %v5796
        %v6630 = vmul.f32 %v6625, %v5796
        %v6631 = vmul.f32 %v6627, %v5796
        %v6632 = vsub.f32 %v6616, %v6628
        %v6633 = vsub.f32 %v6617, %v6629
        %v6634 = vsub.f32 %v6618, %v6630
        %v6635 = vsub.f32 %v6619, %v6631
        %v6636 = vmul.f32 %v6632, %v6632
        %v6637 = vmul.f32 %v6633, %v6633
        %v6638 = vmul.f32 %v6634, %v6634
        %v6639 = vmul.f32 %v6635, %v6635
        %6640 = vadd.xlane.f32.xlu0 %v6636
        %v6641 = vpop.xlane.xlu0 %6640
        %6642 = vadd.xlane.f32.xlu0 %v6637
        %v6643 = vpop.xlane.xlu0 %6642
        %6644 = vadd.xlane.f32.xlu0 %v6638
        %v6645 = vpop.xlane.xlu0 %6644
        %6646 = vadd.xlane.f32.xlu0 %v6639
        %v6647 = vpop.xlane.xlu0 %6646
        %v6648 = vmul.f32 %v6641, %v5796
        %v6649 = vmul.f32 %v6643, %v5796
        %v6650 = vmul.f32 %v6645, %v5796
        %v6651 = vmul.f32 %v6647, %v5796
        %v6652 = vadd.f32 %v6648, 1e-05
        %v6653 = vadd.f32 %v6649, 1e-05
        %v6654 = vadd.f32 %v6650, 1e-05
        %v6655 = vadd.f32 %v6651, 1e-05
        %v6656 = vrsqrt.pop %v6652
        %v6657 = vrsqrt.pop %v6653
        %v6658 = vrsqrt.pop %v6654
        %v6659 = vrsqrt.pop %v6655
        %v6660 = vmul.f32 %v6632, %v6656
        %v6661 = vmul.f32 %v6633, %v6657
        %v6662 = vmul.f32 %v6634, %v6658
        %v6663 = vmul.f32 %v6635, %v6659
        %v6664 = vlaneseq
        %v6665 = vshrl.u32 %v6664, 7
        %v6666 = vsub.s32 7, %v6665
        %v6667 = vrot.slane %v662, %v6666
        %v6668 = vmul.f32 %v6660, %v6667
        %v6669 = vmul.f32 %v6661, %v6667
        %v6670 = vmul.f32 %v6662, %v6667
        %v6671 = vmul.f32 %v6663, %v6667
        %v6672 = vlaneseq
        %v6673 = vshrl.u32 %v6672, 7
        %v6674 = vsub.s32 0, %v6673
        %v6675 = vrot.slane %v663, %v6674
        %v6676 = vadd.f32 %v6668, %v6675
        %v6677 = vadd.f32 %v6669, %v6675
        %v6678 = vadd.f32 %v6670, %v6675
        %v6679 = vadd.f32 %v6671, %v6675
        %6680 = vst [vmem:[#allocation2] sm:$0xff] %v6676
        %6681 = vst [vmem:[#allocation2 + $0x8] sm:$0xff] %v6677
        %6682 = vst [vmem:[#allocation2 + $0x10] sm:$0xff] %v6678
        %6683 = vst [vmem:[#allocation2 + $0x18] sm:$0xff] %v6679
        %p6684 = scmp.eq.s32.totalorder %s41, 3
        // Predicated region
        $region89: #{tpu_custom_call.1} parent=59 // pred_check
          %p6685 = pneg %p6684
        $region90: #{tpu_custom_call.1} parent=59 // pred_check_branch
          %6687 = sbr.rel (%p6685) target = $region92
        $region91: #{tpu_custom_call.1} parent=59 // pred_region
          %6688 = vst [vmem:[%s626] sm:$0xff] %v6676
          %6689 = vst [vmem:[%s626 + $0x8] sm:$0xff] %v6677
          %6690 = vst [vmem:[%s626 + $0x10] sm:$0xff] %v6678
          %6691 = vst [vmem:[%s626 + $0x18] sm:$0xff] %v6679
        $region92: #{tpu_custom_call.1} parent=59 // pred_fallthru
          _
        %s6692 = sand.u32 %s311, 1
        %s6693 = scalar_lea.sflag [#allocation5], %s6692
        %s6694 = sand.u32 %s311, 1
        %s6695 = smul.addr %s6694, 32
        %s6696 = scalar_lea.vmem [#allocation14], %s6695
        // Predicated region
        $region93: #{tpu_custom_call.1} parent=59 // pred_check
          %p6697 = pneg %p321
        $region94: #{tpu_custom_call.1} parent=59 // pred_check_branch
          %6699 = sbr.rel (%p6697) target = $region96
        $region95: #{tpu_custom_call.1} parent=59 // pred_region
          %s6701 = ssub.s32 512, 512
          %6702 = vsyncadd %s6693, %s6701
          %s6703 = smul.addr %s40, 4
          %s6704 = smul.addr %s6703, 128
          %s6705 = scalar_lea.hbm %s10, %s6704
          %s6706 = sshll.u32 %s6696, 4
          %s6707 = int_to_ptr.vmem [resolvable:$true] %s6706
          %6712 = dma.vmem_to_hbm [thread:$0]  %s6707, 512, %s6705, %s6693, 128, 128, 8
        $region96: #{tpu_custom_call.1} parent=59 // pred_fallthru
          _
      $region60: #{tpu_custom_call.1} parent=5 // pred_fallthru
        _
      %p6713 = scmp.le.s32.totalorder 2, %s31
      // Predicated region
      $region97: #{tpu_custom_call.1} parent=5 // pred_check
        %p6714 = pneg %p6713
      $region98: #{tpu_custom_call.1} parent=5 // pred_check_branch
        %6716 = sbr.rel (%p6714) target = $region100
      $region99: #{tpu_custom_call.1} parent=5 // pred_region
        %s6717 = ssub.s32 %s31, 2
        // Predicated region
        $region101: #{tpu_custom_call.1} parent=99 // pred_check
          %p6718 = pneg %p327
        $region102: #{tpu_custom_call.1} parent=99 // pred_check_branch
          %6720 = sbr.rel (%p6718) target = $region104
        $region103: #{tpu_custom_call.1} parent=99 // pred_region
          %s6721 = sand.u32 %s312, 1
          %s6722 = scalar_lea.sflag [#allocation5], %s6721
          %s6723 = sand.u32 %s312, 1
          %s6724 = smul.addr %s6723, 32
          %s6725 = scalar_lea.vmem [#allocation14], %s6724
          %6726 = dma.done %s6722, 512
        $region104: #{tpu_custom_call.1} parent=99 // pred_fallthru
          _
      $region100: #{tpu_custom_call.1} parent=5 // pred_fallthru
        _
    $region6: #{tpu_custom_call.1} parent=1 // loop_footer
      %s35 = sadd.s32 1, %s31
    $region7: #{tpu_custom_call.1} parent=1 // loop_footer_branch
      %30 = sbr.rel target = $region3
    $region8: #{tpu_custom_call.1} parent=1 // loop_exit
      _
    %6727 = vsyncpa [#allocation4], 1
    %s6728 = scalar_lea.sflag [#allocation4], 1
    %6729 = vsyncpa %s6728, 1
    %6730 = vsyncpa [#allocation7], 1
    %s6731 = scalar_lea.sflag [#allocation7], 1
    %6732 = vsyncpa %s6731, 1
    %6733 = vsyncpa [#allocation10], 1
    %s6734 = scalar_lea.sflag [#allocation10], 1
    %6735 = vsyncpa %s6734, 1
    %6736 = vsyncpa [#allocation13], 1
    %s6737 = scalar_lea.sflag [#allocation13], 1
    %6738 = vsyncpa %s6737, 1
    %6739 = vsyncpa [#allocation5], 1
    %s6740 = scalar_lea.sflag [#allocation5], 1
    %6741 = vsyncpa %s6740, 1

</llo_original>
